<compile_context>
chip_gen: v7x
topology: tpu7x:2x2x1
jax: 0.10.0
libtpu: 0.0.40
codegen_flags: <defaults>
</compile_context>

<pallas_src>
import numpy as np
import jax
import jax.numpy as jnp
from jax import lax
from jax.experimental import pallas as pl
from jax.experimental.pallas import tpu as pltpu

SIX = 6


# ----------------------------------------------------------------------------
# Parameter / constant construction (plain JAX / numpy glue, done ONCE)
# ----------------------------------------------------------------------------
def build_connect_mask(input_r, input_depth, kernel_size, stride, output_depth):
    out_r = (input_r - kernel_size) // stride + 1
    n_out = out_r * out_r * output_depth * SIX
    d_in = input_r * input_r * input_depth
    mask = np.zeros((n_out, d_in), np.float32)
    for i in range(out_r):
        for j in range(out_r):
            m = np.zeros((input_r, input_r, input_depth), np.float32)
            m[i * stride:i * stride + kernel_size,
              j * stride:j * stride + kernel_size, :] = 1.0
            m = m.reshape(-1)
            k_base = (i * out_r + j) * output_depth * SIX
            mask[k_base:k_base + output_depth * SIX, :] = m[None, :]
    return jnp.asarray(mask)


def build_lut_table():
    # p_q_2_lut_table from LutLayer.__init__ (used only by the pure-JAX reference;
    # the kernel derives the same 0/1 indicators from iota bit masks).
    t = np.zeros((2 * SIX, 2 ** SIX), np.float32)
    for i in range(2 ** SIX):
        bits = format(i, '0%db' % SIX)
        for j in range(SIX):
            if bits[j] == '0':
                t[j + SIX, i] = 1.0
            else:
                t[j, i] = 1.0
    return jnp.asarray(t)


def make_cnn_layer_params(key, input_r, input_depth, kernel_size, stride, output_depth):
    out_r = (input_r - kernel_size) // stride + 1
    output_len = out_r * out_r * output_depth
    d_in = input_r * input_r * input_depth
    n_out = output_len * SIX
    k1, k2 = jax.random.split(key)
    connect_w = jax.random.normal(k1, (n_out, d_in), jnp.float32) * 2.0
    lut = jax.random.normal(k2, (output_len, 2 ** SIX), jnp.float32) * 2.0
    mask = build_connect_mask(input_r, input_depth, kernel_size, stride, output_depth)
    return dict(connect_w=connect_w, mask=mask, lut=lut)


def _normalized_connect_weights(params):
    # exp / mask / row-sum normalization (ConnectLayer.forward), with a mathematically
    # neutral per-row max subtraction so large learned weights cannot overflow exp().
    cw, mask = params['connect_w'], params['mask']
    m = jnp.max(jnp.where(mask > 0, cw, -jnp.inf), axis=-1, keepdims=True)
    w = jnp.where(mask > 0, jnp.exp(cw - m), 0.0)
    return w / jnp.sum(w, axis=-1, keepdims=True)          # (L*SIX, D), rows sum to 1


def prepare_cnn_layer(params):
    """Hoist all data-independent per-forward work out of the hot path:
    weight normalization, the j-major permutation + transpose to (D, SIX*L) bf16
    (flipped MXU orientation: lane dim = SIX*L), and sigmoid(lut) transposed to
    (64, L) (LUT entry on sublanes, output unit lane-dense)."""
    w = _normalized_connect_weights(params)                 # (L*SIX, D) f32
    n_out, d_in = w.shape
    L = n_out // SIX
    # row l*SIX + j  ->  row j*L + l, then transpose so column j*L + l is lane-dense
    w_jmajor = w.reshape(L, SIX, d_in).transpose(1, 0, 2).reshape(SIX * L, d_in)
    wT = jnp.transpose(w_jmajor).astype(jnp.bfloat16)       # (D, SIX*L) bf16
    sigT = jnp.transpose(jax.nn.sigmoid(params['lut']))     # (64, L)   f32
    return dict(wT=wT, sigT=sigT)


# ----------------------------------------------------------------------------
# ONE fused Pallas kernel: cnn1 -> quantize -> cnn2 -> quantize -> (x-0.5)*score_K
# ----------------------------------------------------------------------------
def _make_net_kernel(B, L1, L2, apply_quant):
    eps = 1e-07

    def lut_row(y, sigT, tidx, L, b):
        # y    : (B, SIX*L) f32 connect-matmul output, column index j*L + l
        # sigT : (64, L)    f32 sigmoid(lut) transposed
        # tidx : (64, L)    i32 iota over LUT entries (sublane axis)
        # Returns the (1, L) LUT-layer output for batch row b.
        s = None
        for j in range(SIX):                                # static unroll over 6 inputs
            yj = y[b:b + 1, j * L:(j + 1) * L]              # (1, L) direct static slice
            p = jnp.maximum(1.0 - yj, 0.0) + eps            # relu(1-x)+eps
            q = jnp.maximum(yj, 0.0) + eps                  # relu(x)+eps
            use_p = ((tidx >> (5 - j)) & 1) == 1            # bit j (MSB-first) of LUT entry
            f = jnp.where(use_p, p, q)                      # (64, L) factor, pure VPU select
            s = f if s is None else s * f                   # running product == exp(sum log)
        # sum over the 64 LUT entries (sublane reduce), weighted by sigmoid(lut)
        return jnp.sum(s * sigT, axis=0, keepdims=True)     # (1, L)

    def kernel(x_ref, w1_ref, w2_ref, sig1T_ref, sig2T_ref, r1_ref, r2_ref, k_ref,
               o_ref, h1_scr):
        # x_ref   : (B, D1)        bf16  input activations, batch-major
        # w1_ref  : (D1, SIX*L1)   bf16  layer-1 connect weights (normalized, j-major, T)
        # w2_ref  : (L1, SIX*L2)   bf16  layer-2 connect weights
        # sig*T   : (64, L*)       f32   sigmoid(lut), transposed
        # r1/r2   : (B, L*)        f32   U[0,1) draws for the two Quantized steps
        # k_ref   : (1,)           f32   score_K scalar (SMEM)
        # o_ref   : (B, L2)        f32   Net output
        # h1_scr  : (B, L1)        f32   VMEM scratch: layer-1 output (never hits HBM)

        # ---- layer 1: ConnectLayer matmul, MXU lane dim = SIX*L1 ----
        y1 = jnp.dot(x_ref[...], w1_ref[...],
                     preferred_element_type=jnp.float32)    # (B, SIX*L1) f32
        sig1T = sig1T_ref[...]
        tidx1 = lax.broadcasted_iota(jnp.int32, (2 ** SIX, L1), 0)
        for b in range(B):                                  # tiny static batch unroll
            row = lut_row(y1, sig1T, tidx1, L1, b)          # (1, L1)
            if apply_quant:                                 # Quantized.forward
                row = (row >= r1_ref[b:b + 1, :]).astype(jnp.float32)
            h1_scr[b:b + 1, :] = row

        # ---- layer 2 (input comes straight from VMEM scratch) ----
        y2 = jnp.dot(h1_scr[...].astype(jnp.bfloat16), w2_ref[...],
                     preferred_element_type=jnp.float32)    # (B, SIX*L2) f32
        sig2T = sig2T_ref[...]
        tidx2 = lax.broadcasted_iota(jnp.int32, (2 ** SIX, L2), 0)
        k = k_ref[0]                                        # score_K scalar (SMEM)
        for b in range(B):
            row = lut_row(y2, sig2T, tidx2, L2, b)          # (1, L2)
            if apply_quant:
                row = (row >= r2_ref[b:b + 1, :]).astype(jnp.float32)
            o_ref[b:b + 1, :] = (row - 0.5) * k             # fused final affine

    return kernel


def net_pallas(x_bf16, wT1, wT2, sig1T, sig2T, r1, r2, score_k, *, apply_quant=True):
    """Full fused Net forward. x_bf16: (B, D1) bf16, batch-major. Returns (B, L2) f32."""
    B, D1 = x_bf16.shape
    L1 = sig1T.shape[1]
    L2 = sig2T.shape[1]
    kernel = _make_net_kernel(B, L1, L2, apply_quant)
    # Everything (wT1 1.5 MiB bf16 + wT2 48 KiB + activations) fits a single VMEM block,
    # so grid=(1,), no accumulator, no HBM round-trip between the layers.
    return pl.pallas_call(
        kernel,
        out_shape=jax.ShapeDtypeStruct((B, L2), jnp.float32),
        grid=(1,),
        in_specs=[
            pl.BlockSpec((B, D1), lambda i: (0, 0)),              # x (bf16)
            pl.BlockSpec((D1, SIX * L1), lambda i: (0, 0)),       # wT1 (bf16)
            pl.BlockSpec((L1, SIX * L2), lambda i: (0, 0)),       # wT2 (bf16)
            pl.BlockSpec((2 ** SIX, L1), lambda i: (0, 0)),       # sigmoid(lut1)^T
            pl.BlockSpec((2 ** SIX, L2), lambda i: (0, 0)),       # sigmoid(lut2)^T
            pl.BlockSpec((B, L1), lambda i: (0, 0)),              # uniforms for quantize 1
            pl.BlockSpec((B, L2), lambda i: (0, 0)),              # uniforms for quantize 2
            pl.BlockSpec(memory_space=pltpu.MemorySpace.SMEM),    # score_K scalar
        ],
        out_specs=pl.BlockSpec((B, L2), lambda i: (0, 0)),
        scratch_shapes=[pltpu.VMEM((B, L1), jnp.float32)],        # layer-1 output
        compiler_params=pltpu.CompilerParams(dimension_semantics=("arbitrary",)),
    )(x_bf16, wT1, wT2, sig1T, sig2T, r1, r2, score_k)


# ----------------------------------------------------------------------------
# Net forward (only the host-side uniform draws + bf16 cast remain outside)
# ----------------------------------------------------------------------------
def net_forward(x, prep1, prep2, score_k, key):
    """Net.forward: cnn1 -> quantize -> cnn2 -> quantize -> (x - 0.5) * score_K."""
    B = x.shape[0]
    L1 = prep1['sigT'].shape[1]
    L2 = prep2['sigT'].shape[1]
    k1, k2 = jax.random.split(key)
    r1 = jax.random.uniform(k1, (B, L1), jnp.float32)   # Quantized.forward uniforms
    r2 = jax.random.uniform(k2, (B, L2), jnp.float32)
    return net_pallas(x.astype(jnp.bfloat16), prep1['wT'], prep2['wT'],
                      prep1['sigT'], prep2['sigT'], r1, r2, score_k,
                      apply_quant=True)


# Pure-JAX reference of one CNNLayer.forward (matmul inputs rounded to bf16 to mirror
# the kernel's bf16 MXU operands; accumulation and everything else stays f32).
def cnn_layer_reference(x, params, table):
    w = _normalized_connect_weights(params)
    y = jnp.dot(x.astype(jnp.bfloat16), w.T.astype(jnp.bfloat16),
                preferred_element_type=jnp.float32)
    y = y.reshape(x.shape[0], -1, SIX)
    eps = 1e-07
    p = jnp.maximum(1.0 - y, 0.0) + eps
    q = jnp.maximum(y, 0.0) + eps
    logs = jnp.log(jnp.concatenate([p, q], axis=-1))                 # (B, L, 12)
    lut_p = jnp.exp(jnp.einsum('blk,kt->blt', logs, table))          # (B, L, 64)
    return jnp.sum(lut_p * jax.nn.sigmoid(params['lut'])[None], -1)  # (B, L)


if __name__ == "__main__":
    key = jax.random.PRNGKey(0)
    kx, kp1, kp2, kr = jax.random.split(key, 4)

    B = 2
    IN_R, IN_D = 16, 4                                       # 16x16 spatial, 4 channels
    x = jax.random.uniform(kx, (B, IN_R * IN_R * IN_D), jnp.float32)  # (2, 1024), HWC flatten

    table = build_lut_table()                                # (12, 64), reference only
    p1 = make_cnn_layer_params(kp1, 16, 4, 4, 4, 8)          # -> L1 = 128
    p2 = make_cnn_layer_params(kp2, 4, 8, 4, 1, 32)          # -> L2 = 32
    prep1 = prepare_cnn_layer(p1)
    prep2 = prepare_cnn_layer(p2)
    score_k = jnp.full((1,), 3.0, jnp.float32)               # score_K parameter

    # Correctness check of the deterministic path (both layers, no quantize, affine kept).
    L1 = prep1['sigT'].shape[1]
    L2 = prep2['sigT'].shape[1]
    r1_dummy = jnp.zeros((B, L1), jnp.float32)
    r2_dummy = jnp.zeros((B, L2), jnp.float32)
    got = net_pallas(x.astype(jnp.bfloat16), prep1['wT'], prep2['wT'],
                     prep1['sigT'], prep2['sigT'], r1_dummy, r2_dummy, score_k,
                     apply_quant=False)
    h1_ref = cnn_layer_reference(x, p1, table)
    h2_ref = cnn_layer_reference(h1_ref, p2, table)
    ref = (h2_ref - 0.5) * score_k[0]
    np.testing.assert_allclose(np.asarray(got), np.asarray(ref), rtol=0.0, atol=2e-2)

    # Full stochastic forward (as in Net.forward).
    out = jax.jit(net_forward)(x, prep1, prep2, score_k, kr)
    out = jax.block_until_ready(out)
    assert out.shape == (B, 32)
    assert bool(jnp.all(jnp.isfinite(out)))
    # quantized outputs can only be (0 - 0.5) * K or (1 - 0.5) * K
    assert bool(jnp.all(jnp.isclose(jnp.abs(out), 0.5 * score_k[0])))
    print("KERNEL_OK")
</pallas_src>

<mosaic_0001>
module attributes {stable_mosaic.version = 11 : i64} {
  func.func @kernel(%arg0: i32, %arg1: memref<2x1024xbf16, #tpu.memory_space<vmem>>, %arg2: memref<1024x768xbf16, #tpu.memory_space<vmem>>, %arg3: memref<128x192xbf16, #tpu.memory_space<vmem>>, %arg4: memref<64x128xf32, #tpu.memory_space<vmem>>, %arg5: memref<64x32xf32, #tpu.memory_space<vmem>>, %arg6: memref<2x128xf32, #tpu.memory_space<vmem>>, %arg7: memref<2x32xf32, #tpu.memory_space<vmem>>, %arg8: memref<1xf32, #tpu.memory_space<smem>>, %arg9: memref<2x32xf32, #tpu.memory_space<vmem>>, %arg10: memref<2x128xf32, #tpu.memory_space<vmem>>) attributes {dimension_semantics = [#tpu.dimension_semantics<arbitrary>], iteration_bounds = array<i64: 1>, scalar_prefetch = 0 : i64, scratch_operands = 1 : i64, tpu.core_type = #tpu.core_type<tc>, window_params = [{pipeline_mode = #tpu.pipeline_mode<synchronous>, transform_indices = @transform_0, window_bounds = array<i64: 2, 1024>}, {pipeline_mode = #tpu.pipeline_mode<synchronous>, transform_indices = @transform_1, window_bounds = array<i64: 1024, 768>}, {pipeline_mode = #tpu.pipeline_mode<synchronous>, transform_indices = @transform_2, window_bounds = array<i64: 128, 192>}, {pipeline_mode = #tpu.pipeline_mode<synchronous>, transform_indices = @transform_3, window_bounds = array<i64: 64, 128>}, {pipeline_mode = #tpu.pipeline_mode<synchronous>, transform_indices = @transform_4, window_bounds = array<i64: 64, 32>}, {pipeline_mode = #tpu.pipeline_mode<synchronous>, transform_indices = @transform_5, window_bounds = array<i64: 2, 128>}, {pipeline_mode = #tpu.pipeline_mode<synchronous>, transform_indices = @transform_6, window_bounds = array<i64: 2, 32>}, {transform_indices = @transform_7, window_bounds = array<i64: 1>}, {pipeline_mode = #tpu.pipeline_mode<synchronous>, transform_indices = @transform_8, window_bounds = array<i64: 2, 32>}]} {
    %c0 = arith.constant 0 : index
    %c0_0 = arith.constant 0 : index
    %0 = vector.load %arg1[%c0, %c0_0] : memref<2x1024xbf16, #tpu.memory_space<vmem>>, vector<2x1024xbf16>
    %c0_1 = arith.constant 0 : index
    %c0_2 = arith.constant 0 : index
    %1 = vector.load %arg2[%c0_1, %c0_2] : memref<1024x768xbf16, #tpu.memory_space<vmem>>, vector<1024x768xbf16>
    %cst = arith.constant dense<0.000000e+00> : vector<2x768xf32>
    %2 = tpu.matmul %0, %1, %cst {dimension_numbers = #tpu.dot_dimension_numbers<[1], [0], [0], [1], [0, 0, 1, 1], [], []>} : vector<2x1024xbf16>, vector<1024x768xbf16>, vector<2x768xf32> -> vector<2x768xf32>
    %c0_3 = arith.constant 0 : index
    %c0_4 = arith.constant 0 : index
    %3 = vector.load %arg4[%c0_3, %c0_4] : memref<64x128xf32, #tpu.memory_space<vmem>>, vector<64x128xf32>
    %4 = tpu.iota {dimensions = array<i32: 0>} : vector<64x128xi32>
    %5 = vector.extract_strided_slice %2 {offsets = [0, 0], sizes = [1, 128], strides = [1, 1]} : vector<2x768xf32> to vector<1x128xf32>
    %cst_5 = arith.constant 1.000000e+00 : f32
    %6 = vector.broadcast %cst_5 : f32 to vector<1x128xf32>
    %7 = arith.subf %6, %5 : vector<1x128xf32>
    %cst_6 = arith.constant 0.000000e+00 : f32
    %8 = vector.broadcast %cst_6 : f32 to vector<1x128xf32>
    %9 = arith.maximumf %7, %8 : vector<1x128xf32>
    %cst_7 = arith.constant 1.000000e-07 : f32
    %10 = vector.broadcast %cst_7 : f32 to vector<1x128xf32>
    %11 = arith.addf %9, %10 : vector<1x128xf32>
    %cst_8 = arith.constant 0.000000e+00 : f32
    %12 = vector.broadcast %cst_8 : f32 to vector<1x128xf32>
    %13 = arith.maximumf %5, %12 : vector<1x128xf32>
    %cst_9 = arith.constant 1.000000e-07 : f32
    %14 = vector.broadcast %cst_9 : f32 to vector<1x128xf32>
    %15 = arith.addf %13, %14 : vector<1x128xf32>
    %c5_i32 = arith.constant 5 : i32
    %16 = vector.broadcast %c5_i32 : i32 to vector<64x128xi32>
    %17 = arith.shrsi %4, %16 : vector<64x128xi32>
    %c1_i32 = arith.constant 1 : i32
    %18 = vector.broadcast %c1_i32 : i32 to vector<64x128xi32>
    %19 = arith.andi %17, %18 : vector<64x128xi32>
    %c1_i32_10 = arith.constant 1 : i32
    %20 = vector.broadcast %c1_i32_10 : i32 to vector<64x128xi32>
    %21 = arith.cmpi eq, %19, %20 : vector<64x128xi32>
    %22 = vector.shape_cast %11 : vector<1x128xf32> to vector<1x128xf32>
    %23 = vector.broadcast %22 : vector<1x128xf32> to vector<64x128xf32>
    %24 = vector.shape_cast %15 : vector<1x128xf32> to vector<1x128xf32>
    %25 = vector.broadcast %24 : vector<1x128xf32> to vector<64x128xf32>
    %26 = arith.select %21, %23, %25 : vector<64x128xi1>, vector<64x128xf32>
    %27 = vector.extract_strided_slice %2 {offsets = [0, 128], sizes = [1, 128], strides = [1, 1]} : vector<2x768xf32> to vector<1x128xf32>
    %cst_11 = arith.constant 1.000000e+00 : f32
    %28 = vector.broadcast %cst_11 : f32 to vector<1x128xf32>
    %29 = arith.subf %28, %27 : vector<1x128xf32>
    %cst_12 = arith.constant 0.000000e+00 : f32
    %30 = vector.broadcast %cst_12 : f32 to vector<1x128xf32>
    %31 = arith.maximumf %29, %30 : vector<1x128xf32>
    %cst_13 = arith.constant 1.000000e-07 : f32
    %32 = vector.broadcast %cst_13 : f32 to vector<1x128xf32>
    %33 = arith.addf %31, %32 : vector<1x128xf32>
    %cst_14 = arith.constant 0.000000e+00 : f32
    %34 = vector.broadcast %cst_14 : f32 to vector<1x128xf32>
    %35 = arith.maximumf %27, %34 : vector<1x128xf32>
    %cst_15 = arith.constant 1.000000e-07 : f32
    %36 = vector.broadcast %cst_15 : f32 to vector<1x128xf32>
    %37 = arith.addf %35, %36 : vector<1x128xf32>
    %c4_i32 = arith.constant 4 : i32
    %38 = vector.broadcast %c4_i32 : i32 to vector<64x128xi32>
    %39 = arith.shrsi %4, %38 : vector<64x128xi32>
    %c1_i32_16 = arith.constant 1 : i32
    %40 = vector.broadcast %c1_i32_16 : i32 to vector<64x128xi32>
    %41 = arith.andi %39, %40 : vector<64x128xi32>
    %c1_i32_17 = arith.constant 1 : i32
    %42 = vector.broadcast %c1_i32_17 : i32 to vector<64x128xi32>
    %43 = arith.cmpi eq, %41, %42 : vector<64x128xi32>
    %44 = vector.shape_cast %33 : vector<1x128xf32> to vector<1x128xf32>
    %45 = vector.broadcast %44 : vector<1x128xf32> to vector<64x128xf32>
    %46 = vector.shape_cast %37 : vector<1x128xf32> to vector<1x128xf32>
    %47 = vector.broadcast %46 : vector<1x128xf32> to vector<64x128xf32>
    %48 = arith.select %43, %45, %47 : vector<64x128xi1>, vector<64x128xf32>
    %49 = arith.mulf %26, %48 : vector<64x128xf32>
    %50 = vector.extract_strided_slice %2 {offsets = [0, 256], sizes = [1, 128], strides = [1, 1]} : vector<2x768xf32> to vector<1x128xf32>
    %cst_18 = arith.constant 1.000000e+00 : f32
    %51 = vector.broadcast %cst_18 : f32 to vector<1x128xf32>
    %52 = arith.subf %51, %50 : vector<1x128xf32>
    %cst_19 = arith.constant 0.000000e+00 : f32
    %53 = vector.broadcast %cst_19 : f32 to vector<1x128xf32>
    %54 = arith.maximumf %52, %53 : vector<1x128xf32>
    %cst_20 = arith.constant 1.000000e-07 : f32
    %55 = vector.broadcast %cst_20 : f32 to vector<1x128xf32>
    %56 = arith.addf %54, %55 : vector<1x128xf32>
    %cst_21 = arith.constant 0.000000e+00 : f32
    %57 = vector.broadcast %cst_21 : f32 to vector<1x128xf32>
    %58 = arith.maximumf %50, %57 : vector<1x128xf32>
    %cst_22 = arith.constant 1.000000e-07 : f32
    %59 = vector.broadcast %cst_22 : f32 to vector<1x128xf32>
    %60 = arith.addf %58, %59 : vector<1x128xf32>
    %c3_i32 = arith.constant 3 : i32
    %61 = vector.broadcast %c3_i32 : i32 to vector<64x128xi32>
    %62 = arith.shrsi %4, %61 : vector<64x128xi32>
    %c1_i32_23 = arith.constant 1 : i32
    %63 = vector.broadcast %c1_i32_23 : i32 to vector<64x128xi32>
    %64 = arith.andi %62, %63 : vector<64x128xi32>
    %c1_i32_24 = arith.constant 1 : i32
    %65 = vector.broadcast %c1_i32_24 : i32 to vector<64x128xi32>
    %66 = arith.cmpi eq, %64, %65 : vector<64x128xi32>
    %67 = vector.shape_cast %56 : vector<1x128xf32> to vector<1x128xf32>
    %68 = vector.broadcast %67 : vector<1x128xf32> to vector<64x128xf32>
    %69 = vector.shape_cast %60 : vector<1x128xf32> to vector<1x128xf32>
    %70 = vector.broadcast %69 : vector<1x128xf32> to vector<64x128xf32>
    %71 = arith.select %66, %68, %70 : vector<64x128xi1>, vector<64x128xf32>
    %72 = arith.mulf %49, %71 : vector<64x128xf32>
    %73 = vector.extract_strided_slice %2 {offsets = [0, 384], sizes = [1, 128], strides = [1, 1]} : vector<2x768xf32> to vector<1x128xf32>
    %cst_25 = arith.constant 1.000000e+00 : f32
    %74 = vector.broadcast %cst_25 : f32 to vector<1x128xf32>
    %75 = arith.subf %74, %73 : vector<1x128xf32>
    %cst_26 = arith.constant 0.000000e+00 : f32
    %76 = vector.broadcast %cst_26 : f32 to vector<1x128xf32>
    %77 = arith.maximumf %75, %76 : vector<1x128xf32>
    %cst_27 = arith.constant 1.000000e-07 : f32
    %78 = vector.broadcast %cst_27 : f32 to vector<1x128xf32>
    %79 = arith.addf %77, %78 : vector<1x128xf32>
    %cst_28 = arith.constant 0.000000e+00 : f32
    %80 = vector.broadcast %cst_28 : f32 to vector<1x128xf32>
    %81 = arith.maximumf %73, %80 : vector<1x128xf32>
    %cst_29 = arith.constant 1.000000e-07 : f32
    %82 = vector.broadcast %cst_29 : f32 to vector<1x128xf32>
    %83 = arith.addf %81, %82 : vector<1x128xf32>
    %c2_i32 = arith.constant 2 : i32
    %84 = vector.broadcast %c2_i32 : i32 to vector<64x128xi32>
    %85 = arith.shrsi %4, %84 : vector<64x128xi32>
    %c1_i32_30 = arith.constant 1 : i32
    %86 = vector.broadcast %c1_i32_30 : i32 to vector<64x128xi32>
    %87 = arith.andi %85, %86 : vector<64x128xi32>
    %c1_i32_31 = arith.constant 1 : i32
    %88 = vector.broadcast %c1_i32_31 : i32 to vector<64x128xi32>
    %89 = arith.cmpi eq, %87, %88 : vector<64x128xi32>
    %90 = vector.shape_cast %79 : vector<1x128xf32> to vector<1x128xf32>
    %91 = vector.broadcast %90 : vector<1x128xf32> to vector<64x128xf32>
    %92 = vector.shape_cast %83 : vector<1x128xf32> to vector<1x128xf32>
    %93 = vector.broadcast %92 : vector<1x128xf32> to vector<64x128xf32>
    %94 = arith.select %89, %91, %93 : vector<64x128xi1>, vector<64x128xf32>
    %95 = arith.mulf %72, %94 : vector<64x128xf32>
    %96 = vector.extract_strided_slice %2 {offsets = [0, 512], sizes = [1, 128], strides = [1, 1]} : vector<2x768xf32> to vector<1x128xf32>
    %cst_32 = arith.constant 1.000000e+00 : f32
    %97 = vector.broadcast %cst_32 : f32 to vector<1x128xf32>
    %98 = arith.subf %97, %96 : vector<1x128xf32>
    %cst_33 = arith.constant 0.000000e+00 : f32
    %99 = vector.broadcast %cst_33 : f32 to vector<1x128xf32>
    %100 = arith.maximumf %98, %99 : vector<1x128xf32>
    %cst_34 = arith.constant 1.000000e-07 : f32
    %101 = vector.broadcast %cst_34 : f32 to vector<1x128xf32>
    %102 = arith.addf %100, %101 : vector<1x128xf32>
    %cst_35 = arith.constant 0.000000e+00 : f32
    %103 = vector.broadcast %cst_35 : f32 to vector<1x128xf32>
    %104 = arith.maximumf %96, %103 : vector<1x128xf32>
    %cst_36 = arith.constant 1.000000e-07 : f32
    %105 = vector.broadcast %cst_36 : f32 to vector<1x128xf32>
    %106 = arith.addf %104, %105 : vector<1x128xf32>
    %c1_i32_37 = arith.constant 1 : i32
    %107 = vector.broadcast %c1_i32_37 : i32 to vector<64x128xi32>
    %108 = arith.shrsi %4, %107 : vector<64x128xi32>
    %c1_i32_38 = arith.constant 1 : i32
    %109 = vector.broadcast %c1_i32_38 : i32 to vector<64x128xi32>
    %110 = arith.andi %108, %109 : vector<64x128xi32>
    %c1_i32_39 = arith.constant 1 : i32
    %111 = vector.broadcast %c1_i32_39 : i32 to vector<64x128xi32>
    %112 = arith.cmpi eq, %110, %111 : vector<64x128xi32>
    %113 = vector.shape_cast %102 : vector<1x128xf32> to vector<1x128xf32>
    %114 = vector.broadcast %113 : vector<1x128xf32> to vector<64x128xf32>
    %115 = vector.shape_cast %106 : vector<1x128xf32> to vector<1x128xf32>
    %116 = vector.broadcast %115 : vector<1x128xf32> to vector<64x128xf32>
    %117 = arith.select %112, %114, %116 : vector<64x128xi1>, vector<64x128xf32>
    %118 = arith.mulf %95, %117 : vector<64x128xf32>
    %119 = vector.extract_strided_slice %2 {offsets = [0, 640], sizes = [1, 128], strides = [1, 1]} : vector<2x768xf32> to vector<1x128xf32>
    %cst_40 = arith.constant 1.000000e+00 : f32
    %120 = vector.broadcast %cst_40 : f32 to vector<1x128xf32>
    %121 = arith.subf %120, %119 : vector<1x128xf32>
    %cst_41 = arith.constant 0.000000e+00 : f32
    %122 = vector.broadcast %cst_41 : f32 to vector<1x128xf32>
    %123 = arith.maximumf %121, %122 : vector<1x128xf32>
    %cst_42 = arith.constant 1.000000e-07 : f32
    %124 = vector.broadcast %cst_42 : f32 to vector<1x128xf32>
    %125 = arith.addf %123, %124 : vector<1x128xf32>
    %cst_43 = arith.constant 0.000000e+00 : f32
    %126 = vector.broadcast %cst_43 : f32 to vector<1x128xf32>
    %127 = arith.maximumf %119, %126 : vector<1x128xf32>
    %cst_44 = arith.constant 1.000000e-07 : f32
    %128 = vector.broadcast %cst_44 : f32 to vector<1x128xf32>
    %129 = arith.addf %127, %128 : vector<1x128xf32>
    %c0_i32 = arith.constant 0 : i32
    %130 = vector.broadcast %c0_i32 : i32 to vector<64x128xi32>
    %131 = arith.shrsi %4, %130 : vector<64x128xi32>
    %c1_i32_45 = arith.constant 1 : i32
    %132 = vector.broadcast %c1_i32_45 : i32 to vector<64x128xi32>
    %133 = arith.andi %131, %132 : vector<64x128xi32>
    %c1_i32_46 = arith.constant 1 : i32
    %134 = vector.broadcast %c1_i32_46 : i32 to vector<64x128xi32>
    %135 = arith.cmpi eq, %133, %134 : vector<64x128xi32>
    %136 = vector.shape_cast %125 : vector<1x128xf32> to vector<1x128xf32>
    %137 = vector.broadcast %136 : vector<1x128xf32> to vector<64x128xf32>
    %138 = vector.shape_cast %129 : vector<1x128xf32> to vector<1x128xf32>
    %139 = vector.broadcast %138 : vector<1x128xf32> to vector<64x128xf32>
    %140 = arith.select %135, %137, %139 : vector<64x128xi1>, vector<64x128xf32>
    %141 = arith.mulf %118, %140 : vector<64x128xf32>
    %142 = arith.mulf %141, %3 : vector<64x128xf32>
    %cst_47 = arith.constant dense<0.000000e+00> : vector<128xf32>
    %143 = vector.multi_reduction <add>, %142, %cst_47 [0] : vector<64x128xf32> to vector<128xf32>
    %144 = vector.shape_cast %143 : vector<128xf32> to vector<1x128xf32>
    %c0_48 = arith.constant 0 : index
    %c0_49 = arith.constant 0 : index
    %145 = vector.load %arg10[%c0_48, %c0_49] : memref<2x128xf32, #tpu.memory_space<vmem>>, vector<1x128xf32>
    tpu.vector_store %arg10[%c0_48, %c0_49], %144 {strides = array<i32>} : memref<2x128xf32, #tpu.memory_space<vmem>>, vector<1x128xf32>,
    %146 = vector.extract_strided_slice %2 {offsets = [1, 0], sizes = [1, 128], strides = [1, 1]} : vector<2x768xf32> to vector<1x128xf32>
    %cst_50 = arith.constant 1.000000e+00 : f32
    %147 = vector.broadcast %cst_50 : f32 to vector<1x128xf32>
    %148 = arith.subf %147, %146 : vector<1x128xf32>
    %cst_51 = arith.constant 0.000000e+00 : f32
    %149 = vector.broadcast %cst_51 : f32 to vector<1x128xf32>
    %150 = arith.maximumf %148, %149 : vector<1x128xf32>
    %cst_52 = arith.constant 1.000000e-07 : f32
    %151 = vector.broadcast %cst_52 : f32 to vector<1x128xf32>
    %152 = arith.addf %150, %151 : vector<1x128xf32>
    %cst_53 = arith.constant 0.000000e+00 : f32
    %153 = vector.broadcast %cst_53 : f32 to vector<1x128xf32>
    %154 = arith.maximumf %146, %153 : vector<1x128xf32>
    %cst_54 = arith.constant 1.000000e-07 : f32
    %155 = vector.broadcast %cst_54 : f32 to vector<1x128xf32>
    %156 = arith.addf %154, %155 : vector<1x128xf32>
    %c5_i32_55 = arith.constant 5 : i32
    %157 = vector.broadcast %c5_i32_55 : i32 to vector<64x128xi32>
    %158 = arith.shrsi %4, %157 : vector<64x128xi32>
    %c1_i32_56 = arith.constant 1 : i32
    %159 = vector.broadcast %c1_i32_56 : i32 to vector<64x128xi32>
    %160 = arith.andi %158, %159 : vector<64x128xi32>
    %c1_i32_57 = arith.constant 1 : i32
    %161 = vector.broadcast %c1_i32_57 : i32 to vector<64x128xi32>
    %162 = arith.cmpi eq, %160, %161 : vector<64x128xi32>
    %163 = vector.shape_cast %152 : vector<1x128xf32> to vector<1x128xf32>
    %164 = vector.broadcast %163 : vector<1x128xf32> to vector<64x128xf32>
    %165 = vector.shape_cast %156 : vector<1x128xf32> to vector<1x128xf32>
    %166 = vector.broadcast %165 : vector<1x128xf32> to vector<64x128xf32>
    %167 = arith.select %162, %164, %166 : vector<64x128xi1>, vector<64x128xf32>
    %168 = vector.extract_strided_slice %2 {offsets = [1, 128], sizes = [1, 128], strides = [1, 1]} : vector<2x768xf32> to vector<1x128xf32>
    %cst_58 = arith.constant 1.000000e+00 : f32
    %169 = vector.broadcast %cst_58 : f32 to vector<1x128xf32>
    %170 = arith.subf %169, %168 : vector<1x128xf32>
    %cst_59 = arith.constant 0.000000e+00 : f32
    %171 = vector.broadcast %cst_59 : f32 to vector<1x128xf32>
    %172 = arith.maximumf %170, %171 : vector<1x128xf32>
    %cst_60 = arith.constant 1.000000e-07 : f32
    %173 = vector.broadcast %cst_60 : f32 to vector<1x128xf32>
    %174 = arith.addf %172, %173 : vector<1x128xf32>
    %cst_61 = arith.constant 0.000000e+00 : f32
    %175 = vector.broadcast %cst_61 : f32 to vector<1x128xf32>
    %176 = arith.maximumf %168, %175 : vector<1x128xf32>
    %cst_62 = arith.constant 1.000000e-07 : f32
    %177 = vector.broadcast %cst_62 : f32 to vector<1x128xf32>
    %178 = arith.addf %176, %177 : vector<1x128xf32>
    %c4_i32_63 = arith.constant 4 : i32
    %179 = vector.broadcast %c4_i32_63 : i32 to vector<64x128xi32>
    %180 = arith.shrsi %4, %179 : vector<64x128xi32>
    %c1_i32_64 = arith.constant 1 : i32
    %181 = vector.broadcast %c1_i32_64 : i32 to vector<64x128xi32>
    %182 = arith.andi %180, %181 : vector<64x128xi32>
    %c1_i32_65 = arith.constant 1 : i32
    %183 = vector.broadcast %c1_i32_65 : i32 to vector<64x128xi32>
    %184 = arith.cmpi eq, %182, %183 : vector<64x128xi32>
    %185 = vector.shape_cast %174 : vector<1x128xf32> to vector<1x128xf32>
    %186 = vector.broadcast %185 : vector<1x128xf32> to vector<64x128xf32>
    %187 = vector.shape_cast %178 : vector<1x128xf32> to vector<1x128xf32>
    %188 = vector.broadcast %187 : vector<1x128xf32> to vector<64x128xf32>
    %189 = arith.select %184, %186, %188 : vector<64x128xi1>, vector<64x128xf32>
    %190 = arith.mulf %167, %189 : vector<64x128xf32>
    %191 = vector.extract_strided_slice %2 {offsets = [1, 256], sizes = [1, 128], strides = [1, 1]} : vector<2x768xf32> to vector<1x128xf32>
    %cst_66 = arith.constant 1.000000e+00 : f32
    %192 = vector.broadcast %cst_66 : f32 to vector<1x128xf32>
    %193 = arith.subf %192, %191 : vector<1x128xf32>
    %cst_67 = arith.constant 0.000000e+00 : f32
    %194 = vector.broadcast %cst_67 : f32 to vector<1x128xf32>
    %195 = arith.maximumf %193, %194 : vector<1x128xf32>
    %cst_68 = arith.constant 1.000000e-07 : f32
    %196 = vector.broadcast %cst_68 : f32 to vector<1x128xf32>
    %197 = arith.addf %195, %196 : vector<1x128xf32>
    %cst_69 = arith.constant 0.000000e+00 : f32
    %198 = vector.broadcast %cst_69 : f32 to vector<1x128xf32>
    %199 = arith.maximumf %191, %198 : vector<1x128xf32>
    %cst_70 = arith.constant 1.000000e-07 : f32
    %200 = vector.broadcast %cst_70 : f32 to vector<1x128xf32>
    %201 = arith.addf %199, %200 : vector<1x128xf32>
    %c3_i32_71 = arith.constant 3 : i32
    %202 = vector.broadcast %c3_i32_71 : i32 to vector<64x128xi32>
    %203 = arith.shrsi %4, %202 : vector<64x128xi32>
    %c1_i32_72 = arith.constant 1 : i32
    %204 = vector.broadcast %c1_i32_72 : i32 to vector<64x128xi32>
    %205 = arith.andi %203, %204 : vector<64x128xi32>
    %c1_i32_73 = arith.constant 1 : i32
    %206 = vector.broadcast %c1_i32_73 : i32 to vector<64x128xi32>
    %207 = arith.cmpi eq, %205, %206 : vector<64x128xi32>
    %208 = vector.shape_cast %197 : vector<1x128xf32> to vector<1x128xf32>
    %209 = vector.broadcast %208 : vector<1x128xf32> to vector<64x128xf32>
    %210 = vector.shape_cast %201 : vector<1x128xf32> to vector<1x128xf32>
    %211 = vector.broadcast %210 : vector<1x128xf32> to vector<64x128xf32>
    %212 = arith.select %207, %209, %211 : vector<64x128xi1>, vector<64x128xf32>
    %213 = arith.mulf %190, %212 : vector<64x128xf32>
    %214 = vector.extract_strided_slice %2 {offsets = [1, 384], sizes = [1, 128], strides = [1, 1]} : vector<2x768xf32> to vector<1x128xf32>
    %cst_74 = arith.constant 1.000000e+00 : f32
    %215 = vector.broadcast %cst_74 : f32 to vector<1x128xf32>
    %216 = arith.subf %215, %214 : vector<1x128xf32>
    %cst_75 = arith.constant 0.000000e+00 : f32
    %217 = vector.broadcast %cst_75 : f32 to vector<1x128xf32>
    %218 = arith.maximumf %216, %217 : vector<1x128xf32>
    %cst_76 = arith.constant 1.000000e-07 : f32
    %219 = vector.broadcast %cst_76 : f32 to vector<1x128xf32>
    %220 = arith.addf %218, %219 : vector<1x128xf32>
    %cst_77 = arith.constant 0.000000e+00 : f32
    %221 = vector.broadcast %cst_77 : f32 to vector<1x128xf32>
    %222 = arith.maximumf %214, %221 : vector<1x128xf32>
    %cst_78 = arith.constant 1.000000e-07 : f32
    %223 = vector.broadcast %cst_78 : f32 to vector<1x128xf32>
    %224 = arith.addf %222, %223 : vector<1x128xf32>
    %c2_i32_79 = arith.constant 2 : i32
    %225 = vector.broadcast %c2_i32_79 : i32 to vector<64x128xi32>
    %226 = arith.shrsi %4, %225 : vector<64x128xi32>
    %c1_i32_80 = arith.constant 1 : i32
    %227 = vector.broadcast %c1_i32_80 : i32 to vector<64x128xi32>
    %228 = arith.andi %226, %227 : vector<64x128xi32>
    %c1_i32_81 = arith.constant 1 : i32
    %229 = vector.broadcast %c1_i32_81 : i32 to vector<64x128xi32>
    %230 = arith.cmpi eq, %228, %229 : vector<64x128xi32>
    %231 = vector.shape_cast %220 : vector<1x128xf32> to vector<1x128xf32>
    %232 = vector.broadcast %231 : vector<1x128xf32> to vector<64x128xf32>
    %233 = vector.shape_cast %224 : vector<1x128xf32> to vector<1x128xf32>
    %234 = vector.broadcast %233 : vector<1x128xf32> to vector<64x128xf32>
    %235 = arith.select %230, %232, %234 : vector<64x128xi1>, vector<64x128xf32>
    %236 = arith.mulf %213, %235 : vector<64x128xf32>
    %237 = vector.extract_strided_slice %2 {offsets = [1, 512], sizes = [1, 128], strides = [1, 1]} : vector<2x768xf32> to vector<1x128xf32>
    %cst_82 = arith.constant 1.000000e+00 : f32
    %238 = vector.broadcast %cst_82 : f32 to vector<1x128xf32>
    %239 = arith.subf %238, %237 : vector<1x128xf32>
    %cst_83 = arith.constant 0.000000e+00 : f32
    %240 = vector.broadcast %cst_83 : f32 to vector<1x128xf32>
    %241 = arith.maximumf %239, %240 : vector<1x128xf32>
    %cst_84 = arith.constant 1.000000e-07 : f32
    %242 = vector.broadcast %cst_84 : f32 to vector<1x128xf32>
    %243 = arith.addf %241, %242 : vector<1x128xf32>
    %cst_85 = arith.constant 0.000000e+00 : f32
    %244 = vector.broadcast %cst_85 : f32 to vector<1x128xf32>
    %245 = arith.maximumf %237, %244 : vector<1x128xf32>
    %cst_86 = arith.constant 1.000000e-07 : f32
    %246 = vector.broadcast %cst_86 : f32 to vector<1x128xf32>
    %247 = arith.addf %245, %246 : vector<1x128xf32>
    %c1_i32_87 = arith.constant 1 : i32
    %248 = vector.broadcast %c1_i32_87 : i32 to vector<64x128xi32>
    %249 = arith.shrsi %4, %248 : vector<64x128xi32>
    %c1_i32_88 = arith.constant 1 : i32
    %250 = vector.broadcast %c1_i32_88 : i32 to vector<64x128xi32>
    %251 = arith.andi %249, %250 : vector<64x128xi32>
    %c1_i32_89 = arith.constant 1 : i32
    %252 = vector.broadcast %c1_i32_89 : i32 to vector<64x128xi32>
    %253 = arith.cmpi eq, %251, %252 : vector<64x128xi32>
    %254 = vector.shape_cast %243 : vector<1x128xf32> to vector<1x128xf32>
    %255 = vector.broadcast %254 : vector<1x128xf32> to vector<64x128xf32>
    %256 = vector.shape_cast %247 : vector<1x128xf32> to vector<1x128xf32>
    %257 = vector.broadcast %256 : vector<1x128xf32> to vector<64x128xf32>
    %258 = arith.select %253, %255, %257 : vector<64x128xi1>, vector<64x128xf32>
    %259 = arith.mulf %236, %258 : vector<64x128xf32>
    %260 = vector.extract_strided_slice %2 {offsets = [1, 640], sizes = [1, 128], strides = [1, 1]} : vector<2x768xf32> to vector<1x128xf32>
    %cst_90 = arith.constant 1.000000e+00 : f32
    %261 = vector.broadcast %cst_90 : f32 to vector<1x128xf32>
    %262 = arith.subf %261, %260 : vector<1x128xf32>
    %cst_91 = arith.constant 0.000000e+00 : f32
    %263 = vector.broadcast %cst_91 : f32 to vector<1x128xf32>
    %264 = arith.maximumf %262, %263 : vector<1x128xf32>
    %cst_92 = arith.constant 1.000000e-07 : f32
    %265 = vector.broadcast %cst_92 : f32 to vector<1x128xf32>
    %266 = arith.addf %264, %265 : vector<1x128xf32>
    %cst_93 = arith.constant 0.000000e+00 : f32
    %267 = vector.broadcast %cst_93 : f32 to vector<1x128xf32>
    %268 = arith.maximumf %260, %267 : vector<1x128xf32>
    %cst_94 = arith.constant 1.000000e-07 : f32
    %269 = vector.broadcast %cst_94 : f32 to vector<1x128xf32>
    %270 = arith.addf %268, %269 : vector<1x128xf32>
    %c0_i32_95 = arith.constant 0 : i32
    %271 = vector.broadcast %c0_i32_95 : i32 to vector<64x128xi32>
    %272 = arith.shrsi %4, %271 : vector<64x128xi32>
    %c1_i32_96 = arith.constant 1 : i32
    %273 = vector.broadcast %c1_i32_96 : i32 to vector<64x128xi32>
    %274 = arith.andi %272, %273 : vector<64x128xi32>
    %c1_i32_97 = arith.constant 1 : i32
    %275 = vector.broadcast %c1_i32_97 : i32 to vector<64x128xi32>
    %276 = arith.cmpi eq, %274, %275 : vector<64x128xi32>
    %277 = vector.shape_cast %266 : vector<1x128xf32> to vector<1x128xf32>
    %278 = vector.broadcast %277 : vector<1x128xf32> to vector<64x128xf32>
    %279 = vector.shape_cast %270 : vector<1x128xf32> to vector<1x128xf32>
    %280 = vector.broadcast %279 : vector<1x128xf32> to vector<64x128xf32>
    %281 = arith.select %276, %278, %280 : vector<64x128xi1>, vector<64x128xf32>
    %282 = arith.mulf %259, %281 : vector<64x128xf32>
    %283 = arith.mulf %282, %3 : vector<64x128xf32>
    %cst_98 = arith.constant dense<0.000000e+00> : vector<128xf32>
    %284 = vector.multi_reduction <add>, %283, %cst_98 [0] : vector<64x128xf32> to vector<128xf32>
    %285 = vector.shape_cast %284 : vector<128xf32> to vector<1x128xf32>
    %c1 = arith.constant 1 : index
    %c0_99 = arith.constant 0 : index
    %286 = vector.load %arg10[%c1, %c0_99] : memref<2x128xf32, #tpu.memory_space<vmem>>, vector<1x128xf32>
    tpu.vector_store %arg10[%c1, %c0_99], %285 {strides = array<i32>} : memref<2x128xf32, #tpu.memory_space<vmem>>, vector<1x128xf32>,
    %c0_100 = arith.constant 0 : index
    %c0_101 = arith.constant 0 : index
    %287 = vector.load %arg10[%c0_100, %c0_101] : memref<2x128xf32, #tpu.memory_space<vmem>>, vector<2x128xf32>
    %288 = arith.truncf %287 : vector<2x128xf32> to vector<2x128xbf16>
    %c0_102 = arith.constant 0 : index
    %c0_103 = arith.constant 0 : index
    %289 = vector.load %arg3[%c0_102, %c0_103] : memref<128x192xbf16, #tpu.memory_space<vmem>>, vector<128x192xbf16>
    %cst_104 = arith.constant dense<0.000000e+00> : vector<2x192xf32>
    %290 = tpu.matmul %288, %289, %cst_104 {dimension_numbers = #tpu.dot_dimension_numbers<[1], [0], [0], [1], [0, 0, 1, 1], [], []>} : vector<2x128xbf16>, vector<128x192xbf16>, vector<2x192xf32> -> vector<2x192xf32>
    %c0_105 = arith.constant 0 : index
    %c0_106 = arith.constant 0 : index
    %291 = vector.load %arg5[%c0_105, %c0_106] : memref<64x32xf32, #tpu.memory_space<vmem>>, vector<64x32xf32>
    %292 = tpu.iota {dimensions = array<i32: 0>} : vector<64x32xi32>
    %c0_107 = arith.constant 0 : index
    %293 = memref.load %arg8[%c0_107] : memref<1xf32, #tpu.memory_space<smem>>
    %294 = vector.extract_strided_slice %290 {offsets = [0, 0], sizes = [1, 32], strides = [1, 1]} : vector<2x192xf32> to vector<1x32xf32>
    %cst_108 = arith.constant 1.000000e+00 : f32
    %295 = vector.broadcast %cst_108 : f32 to vector<1x32xf32>
    %296 = arith.subf %295, %294 : vector<1x32xf32>
    %cst_109 = arith.constant 0.000000e+00 : f32
    %297 = vector.broadcast %cst_109 : f32 to vector<1x32xf32>
    %298 = arith.maximumf %296, %297 : vector<1x32xf32>
    %cst_110 = arith.constant 1.000000e-07 : f32
    %299 = vector.broadcast %cst_110 : f32 to vector<1x32xf32>
    %300 = arith.addf %298, %299 : vector<1x32xf32>
    %cst_111 = arith.constant 0.000000e+00 : f32
    %301 = vector.broadcast %cst_111 : f32 to vector<1x32xf32>
    %302 = arith.maximumf %294, %301 : vector<1x32xf32>
    %cst_112 = arith.constant 1.000000e-07 : f32
    %303 = vector.broadcast %cst_112 : f32 to vector<1x32xf32>
    %304 = arith.addf %302, %303 : vector<1x32xf32>
    %c5_i32_113 = arith.constant 5 : i32
    %305 = vector.broadcast %c5_i32_113 : i32 to vector<64x32xi32>
    %306 = arith.shrsi %292, %305 : vector<64x32xi32>
    %c1_i32_114 = arith.constant 1 : i32
    %307 = vector.broadcast %c1_i32_114 : i32 to vector<64x32xi32>
    %308 = arith.andi %306, %307 : vector<64x32xi32>
    %c1_i32_115 = arith.constant 1 : i32
    %309 = vector.broadcast %c1_i32_115 : i32 to vector<64x32xi32>
    %310 = arith.cmpi eq, %308, %309 : vector<64x32xi32>
    %311 = vector.shape_cast %300 : vector<1x32xf32> to vector<1x32xf32>
    %312 = vector.broadcast %311 : vector<1x32xf32> to vector<64x32xf32>
    %313 = vector.shape_cast %304 : vector<1x32xf32> to vector<1x32xf32>
    %314 = vector.broadcast %313 : vector<1x32xf32> to vector<64x32xf32>
    %315 = arith.select %310, %312, %314 : vector<64x32xi1>, vector<64x32xf32>
    %316 = vector.extract_strided_slice %290 {offsets = [0, 32], sizes = [1, 32], strides = [1, 1]} : vector<2x192xf32> to vector<1x32xf32>
    %cst_116 = arith.constant 1.000000e+00 : f32
    %317 = vector.broadcast %cst_116 : f32 to vector<1x32xf32>
    %318 = arith.subf %317, %316 : vector<1x32xf32>
    %cst_117 = arith.constant 0.000000e+00 : f32
    %319 = vector.broadcast %cst_117 : f32 to vector<1x32xf32>
    %320 = arith.maximumf %318, %319 : vector<1x32xf32>
    %cst_118 = arith.constant 1.000000e-07 : f32
    %321 = vector.broadcast %cst_118 : f32 to vector<1x32xf32>
    %322 = arith.addf %320, %321 : vector<1x32xf32>
    %cst_119 = arith.constant 0.000000e+00 : f32
    %323 = vector.broadcast %cst_119 : f32 to vector<1x32xf32>
    %324 = arith.maximumf %316, %323 : vector<1x32xf32>
    %cst_120 = arith.constant 1.000000e-07 : f32
    %325 = vector.broadcast %cst_120 : f32 to vector<1x32xf32>
    %326 = arith.addf %324, %325 : vector<1x32xf32>
    %c4_i32_121 = arith.constant 4 : i32
    %327 = vector.broadcast %c4_i32_121 : i32 to vector<64x32xi32>
    %328 = arith.shrsi %292, %327 : vector<64x32xi32>
    %c1_i32_122 = arith.constant 1 : i32
    %329 = vector.broadcast %c1_i32_122 : i32 to vector<64x32xi32>
    %330 = arith.andi %328, %329 : vector<64x32xi32>
    %c1_i32_123 = arith.constant 1 : i32
    %331 = vector.broadcast %c1_i32_123 : i32 to vector<64x32xi32>
    %332 = arith.cmpi eq, %330, %331 : vector<64x32xi32>
    %333 = vector.shape_cast %322 : vector<1x32xf32> to vector<1x32xf32>
    %334 = vector.broadcast %333 : vector<1x32xf32> to vector<64x32xf32>
    %335 = vector.shape_cast %326 : vector<1x32xf32> to vector<1x32xf32>
    %336 = vector.broadcast %335 : vector<1x32xf32> to vector<64x32xf32>
    %337 = arith.select %332, %334, %336 : vector<64x32xi1>, vector<64x32xf32>
    %338 = arith.mulf %315, %337 : vector<64x32xf32>
    %339 = vector.extract_strided_slice %290 {offsets = [0, 64], sizes = [1, 32], strides = [1, 1]} : vector<2x192xf32> to vector<1x32xf32>
    %cst_124 = arith.constant 1.000000e+00 : f32
    %340 = vector.broadcast %cst_124 : f32 to vector<1x32xf32>
    %341 = arith.subf %340, %339 : vector<1x32xf32>
    %cst_125 = arith.constant 0.000000e+00 : f32
    %342 = vector.broadcast %cst_125 : f32 to vector<1x32xf32>
    %343 = arith.maximumf %341, %342 : vector<1x32xf32>
    %cst_126 = arith.constant 1.000000e-07 : f32
    %344 = vector.broadcast %cst_126 : f32 to vector<1x32xf32>
    %345 = arith.addf %343, %344 : vector<1x32xf32>
    %cst_127 = arith.constant 0.000000e+00 : f32
    %346 = vector.broadcast %cst_127 : f32 to vector<1x32xf32>
    %347 = arith.maximumf %339, %346 : vector<1x32xf32>
    %cst_128 = arith.constant 1.000000e-07 : f32
    %348 = vector.broadcast %cst_128 : f32 to vector<1x32xf32>
    %349 = arith.addf %347, %348 : vector<1x32xf32>
    %c3_i32_129 = arith.constant 3 : i32
    %350 = vector.broadcast %c3_i32_129 : i32 to vector<64x32xi32>
    %351 = arith.shrsi %292, %350 : vector<64x32xi32>
    %c1_i32_130 = arith.constant 1 : i32
    %352 = vector.broadcast %c1_i32_130 : i32 to vector<64x32xi32>
    %353 = arith.andi %351, %352 : vector<64x32xi32>
    %c1_i32_131 = arith.constant 1 : i32
    %354 = vector.broadcast %c1_i32_131 : i32 to vector<64x32xi32>
    %355 = arith.cmpi eq, %353, %354 : vector<64x32xi32>
    %356 = vector.shape_cast %345 : vector<1x32xf32> to vector<1x32xf32>
    %357 = vector.broadcast %356 : vector<1x32xf32> to vector<64x32xf32>
    %358 = vector.shape_cast %349 : vector<1x32xf32> to vector<1x32xf32>
    %359 = vector.broadcast %358 : vector<1x32xf32> to vector<64x32xf32>
    %360 = arith.select %355, %357, %359 : vector<64x32xi1>, vector<64x32xf32>
    %361 = arith.mulf %338, %360 : vector<64x32xf32>
    %362 = vector.extract_strided_slice %290 {offsets = [0, 96], sizes = [1, 32], strides = [1, 1]} : vector<2x192xf32> to vector<1x32xf32>
    %cst_132 = arith.constant 1.000000e+00 : f32
    %363 = vector.broadcast %cst_132 : f32 to vector<1x32xf32>
    %364 = arith.subf %363, %362 : vector<1x32xf32>
    %cst_133 = arith.constant 0.000000e+00 : f32
    %365 = vector.broadcast %cst_133 : f32 to vector<1x32xf32>
    %366 = arith.maximumf %364, %365 : vector<1x32xf32>
    %cst_134 = arith.constant 1.000000e-07 : f32
    %367 = vector.broadcast %cst_134 : f32 to vector<1x32xf32>
    %368 = arith.addf %366, %367 : vector<1x32xf32>
    %cst_135 = arith.constant 0.000000e+00 : f32
    %369 = vector.broadcast %cst_135 : f32 to vector<1x32xf32>
    %370 = arith.maximumf %362, %369 : vector<1x32xf32>
    %cst_136 = arith.constant 1.000000e-07 : f32
    %371 = vector.broadcast %cst_136 : f32 to vector<1x32xf32>
    %372 = arith.addf %370, %371 : vector<1x32xf32>
    %c2_i32_137 = arith.constant 2 : i32
    %373 = vector.broadcast %c2_i32_137 : i32 to vector<64x32xi32>
    %374 = arith.shrsi %292, %373 : vector<64x32xi32>
    %c1_i32_138 = arith.constant 1 : i32
    %375 = vector.broadcast %c1_i32_138 : i32 to vector<64x32xi32>
    %376 = arith.andi %374, %375 : vector<64x32xi32>
    %c1_i32_139 = arith.constant 1 : i32
    %377 = vector.broadcast %c1_i32_139 : i32 to vector<64x32xi32>
    %378 = arith.cmpi eq, %376, %377 : vector<64x32xi32>
    %379 = vector.shape_cast %368 : vector<1x32xf32> to vector<1x32xf32>
    %380 = vector.broadcast %379 : vector<1x32xf32> to vector<64x32xf32>
    %381 = vector.shape_cast %372 : vector<1x32xf32> to vector<1x32xf32>
    %382 = vector.broadcast %381 : vector<1x32xf32> to vector<64x32xf32>
    %383 = arith.select %378, %380, %382 : vector<64x32xi1>, vector<64x32xf32>
    %384 = arith.mulf %361, %383 : vector<64x32xf32>
    %385 = vector.extract_strided_slice %290 {offsets = [0, 128], sizes = [1, 32], strides = [1, 1]} : vector<2x192xf32> to vector<1x32xf32>
    %cst_140 = arith.constant 1.000000e+00 : f32
    %386 = vector.broadcast %cst_140 : f32 to vector<1x32xf32>
    %387 = arith.subf %386, %385 : vector<1x32xf32>
    %cst_141 = arith.constant 0.000000e+00 : f32
    %388 = vector.broadcast %cst_141 : f32 to vector<1x32xf32>
    %389 = arith.maximumf %387, %388 : vector<1x32xf32>
    %cst_142 = arith.constant 1.000000e-07 : f32
    %390 = vector.broadcast %cst_142 : f32 to vector<1x32xf32>
    %391 = arith.addf %389, %390 : vector<1x32xf32>
    %cst_143 = arith.constant 0.000000e+00 : f32
    %392 = vector.broadcast %cst_143 : f32 to vector<1x32xf32>
    %393 = arith.maximumf %385, %392 : vector<1x32xf32>
    %cst_144 = arith.constant 1.000000e-07 : f32
    %394 = vector.broadcast %cst_144 : f32 to vector<1x32xf32>
    %395 = arith.addf %393, %394 : vector<1x32xf32>
    %c1_i32_145 = arith.constant 1 : i32
    %396 = vector.broadcast %c1_i32_145 : i32 to vector<64x32xi32>
    %397 = arith.shrsi %292, %396 : vector<64x32xi32>
    %c1_i32_146 = arith.constant 1 : i32
    %398 = vector.broadcast %c1_i32_146 : i32 to vector<64x32xi32>
    %399 = arith.andi %397, %398 : vector<64x32xi32>
    %c1_i32_147 = arith.constant 1 : i32
    %400 = vector.broadcast %c1_i32_147 : i32 to vector<64x32xi32>
    %401 = arith.cmpi eq, %399, %400 : vector<64x32xi32>
    %402 = vector.shape_cast %391 : vector<1x32xf32> to vector<1x32xf32>
    %403 = vector.broadcast %402 : vector<1x32xf32> to vector<64x32xf32>
    %404 = vector.shape_cast %395 : vector<1x32xf32> to vector<1x32xf32>
    %405 = vector.broadcast %404 : vector<1x32xf32> to vector<64x32xf32>
    %406 = arith.select %401, %403, %405 : vector<64x32xi1>, vector<64x32xf32>
    %407 = arith.mulf %384, %406 : vector<64x32xf32>
    %408 = vector.extract_strided_slice %290 {offsets = [0, 160], sizes = [1, 32], strides = [1, 1]} : vector<2x192xf32> to vector<1x32xf32>
    %cst_148 = arith.constant 1.000000e+00 : f32
    %409 = vector.broadcast %cst_148 : f32 to vector<1x32xf32>
    %410 = arith.subf %409, %408 : vector<1x32xf32>
    %cst_149 = arith.constant 0.000000e+00 : f32
    %411 = vector.broadcast %cst_149 : f32 to vector<1x32xf32>
    %412 = arith.maximumf %410, %411 : vector<1x32xf32>
    %cst_150 = arith.constant 1.000000e-07 : f32
    %413 = vector.broadcast %cst_150 : f32 to vector<1x32xf32>
    %414 = arith.addf %412, %413 : vector<1x32xf32>
    %cst_151 = arith.constant 0.000000e+00 : f32
    %415 = vector.broadcast %cst_151 : f32 to vector<1x32xf32>
    %416 = arith.maximumf %408, %415 : vector<1x32xf32>
    %cst_152 = arith.constant 1.000000e-07 : f32
    %417 = vector.broadcast %cst_152 : f32 to vector<1x32xf32>
    %418 = arith.addf %416, %417 : vector<1x32xf32>
    %c0_i32_153 = arith.constant 0 : i32
    %419 = vector.broadcast %c0_i32_153 : i32 to vector<64x32xi32>
    %420 = arith.shrsi %292, %419 : vector<64x32xi32>
    %c1_i32_154 = arith.constant 1 : i32
    %421 = vector.broadcast %c1_i32_154 : i32 to vector<64x32xi32>
    %422 = arith.andi %420, %421 : vector<64x32xi32>
    %c1_i32_155 = arith.constant 1 : i32
    %423 = vector.broadcast %c1_i32_155 : i32 to vector<64x32xi32>
    %424 = arith.cmpi eq, %422, %423 : vector<64x32xi32>
    %425 = vector.shape_cast %414 : vector<1x32xf32> to vector<1x32xf32>
    %426 = vector.broadcast %425 : vector<1x32xf32> to vector<64x32xf32>
    %427 = vector.shape_cast %418 : vector<1x32xf32> to vector<1x32xf32>
    %428 = vector.broadcast %427 : vector<1x32xf32> to vector<64x32xf32>
    %429 = arith.select %424, %426, %428 : vector<64x32xi1>, vector<64x32xf32>
    %430 = arith.mulf %407, %429 : vector<64x32xf32>
    %431 = arith.mulf %430, %291 : vector<64x32xf32>
    %cst_156 = arith.constant dense<0.000000e+00> : vector<32xf32>
    %432 = vector.multi_reduction <add>, %431, %cst_156 [0] : vector<64x32xf32> to vector<32xf32>
    %433 = vector.shape_cast %432 : vector<32xf32> to vector<1x32xf32>
    %cst_157 = arith.constant 5.000000e-01 : f32
    %434 = vector.broadcast %cst_157 : f32 to vector<1x32xf32>
    %435 = arith.subf %433, %434 : vector<1x32xf32>
    %436 = vector.broadcast %293 : f32 to vector<1x32xf32>
    %437 = arith.mulf %435, %436 : vector<1x32xf32>
    %c0_158 = arith.constant 0 : index
    %c0_159 = arith.constant 0 : index
    %438 = vector.load %arg9[%c0_158, %c0_159] : memref<2x32xf32, #tpu.memory_space<vmem>>, vector<1x32xf32>
    tpu.vector_store %arg9[%c0_158, %c0_159], %437 {strides = array<i32>} : memref<2x32xf32, #tpu.memory_space<vmem>>, vector<1x32xf32>,
    %439 = vector.extract_strided_slice %290 {offsets = [1, 0], sizes = [1, 32], strides = [1, 1]} : vector<2x192xf32> to vector<1x32xf32>
    %cst_160 = arith.constant 1.000000e+00 : f32
    %440 = vector.broadcast %cst_160 : f32 to vector<1x32xf32>
    %441 = arith.subf %440, %439 : vector<1x32xf32>
    %cst_161 = arith.constant 0.000000e+00 : f32
    %442 = vector.broadcast %cst_161 : f32 to vector<1x32xf32>
    %443 = arith.maximumf %441, %442 : vector<1x32xf32>
    %cst_162 = arith.constant 1.000000e-07 : f32
    %444 = vector.broadcast %cst_162 : f32 to vector<1x32xf32>
    %445 = arith.addf %443, %444 : vector<1x32xf32>
    %cst_163 = arith.constant 0.000000e+00 : f32
    %446 = vector.broadcast %cst_163 : f32 to vector<1x32xf32>
    %447 = arith.maximumf %439, %446 : vector<1x32xf32>
    %cst_164 = arith.constant 1.000000e-07 : f32
    %448 = vector.broadcast %cst_164 : f32 to vector<1x32xf32>
    %449 = arith.addf %447, %448 : vector<1x32xf32>
    %c5_i32_165 = arith.constant 5 : i32
    %450 = vector.broadcast %c5_i32_165 : i32 to vector<64x32xi32>
    %451 = arith.shrsi %292, %450 : vector<64x32xi32>
    %c1_i32_166 = arith.constant 1 : i32
    %452 = vector.broadcast %c1_i32_166 : i32 to vector<64x32xi32>
    %453 = arith.andi %451, %452 : vector<64x32xi32>
    %c1_i32_167 = arith.constant 1 : i32
    %454 = vector.broadcast %c1_i32_167 : i32 to vector<64x32xi32>
    %455 = arith.cmpi eq, %453, %454 : vector<64x32xi32>
    %456 = vector.shape_cast %445 : vector<1x32xf32> to vector<1x32xf32>
    %457 = vector.broadcast %456 : vector<1x32xf32> to vector<64x32xf32>
    %458 = vector.shape_cast %449 : vector<1x32xf32> to vector<1x32xf32>
    %459 = vector.broadcast %458 : vector<1x32xf32> to vector<64x32xf32>
    %460 = arith.select %455, %457, %459 : vector<64x32xi1>, vector<64x32xf32>
    %461 = vector.extract_strided_slice %290 {offsets = [1, 32], sizes = [1, 32], strides = [1, 1]} : vector<2x192xf32> to vector<1x32xf32>
    %cst_168 = arith.constant 1.000000e+00 : f32
    %462 = vector.broadcast %cst_168 : f32 to vector<1x32xf32>
    %463 = arith.subf %462, %461 : vector<1x32xf32>
    %cst_169 = arith.constant 0.000000e+00 : f32
    %464 = vector.broadcast %cst_169 : f32 to vector<1x32xf32>
    %465 = arith.maximumf %463, %464 : vector<1x32xf32>
    %cst_170 = arith.constant 1.000000e-07 : f32
    %466 = vector.broadcast %cst_170 : f32 to vector<1x32xf32>
    %467 = arith.addf %465, %466 : vector<1x32xf32>
    %cst_171 = arith.constant 0.000000e+00 : f32
    %468 = vector.broadcast %cst_171 : f32 to vector<1x32xf32>
    %469 = arith.maximumf %461, %468 : vector<1x32xf32>
    %cst_172 = arith.constant 1.000000e-07 : f32
    %470 = vector.broadcast %cst_172 : f32 to vector<1x32xf32>
    %471 = arith.addf %469, %470 : vector<1x32xf32>
    %c4_i32_173 = arith.constant 4 : i32
    %472 = vector.broadcast %c4_i32_173 : i32 to vector<64x32xi32>
    %473 = arith.shrsi %292, %472 : vector<64x32xi32>
    %c1_i32_174 = arith.constant 1 : i32
    %474 = vector.broadcast %c1_i32_174 : i32 to vector<64x32xi32>
    %475 = arith.andi %473, %474 : vector<64x32xi32>
    %c1_i32_175 = arith.constant 1 : i32
    %476 = vector.broadcast %c1_i32_175 : i32 to vector<64x32xi32>
    %477 = arith.cmpi eq, %475, %476 : vector<64x32xi32>
    %478 = vector.shape_cast %467 : vector<1x32xf32> to vector<1x32xf32>
    %479 = vector.broadcast %478 : vector<1x32xf32> to vector<64x32xf32>
    %480 = vector.shape_cast %471 : vector<1x32xf32> to vector<1x32xf32>
    %481 = vector.broadcast %480 : vector<1x32xf32> to vector<64x32xf32>
    %482 = arith.select %477, %479, %481 : vector<64x32xi1>, vector<64x32xf32>
    %483 = arith.mulf %460, %482 : vector<64x32xf32>
    %484 = vector.extract_strided_slice %290 {offsets = [1, 64], sizes = [1, 32], strides = [1, 1]} : vector<2x192xf32> to vector<1x32xf32>
    %cst_176 = arith.constant 1.000000e+00 : f32
    %485 = vector.broadcast %cst_176 : f32 to vector<1x32xf32>
    %486 = arith.subf %485, %484 : vector<1x32xf32>
    %cst_177 = arith.constant 0.000000e+00 : f32
    %487 = vector.broadcast %cst_177 : f32 to vector<1x32xf32>
    %488 = arith.maximumf %486, %487 : vector<1x32xf32>
    %cst_178 = arith.constant 1.000000e-07 : f32
    %489 = vector.broadcast %cst_178 : f32 to vector<1x32xf32>
    %490 = arith.addf %488, %489 : vector<1x32xf32>
    %cst_179 = arith.constant 0.000000e+00 : f32
    %491 = vector.broadcast %cst_179 : f32 to vector<1x32xf32>
    %492 = arith.maximumf %484, %491 : vector<1x32xf32>
    %cst_180 = arith.constant 1.000000e-07 : f32
    %493 = vector.broadcast %cst_180 : f32 to vector<1x32xf32>
    %494 = arith.addf %492, %493 : vector<1x32xf32>
    %c3_i32_181 = arith.constant 3 : i32
    %495 = vector.broadcast %c3_i32_181 : i32 to vector<64x32xi32>
    %496 = arith.shrsi %292, %495 : vector<64x32xi32>
    %c1_i32_182 = arith.constant 1 : i32
    %497 = vector.broadcast %c1_i32_182 : i32 to vector<64x32xi32>
    %498 = arith.andi %496, %497 : vector<64x32xi32>
    %c1_i32_183 = arith.constant 1 : i32
    %499 = vector.broadcast %c1_i32_183 : i32 to vector<64x32xi32>
    %500 = arith.cmpi eq, %498, %499 : vector<64x32xi32>
    %501 = vector.shape_cast %490 : vector<1x32xf32> to vector<1x32xf32>
    %502 = vector.broadcast %501 : vector<1x32xf32> to vector<64x32xf32>
    %503 = vector.shape_cast %494 : vector<1x32xf32> to vector<1x32xf32>
    %504 = vector.broadcast %503 : vector<1x32xf32> to vector<64x32xf32>
    %505 = arith.select %500, %502, %504 : vector<64x32xi1>, vector<64x32xf32>
    %506 = arith.mulf %483, %505 : vector<64x32xf32>
    %507 = vector.extract_strided_slice %290 {offsets = [1, 96], sizes = [1, 32], strides = [1, 1]} : vector<2x192xf32> to vector<1x32xf32>
    %cst_184 = arith.constant 1.000000e+00 : f32
    %508 = vector.broadcast %cst_184 : f32 to vector<1x32xf32>
    %509 = arith.subf %508, %507 : vector<1x32xf32>
    %cst_185 = arith.constant 0.000000e+00 : f32
    %510 = vector.broadcast %cst_185 : f32 to vector<1x32xf32>
    %511 = arith.maximumf %509, %510 : vector<1x32xf32>
    %cst_186 = arith.constant 1.000000e-07 : f32
    %512 = vector.broadcast %cst_186 : f32 to vector<1x32xf32>
    %513 = arith.addf %511, %512 : vector<1x32xf32>
    %cst_187 = arith.constant 0.000000e+00 : f32
    %514 = vector.broadcast %cst_187 : f32 to vector<1x32xf32>
    %515 = arith.maximumf %507, %514 : vector<1x32xf32>
    %cst_188 = arith.constant 1.000000e-07 : f32
    %516 = vector.broadcast %cst_188 : f32 to vector<1x32xf32>
    %517 = arith.addf %515, %516 : vector<1x32xf32>
    %c2_i32_189 = arith.constant 2 : i32
    %518 = vector.broadcast %c2_i32_189 : i32 to vector<64x32xi32>
    %519 = arith.shrsi %292, %518 : vector<64x32xi32>
    %c1_i32_190 = arith.constant 1 : i32
    %520 = vector.broadcast %c1_i32_190 : i32 to vector<64x32xi32>
    %521 = arith.andi %519, %520 : vector<64x32xi32>
    %c1_i32_191 = arith.constant 1 : i32
    %522 = vector.broadcast %c1_i32_191 : i32 to vector<64x32xi32>
    %523 = arith.cmpi eq, %521, %522 : vector<64x32xi32>
    %524 = vector.shape_cast %513 : vector<1x32xf32> to vector<1x32xf32>
    %525 = vector.broadcast %524 : vector<1x32xf32> to vector<64x32xf32>
    %526 = vector.shape_cast %517 : vector<1x32xf32> to vector<1x32xf32>
    %527 = vector.broadcast %526 : vector<1x32xf32> to vector<64x32xf32>
    %528 = arith.select %523, %525, %527 : vector<64x32xi1>, vector<64x32xf32>
    %529 = arith.mulf %506, %528 : vector<64x32xf32>
    %530 = vector.extract_strided_slice %290 {offsets = [1, 128], sizes = [1, 32], strides = [1, 1]} : vector<2x192xf32> to vector<1x32xf32>
    %cst_192 = arith.constant 1.000000e+00 : f32
    %531 = vector.broadcast %cst_192 : f32 to vector<1x32xf32>
    %532 = arith.subf %531, %530 : vector<1x32xf32>
    %cst_193 = arith.constant 0.000000e+00 : f32
    %533 = vector.broadcast %cst_193 : f32 to vector<1x32xf32>
    %534 = arith.maximumf %532, %533 : vector<1x32xf32>
    %cst_194 = arith.constant 1.000000e-07 : f32
    %535 = vector.broadcast %cst_194 : f32 to vector<1x32xf32>
    %536 = arith.addf %534, %535 : vector<1x32xf32>
    %cst_195 = arith.constant 0.000000e+00 : f32
    %537 = vector.broadcast %cst_195 : f32 to vector<1x32xf32>
    %538 = arith.maximumf %530, %537 : vector<1x32xf32>
    %cst_196 = arith.constant 1.000000e-07 : f32
    %539 = vector.broadcast %cst_196 : f32 to vector<1x32xf32>
    %540 = arith.addf %538, %539 : vector<1x32xf32>
    %c1_i32_197 = arith.constant 1 : i32
    %541 = vector.broadcast %c1_i32_197 : i32 to vector<64x32xi32>
    %542 = arith.shrsi %292, %541 : vector<64x32xi32>
    %c1_i32_198 = arith.constant 1 : i32
    %543 = vector.broadcast %c1_i32_198 : i32 to vector<64x32xi32>
    %544 = arith.andi %542, %543 : vector<64x32xi32>
    %c1_i32_199 = arith.constant 1 : i32
    %545 = vector.broadcast %c1_i32_199 : i32 to vector<64x32xi32>
    %546 = arith.cmpi eq, %544, %545 : vector<64x32xi32>
    %547 = vector.shape_cast %536 : vector<1x32xf32> to vector<1x32xf32>
    %548 = vector.broadcast %547 : vector<1x32xf32> to vector<64x32xf32>
    %549 = vector.shape_cast %540 : vector<1x32xf32> to vector<1x32xf32>
    %550 = vector.broadcast %549 : vector<1x32xf32> to vector<64x32xf32>
    %551 = arith.select %546, %548, %550 : vector<64x32xi1>, vector<64x32xf32>
    %552 = arith.mulf %529, %551 : vector<64x32xf32>
    %553 = vector.extract_strided_slice %290 {offsets = [1, 160], sizes = [1, 32], strides = [1, 1]} : vector<2x192xf32> to vector<1x32xf32>
    %cst_200 = arith.constant 1.000000e+00 : f32
    %554 = vector.broadcast %cst_200 : f32 to vector<1x32xf32>
    %555 = arith.subf %554, %553 : vector<1x32xf32>
    %cst_201 = arith.constant 0.000000e+00 : f32
    %556 = vector.broadcast %cst_201 : f32 to vector<1x32xf32>
    %557 = arith.maximumf %555, %556 : vector<1x32xf32>
    %cst_202 = arith.constant 1.000000e-07 : f32
    %558 = vector.broadcast %cst_202 : f32 to vector<1x32xf32>
    %559 = arith.addf %557, %558 : vector<1x32xf32>
    %cst_203 = arith.constant 0.000000e+00 : f32
    %560 = vector.broadcast %cst_203 : f32 to vector<1x32xf32>
    %561 = arith.maximumf %553, %560 : vector<1x32xf32>
    %cst_204 = arith.constant 1.000000e-07 : f32
    %562 = vector.broadcast %cst_204 : f32 to vector<1x32xf32>
    %563 = arith.addf %561, %562 : vector<1x32xf32>
    %c0_i32_205 = arith.constant 0 : i32
    %564 = vector.broadcast %c0_i32_205 : i32 to vector<64x32xi32>
    %565 = arith.shrsi %292, %564 : vector<64x32xi32>
    %c1_i32_206 = arith.constant 1 : i32
    %566 = vector.broadcast %c1_i32_206 : i32 to vector<64x32xi32>
    %567 = arith.andi %565, %566 : vector<64x32xi32>
    %c1_i32_207 = arith.constant 1 : i32
    %568 = vector.broadcast %c1_i32_207 : i32 to vector<64x32xi32>
    %569 = arith.cmpi eq, %567, %568 : vector<64x32xi32>
    %570 = vector.shape_cast %559 : vector<1x32xf32> to vector<1x32xf32>
    %571 = vector.broadcast %570 : vector<1x32xf32> to vector<64x32xf32>
    %572 = vector.shape_cast %563 : vector<1x32xf32> to vector<1x32xf32>
    %573 = vector.broadcast %572 : vector<1x32xf32> to vector<64x32xf32>
    %574 = arith.select %569, %571, %573 : vector<64x32xi1>, vector<64x32xf32>
    %575 = arith.mulf %552, %574 : vector<64x32xf32>
    %576 = arith.mulf %575, %291 : vector<64x32xf32>
    %cst_208 = arith.constant dense<0.000000e+00> : vector<32xf32>
    %577 = vector.multi_reduction <add>, %576, %cst_208 [0] : vector<64x32xf32> to vector<32xf32>
    %578 = vector.shape_cast %577 : vector<32xf32> to vector<1x32xf32>
    %cst_209 = arith.constant 5.000000e-01 : f32
    %579 = vector.broadcast %cst_209 : f32 to vector<1x32xf32>
    %580 = arith.subf %578, %579 : vector<1x32xf32>
    %581 = vector.broadcast %293 : f32 to vector<1x32xf32>
    %582 = arith.mulf %580, %581 : vector<1x32xf32>
    %c1_210 = arith.constant 1 : index
    %c0_211 = arith.constant 0 : index
    %583 = vector.load %arg9[%c1_210, %c0_211] : memref<2x32xf32, #tpu.memory_space<vmem>>, vector<1x32xf32>
    tpu.vector_store %arg9[%c1_210, %c0_211], %582 {strides = array<i32>} : memref<2x32xf32, #tpu.memory_space<vmem>>, vector<1x32xf32>,
    return
  }
  func.func @transform_0(%arg0: i32) -> (i32, i32) {
    %c0_i32 = arith.constant 0 : i32
    %c0_i32_0 = arith.constant 0 : i32
    %c0_i32_1 = arith.constant 0 : i32
    return %c0_i32, %c0_i32_0 : i32, i32
  }
  func.func @transform_1(%arg0: i32) -> (i32, i32) {
    %c0_i32 = arith.constant 0 : i32
    %c0_i32_0 = arith.constant 0 : i32
    %c0_i32_1 = arith.constant 0 : i32
    return %c0_i32, %c0_i32_0 : i32, i32
  }
  func.func @transform_2(%arg0: i32) -> (i32, i32) {
    %c0_i32 = arith.constant 0 : i32
    %c0_i32_0 = arith.constant 0 : i32
    %c0_i32_1 = arith.constant 0 : i32
    return %c0_i32, %c0_i32_0 : i32, i32
  }
  func.func @transform_3(%arg0: i32) -> (i32, i32) {
    %c0_i32 = arith.constant 0 : i32
    %c0_i32_0 = arith.constant 0 : i32
    %c0_i32_1 = arith.constant 0 : i32
    return %c0_i32, %c0_i32_0 : i32, i32
  }
  func.func @transform_4(%arg0: i32) -> (i32, i32) {
    %c0_i32 = arith.constant 0 : i32
    %c0_i32_0 = arith.constant 0 : i32
    %c0_i32_1 = arith.constant 0 : i32
    return %c0_i32, %c0_i32_0 : i32, i32
  }
  func.func @transform_5(%arg0: i32) -> (i32, i32) {
    %c0_i32 = arith.constant 0 : i32
    %c0_i32_0 = arith.constant 0 : i32
    %c0_i32_1 = arith.constant 0 : i32
    return %c0_i32, %c0_i32_0 : i32, i32
  }
  func.func @transform_6(%arg0: i32) -> (i32, i32) {
    %c0_i32 = arith.constant 0 : i32
    %c0_i32_0 = arith.constant 0 : i32
    %c0_i32_1 = arith.constant 0 : i32
    return %c0_i32, %c0_i32_0 : i32, i32
  }
  func.func @transform_7(%arg0: i32) -> i32 {
    %c0_i32 = arith.constant 0 : i32
    %c0_i32_0 = arith.constant 0 : i32
    return %c0_i32 : i32
  }
  func.func @transform_8(%arg0: i32) -> (i32, i32) {
    %c0_i32 = arith.constant 0 : i32
    %c0_i32_0 = arith.constant 0 : i32
    %c0_i32_1 = arith.constant 0 : i32
    return %c0_i32, %c0_i32_0 : i32, i32
  }
}

</mosaic_0001>

<llo_original>
// kernel: tpu_custom_call.1
$region0: #{tpu_custom_call.1}
  #allocation0 [shape = 'u32[]', space=smem, size = 0x4, offset = 0x4, fixed_abs, tag = 'smem constant byte address 0x4 - core index']
  #allocation1 [shape = 'u32[144,128]{1,0:T(1,128)}', space=vmem, size = 0x12000, scoped, tag = 'internal scratch']
  #allocation2 [shape = 'f32[2,128]{1,0:T(2,128)}', space=vmem, size = 0x400, scoped, tag = 'scratch operand']
  #allocation3 [shape = 'f32[1]{0:T(128)S(6)}', space=smem, size = 0x200, scoped, tag = 'scoped memory for tpu_custom_call.1']
  %s0 = inlined_call_operand.hbm [shape: bf16[2,1024], index: 0, kind: input, shape index: {}]
  %s1 = inlined_call_operand.hbm [shape: bf16[1024,768], index: 1, kind: input, shape index: {}]
  %s2 = inlined_call_operand.vmem [shape: bf16[128,192], index: 2, kind: input, shape index: {}]
  %s3 = inlined_call_operand.hbm [shape: f32[64,128], index: 3, kind: input, shape index: {}]
  %s4 = inlined_call_operand.vmem [shape: f32[64,32], index: 4, kind: input, shape index: {}]
  %s5 = inlined_call_operand.hbm [shape: f32[2,128], index: 5, kind: input, shape index: {}]
  %s6 = inlined_call_operand.hbm [shape: f32[2,32], index: 6, kind: input, shape index: {}]
  %s7 = inlined_call_operand.<no memory space> [shape: f32[1], index: 7, kind: input, shape index: {}]
  %s8 = inlined_call_operand.hbm [shape: f32[2,32], index: 8, kind: output, shape index: {}]
  %s9 = sld [smem:[#allocation0]]
  $region62: #{tpu_custom_call.1} parent=0
    _
  %s11 = ssub.s32 1, %s9
  %s12 = scalar_select 0, %s11, %s9
  %13 = sst [smem:[#allocation3]] %s7
  $region1: #{tpu_custom_call.1} parent=0
    #allocation4 [shape = 'u8[4096]{0}', space=vmem, size = 0x1000, scoped, tag = 'input window, operand 0, single buffered']
    #allocation5 [shape = 's32[1]{0}', space=sflag, size = 0x4, scoped, tag = 'scoped memory for tpu_custom_call.1']
    #allocation6 [shape = 's32[1]{0}', space=sflag, size = 0x4, scoped, tag = 'scoped memory for tpu_custom_call.1']
    #allocation7 [shape = 'u8[1572864]{0}', space=vmem, size = 0x180000, scoped, tag = 'input window, operand 1, single buffered']
    #allocation8 [shape = 's32[1]{0}', space=sflag, size = 0x4, scoped, tag = 'scoped memory for tpu_custom_call.1']
    #allocation9 [shape = 'u8[32768]{0}', space=vmem, size = 0x8000, scoped, tag = 'input window, operand 3, single buffered']
    #allocation10 [shape = 'u8[1024]{0}', space=vmem, size = 0x400, scoped, tag = 'input window, operand 5, single buffered']
    #allocation11 [shape = 's32[1]{0}', space=sflag, size = 0x4, scoped, tag = 'scoped memory for tpu_custom_call.1']
    #allocation12 [shape = 'u8[1024]{0}', space=vmem, size = 0x400, scoped, tag = 'input window, operand 6, single buffered']
    #allocation13 [shape = 'u8[1024]{0}', space=vmem, size = 0x400, scoped, tag = 'output window, operand 0, single buffered']
    %14 = vsyncpa [#allocation5], 0
    %15 = vsyncpa [#allocation8], 0
    %16 = vsyncpa [#allocation11], 0
    %17 = vsyncpa [#allocation6], 0
    // Predicated region
    $region2: #{tpu_custom_call.1} parent=1 // pred_check
      _
    $region3: #{tpu_custom_call.1} parent=1 // pred_check_branch
      %19 = sbr.rel (0) target = $region5
    $region4: #{tpu_custom_call.1} parent=1 // pred_region
      %s21 = ssub.s32 128, 128
      %22 = vsyncadd [#allocation5], %s21
      %s24 = sshll.u32 [#allocation4], 4
      %s25 = int_to_ptr.vmem [resolvable:$true] %s24
      %27 = dma.hbm_to_vmem [thread:$0]  %s0, 128, %s25, [#allocation5]
    $region5: #{tpu_custom_call.1} parent=1 // pred_fallthru
      _
    // Predicated region
    $region6: #{tpu_custom_call.1} parent=1 // pred_check
      _
    $region7: #{tpu_custom_call.1} parent=1 // pred_check_branch
      %29 = sbr.rel (0) target = $region9
    $region8: #{tpu_custom_call.1} parent=1 // pred_region
      %s31 = ssub.s32 49152, 49152
      %32 = vsyncadd [#allocation8], %s31
      %s33 = sshll.u32 [#allocation7], 4
      %s34 = int_to_ptr.vmem [resolvable:$true] %s33
      %39 = dma.hbm_to_vmem [thread:$0]  %s1, 49152, %s34, [#allocation8], 384, 384, 24
    $region9: #{tpu_custom_call.1} parent=1 // pred_fallthru
      _
    // Predicated region
    $region10: #{tpu_custom_call.1} parent=1 // pred_check
      _
    $region11: #{tpu_custom_call.1} parent=1 // pred_check_branch
      %41 = sbr.rel (0) target = $region13
    $region12: #{tpu_custom_call.1} parent=1 // pred_region
      _
    $region13: #{tpu_custom_call.1} parent=1 // pred_fallthru
      _
    // Predicated region
    $region14: #{tpu_custom_call.1} parent=1 // pred_check
      _
    $region15: #{tpu_custom_call.1} parent=1 // pred_check_branch
      %43 = sbr.rel (0) target = $region17
    $region16: #{tpu_custom_call.1} parent=1 // pred_region
      %s45 = ssub.s32 1024, 1024
      %46 = vsyncadd [#allocation8], %s45
      %s47 = sshll.u32 [#allocation9], 4
      %s48 = int_to_ptr.vmem [resolvable:$true] %s47
      %53 = dma.hbm_to_vmem [thread:$0]  %s3, 1024, %s48, [#allocation8], 128, 128, 8
    $region17: #{tpu_custom_call.1} parent=1 // pred_fallthru
      _
    // Predicated region
    $region18: #{tpu_custom_call.1} parent=1 // pred_check
      _
    $region19: #{tpu_custom_call.1} parent=1 // pred_check_branch
      %55 = sbr.rel (0) target = $region21
    $region20: #{tpu_custom_call.1} parent=1 // pred_region
      _
    $region21: #{tpu_custom_call.1} parent=1 // pred_fallthru
      _
    // Predicated region
    $region22: #{tpu_custom_call.1} parent=1 // pred_check
      _
    $region23: #{tpu_custom_call.1} parent=1 // pred_check_branch
      %57 = sbr.rel (0) target = $region25
    $region24: #{tpu_custom_call.1} parent=1 // pred_region
      %s59 = ssub.s32 32, 32
      %60 = vsyncadd [#allocation11], %s59
      %s62 = sshll.u32 [#allocation10], 4
      %s63 = int_to_ptr.vmem [resolvable:$true] %s62
      %65 = dma.hbm_to_vmem [thread:$0]  %s5, 32, %s63, [#allocation11]
    $region25: #{tpu_custom_call.1} parent=1 // pred_fallthru
      _
    // Predicated region
    $region26: #{tpu_custom_call.1} parent=1 // pred_check
      _
    $region27: #{tpu_custom_call.1} parent=1 // pred_check_branch
      %67 = sbr.rel (0) target = $region29
    $region28: #{tpu_custom_call.1} parent=1 // pred_region
      %s69 = ssub.s32 32, 32
      %70 = vsyncadd [#allocation11], %s69
      %s72 = sshll.u32 [#allocation12], 4
      %s73 = int_to_ptr.vmem [resolvable:$true] %s72
      %75 = dma.hbm_to_vmem [thread:$0]  %s6, 32, %s73, [#allocation11]
    $region29: #{tpu_custom_call.1} parent=1 // pred_fallthru
      _
    // Predicated region
    $region30: #{tpu_custom_call.1} parent=1 // pred_check
      _
    $region31: #{tpu_custom_call.1} parent=1 // pred_check_branch
      %77 = sbr.rel (0) target = $region33
    $region32: #{tpu_custom_call.1} parent=1 // pred_region
      _
    $region33: #{tpu_custom_call.1} parent=1 // pred_fallthru
      _
    // Predicated region
    $region34: #{tpu_custom_call.1} parent=1 // pred_check
      _
    $region35: #{tpu_custom_call.1} parent=1 // pred_check_branch
      %79 = sbr.rel (0) target = $region37
    $region36: #{tpu_custom_call.1} parent=1 // pred_region
      %80 = dma.done [#allocation5], 128
    $region37: #{tpu_custom_call.1} parent=1 // pred_fallthru
      _
    // Predicated region
    $region38: #{tpu_custom_call.1} parent=1 // pred_check
      _
    $region39: #{tpu_custom_call.1} parent=1 // pred_check_branch
      %82 = sbr.rel (0) target = $region41
    $region40: #{tpu_custom_call.1} parent=1 // pred_region
      %83 = dma.done [#allocation8], 49152
    $region41: #{tpu_custom_call.1} parent=1 // pred_fallthru
      _
    // Predicated region
    $region42: #{tpu_custom_call.1} parent=1 // pred_check
      _
    $region43: #{tpu_custom_call.1} parent=1 // pred_check_branch
      %85 = sbr.rel (0) target = $region45
    $region44: #{tpu_custom_call.1} parent=1 // pred_region
      %86 = dma.done [#allocation8], 1024
    $region45: #{tpu_custom_call.1} parent=1 // pred_fallthru
      _
    // Predicated region
    $region46: #{tpu_custom_call.1} parent=1 // pred_check
      _
    $region47: #{tpu_custom_call.1} parent=1 // pred_check_branch
      %88 = sbr.rel (0) target = $region49
    $region48: #{tpu_custom_call.1} parent=1 // pred_region
      %89 = dma.done [#allocation11], 32
    $region49: #{tpu_custom_call.1} parent=1 // pred_fallthru
      _
    // Predicated region
    $region50: #{tpu_custom_call.1} parent=1 // pred_check
      _
    $region51: #{tpu_custom_call.1} parent=1 // pred_check_branch
      %91 = sbr.rel (0) target = $region53
    $region52: #{tpu_custom_call.1} parent=1 // pred_region
      %92 = dma.done [#allocation11], 32
    $region53: #{tpu_custom_call.1} parent=1 // pred_fallthru
      _
    %v94 = vld [vmem:[#allocation4] sm:$0xff]
    %v95 = vld [vmem:[#allocation7] sm:$0xff]
    %v96 = vld [vmem:[#allocation7 + $0x8] sm:$0xff]
    %v97 = vld [vmem:[#allocation7 + $0x10] sm:$0xff]
    %v98 = vld [vmem:[#allocation7 + $0x18] sm:$0xff]
    %v99 = vld [vmem:[#allocation7 + $0x20] sm:$0xff]
    %v100 = vld [vmem:[#allocation7 + $0x28] sm:$0xff]
    %v101 = vld [vmem:[#allocation7 + $0x30] sm:$0xff]
    %v102 = vld [vmem:[#allocation7 + $0x38] sm:$0xff]
    %v103 = vld [vmem:[#allocation7 + $0x40] sm:$0xff]
    %v104 = vld [vmem:[#allocation7 + $0x48] sm:$0xff]
    %v105 = vld [vmem:[#allocation7 + $0x50] sm:$0xff]
    %v106 = vld [vmem:[#allocation7 + $0x58] sm:$0xff]
    %v107 = vld [vmem:[#allocation7 + $0x60] sm:$0xff]
    %v108 = vld [vmem:[#allocation7 + $0x68] sm:$0xff]
    %v109 = vld [vmem:[#allocation7 + $0x70] sm:$0xff]
    %v110 = vld [vmem:[#allocation7 + $0x78] sm:$0xff]
    %v111 = vld [vmem:[#allocation7 + $0x80] sm:$0xff]
    %v112 = vld [vmem:[#allocation7 + $0x88] sm:$0xff]
    %v113 = vld [vmem:[#allocation7 + $0x90] sm:$0xff]
    %v114 = vld [vmem:[#allocation7 + $0x98] sm:$0xff]
    %v115 = vld [vmem:[#allocation7 + $0xa0] sm:$0xff]
    %v116 = vld [vmem:[#allocation7 + $0xa8] sm:$0xff]
    %v117 = vld [vmem:[#allocation7 + $0xb0] sm:$0xff]
    %v118 = vld [vmem:[#allocation7 + $0xb8] sm:$0xff]
    %v119 = vld [vmem:[#allocation7 + $0xc0] sm:$0xff]
    %v120 = vld [vmem:[#allocation7 + $0xc8] sm:$0xff]
    %v121 = vld [vmem:[#allocation7 + $0xd0] sm:$0xff]
    %v122 = vld [vmem:[#allocation7 + $0xd8] sm:$0xff]
    %v123 = vld [vmem:[#allocation7 + $0xe0] sm:$0xff]
    %v124 = vld [vmem:[#allocation7 + $0xe8] sm:$0xff]
    %v125 = vld [vmem:[#allocation7 + $0xf0] sm:$0xff]
    %v126 = vld [vmem:[#allocation7 + $0xf8] sm:$0xff]
    %v127 = vld [vmem:[#allocation7 + $0x100] sm:$0xff]
    %v128 = vld [vmem:[#allocation7 + $0x108] sm:$0xff]
    %v129 = vld [vmem:[#allocation7 + $0x110] sm:$0xff]
    %v130 = vld [vmem:[#allocation7 + $0x118] sm:$0xff]
    %v131 = vld [vmem:[#allocation7 + $0x120] sm:$0xff]
    %v132 = vld [vmem:[#allocation7 + $0x128] sm:$0xff]
    %v133 = vld [vmem:[#allocation7 + $0x130] sm:$0xff]
    %v134 = vld [vmem:[#allocation7 + $0x138] sm:$0xff]
    %v135 = vld [vmem:[#allocation7 + $0x140] sm:$0xff]
    %v136 = vld [vmem:[#allocation7 + $0x148] sm:$0xff]
    %v137 = vld [vmem:[#allocation7 + $0x150] sm:$0xff]
    %v138 = vld [vmem:[#allocation7 + $0x158] sm:$0xff]
    %v139 = vld [vmem:[#allocation7 + $0x160] sm:$0xff]
    %v140 = vld [vmem:[#allocation7 + $0x168] sm:$0xff]
    %v141 = vld [vmem:[#allocation7 + $0x170] sm:$0xff]
    %v142 = vld [vmem:[#allocation7 + $0x178] sm:$0xff]
    %v143 = vld [vmem:[#allocation7 + $0x180] sm:$0xff]
    %v144 = vld [vmem:[#allocation7 + $0x188] sm:$0xff]
    %v145 = vld [vmem:[#allocation7 + $0x190] sm:$0xff]
    %v146 = vld [vmem:[#allocation7 + $0x198] sm:$0xff]
    %v147 = vld [vmem:[#allocation7 + $0x1a0] sm:$0xff]
    %v148 = vld [vmem:[#allocation7 + $0x1a8] sm:$0xff]
    %v149 = vld [vmem:[#allocation7 + $0x1b0] sm:$0xff]
    %v150 = vld [vmem:[#allocation7 + $0x1b8] sm:$0xff]
    %v151 = vld [vmem:[#allocation7 + $0x1c0] sm:$0xff]
    %v152 = vld [vmem:[#allocation7 + $0x1c8] sm:$0xff]
    %v153 = vld [vmem:[#allocation7 + $0x1d0] sm:$0xff]
    %v154 = vld [vmem:[#allocation7 + $0x1d8] sm:$0xff]
    %v155 = vld [vmem:[#allocation7 + $0x1e0] sm:$0xff]
    %v156 = vld [vmem:[#allocation7 + $0x1e8] sm:$0xff]
    %v157 = vld [vmem:[#allocation7 + $0x1f0] sm:$0xff]
    %v158 = vld [vmem:[#allocation7 + $0x1f8] sm:$0xff]
    %v159 = vld [vmem:[#allocation7 + $0x200] sm:$0xff]
    %v160 = vld [vmem:[#allocation7 + $0x208] sm:$0xff]
    %v161 = vld [vmem:[#allocation7 + $0x210] sm:$0xff]
    %v162 = vld [vmem:[#allocation7 + $0x218] sm:$0xff]
    %v163 = vld [vmem:[#allocation7 + $0x220] sm:$0xff]
    %v164 = vld [vmem:[#allocation7 + $0x228] sm:$0xff]
    %v165 = vld [vmem:[#allocation7 + $0x230] sm:$0xff]
    %v166 = vld [vmem:[#allocation7 + $0x238] sm:$0xff]
    %v167 = vld [vmem:[#allocation7 + $0x240] sm:$0xff]
    %v168 = vld [vmem:[#allocation7 + $0x248] sm:$0xff]
    %v169 = vld [vmem:[#allocation7 + $0x250] sm:$0xff]
    %v170 = vld [vmem:[#allocation7 + $0x258] sm:$0xff]
    %v171 = vld [vmem:[#allocation7 + $0x260] sm:$0xff]
    %v172 = vld [vmem:[#allocation7 + $0x268] sm:$0xff]
    %v173 = vld [vmem:[#allocation7 + $0x270] sm:$0xff]
    %v174 = vld [vmem:[#allocation7 + $0x278] sm:$0xff]
    %v175 = vld [vmem:[#allocation7 + $0x280] sm:$0xff]
    %v176 = vld [vmem:[#allocation7 + $0x288] sm:$0xff]
    %v177 = vld [vmem:[#allocation7 + $0x290] sm:$0xff]
    %v178 = vld [vmem:[#allocation7 + $0x298] sm:$0xff]
    %v179 = vld [vmem:[#allocation7 + $0x2a0] sm:$0xff]
    %v180 = vld [vmem:[#allocation7 + $0x2a8] sm:$0xff]
    %v181 = vld [vmem:[#allocation7 + $0x2b0] sm:$0xff]
    %v182 = vld [vmem:[#allocation7 + $0x2b8] sm:$0xff]
    %v183 = vld [vmem:[#allocation7 + $0x2c0] sm:$0xff]
    %v184 = vld [vmem:[#allocation7 + $0x2c8] sm:$0xff]
    %v185 = vld [vmem:[#allocation7 + $0x2d0] sm:$0xff]
    %v186 = vld [vmem:[#allocation7 + $0x2d8] sm:$0xff]
    %v187 = vld [vmem:[#allocation7 + $0x2e0] sm:$0xff]
    %v188 = vld [vmem:[#allocation7 + $0x2e8] sm:$0xff]
    %v189 = vld [vmem:[#allocation7 + $0x2f0] sm:$0xff]
    %v190 = vld [vmem:[#allocation7 + $0x2f8] sm:$0xff]
    %v191 = vld [vmem:[#allocation7 + $0x300] sm:$0xff]
    %v192 = vld [vmem:[#allocation7 + $0x308] sm:$0xff]
    %v193 = vld [vmem:[#allocation7 + $0x310] sm:$0xff]
    %v194 = vld [vmem:[#allocation7 + $0x318] sm:$0xff]
    %v195 = vld [vmem:[#allocation7 + $0x320] sm:$0xff]
    %v196 = vld [vmem:[#allocation7 + $0x328] sm:$0xff]
    %v197 = vld [vmem:[#allocation7 + $0x330] sm:$0xff]
    %v198 = vld [vmem:[#allocation7 + $0x338] sm:$0xff]
    %v199 = vld [vmem:[#allocation7 + $0x340] sm:$0xff]
    %v200 = vld [vmem:[#allocation7 + $0x348] sm:$0xff]
    %v201 = vld [vmem:[#allocation7 + $0x350] sm:$0xff]
    %v202 = vld [vmem:[#allocation7 + $0x358] sm:$0xff]
    %v203 = vld [vmem:[#allocation7 + $0x360] sm:$0xff]
    %v204 = vld [vmem:[#allocation7 + $0x368] sm:$0xff]
    %v205 = vld [vmem:[#allocation7 + $0x370] sm:$0xff]
    %v206 = vld [vmem:[#allocation7 + $0x378] sm:$0xff]
    %v207 = vld [vmem:[#allocation7 + $0x380] sm:$0xff]
    %v208 = vld [vmem:[#allocation7 + $0x388] sm:$0xff]
    %v209 = vld [vmem:[#allocation7 + $0x390] sm:$0xff]
    %v210 = vld [vmem:[#allocation7 + $0x398] sm:$0xff]
    %v211 = vld [vmem:[#allocation7 + $0x3a0] sm:$0xff]
    %v212 = vld [vmem:[#allocation7 + $0x3a8] sm:$0xff]
    %v213 = vld [vmem:[#allocation7 + $0x3b0] sm:$0xff]
    %v214 = vld [vmem:[#allocation7 + $0x3b8] sm:$0xff]
    %v215 = vld [vmem:[#allocation7 + $0x3c0] sm:$0xff]
    %v216 = vld [vmem:[#allocation7 + $0x3c8] sm:$0xff]
    %v217 = vld [vmem:[#allocation7 + $0x3d0] sm:$0xff]
    %v218 = vld [vmem:[#allocation7 + $0x3d8] sm:$0xff]
    %v219 = vld [vmem:[#allocation7 + $0x3e0] sm:$0xff]
    %v220 = vld [vmem:[#allocation7 + $0x3e8] sm:$0xff]
    %v221 = vld [vmem:[#allocation7 + $0x3f0] sm:$0xff]
    %v222 = vld [vmem:[#allocation7 + $0x3f8] sm:$0xff]
    %v223 = vld [vmem:[#allocation7 + $0x400] sm:$0xff]
    %v224 = vld [vmem:[#allocation7 + $0x408] sm:$0xff]
    %v225 = vld [vmem:[#allocation7 + $0x410] sm:$0xff]
    %v226 = vld [vmem:[#allocation7 + $0x418] sm:$0xff]
    %v227 = vld [vmem:[#allocation7 + $0x420] sm:$0xff]
    %v228 = vld [vmem:[#allocation7 + $0x428] sm:$0xff]
    %v229 = vld [vmem:[#allocation7 + $0x430] sm:$0xff]
    %v230 = vld [vmem:[#allocation7 + $0x438] sm:$0xff]
    %v231 = vld [vmem:[#allocation7 + $0x440] sm:$0xff]
    %v232 = vld [vmem:[#allocation7 + $0x448] sm:$0xff]
    %v233 = vld [vmem:[#allocation7 + $0x450] sm:$0xff]
    %v234 = vld [vmem:[#allocation7 + $0x458] sm:$0xff]
    %v235 = vld [vmem:[#allocation7 + $0x460] sm:$0xff]
    %v236 = vld [vmem:[#allocation7 + $0x468] sm:$0xff]
    %v237 = vld [vmem:[#allocation7 + $0x470] sm:$0xff]
    %v238 = vld [vmem:[#allocation7 + $0x478] sm:$0xff]
    %v239 = vld [vmem:[#allocation7 + $0x480] sm:$0xff]
    %v240 = vld [vmem:[#allocation7 + $0x488] sm:$0xff]
    %v241 = vld [vmem:[#allocation7 + $0x490] sm:$0xff]
    %v242 = vld [vmem:[#allocation7 + $0x498] sm:$0xff]
    %v243 = vld [vmem:[#allocation7 + $0x4a0] sm:$0xff]
    %v244 = vld [vmem:[#allocation7 + $0x4a8] sm:$0xff]
    %v245 = vld [vmem:[#allocation7 + $0x4b0] sm:$0xff]
    %v246 = vld [vmem:[#allocation7 + $0x4b8] sm:$0xff]
    %v247 = vld [vmem:[#allocation7 + $0x4c0] sm:$0xff]
    %v248 = vld [vmem:[#allocation7 + $0x4c8] sm:$0xff]
    %v249 = vld [vmem:[#allocation7 + $0x4d0] sm:$0xff]
    %v250 = vld [vmem:[#allocation7 + $0x4d8] sm:$0xff]
    %v251 = vld [vmem:[#allocation7 + $0x4e0] sm:$0xff]
    %v252 = vld [vmem:[#allocation7 + $0x4e8] sm:$0xff]
    %v253 = vld [vmem:[#allocation7 + $0x4f0] sm:$0xff]
    %v254 = vld [vmem:[#allocation7 + $0x4f8] sm:$0xff]
    %v255 = vld [vmem:[#allocation7 + $0x500] sm:$0xff]
    %v256 = vld [vmem:[#allocation7 + $0x508] sm:$0xff]
    %v257 = vld [vmem:[#allocation7 + $0x510] sm:$0xff]
    %v258 = vld [vmem:[#allocation7 + $0x518] sm:$0xff]
    %v259 = vld [vmem:[#allocation7 + $0x520] sm:$0xff]
    %v260 = vld [vmem:[#allocation7 + $0x528] sm:$0xff]
    %v261 = vld [vmem:[#allocation7 + $0x530] sm:$0xff]
    %v262 = vld [vmem:[#allocation7 + $0x538] sm:$0xff]
    %v263 = vld [vmem:[#allocation7 + $0x540] sm:$0xff]
    %v264 = vld [vmem:[#allocation7 + $0x548] sm:$0xff]
    %v265 = vld [vmem:[#allocation7 + $0x550] sm:$0xff]
    %v266 = vld [vmem:[#allocation7 + $0x558] sm:$0xff]
    %v267 = vld [vmem:[#allocation7 + $0x560] sm:$0xff]
    %v268 = vld [vmem:[#allocation7 + $0x568] sm:$0xff]
    %v269 = vld [vmem:[#allocation7 + $0x570] sm:$0xff]
    %v270 = vld [vmem:[#allocation7 + $0x578] sm:$0xff]
    %v271 = vld [vmem:[#allocation7 + $0x580] sm:$0xff]
    %v272 = vld [vmem:[#allocation7 + $0x588] sm:$0xff]
    %v273 = vld [vmem:[#allocation7 + $0x590] sm:$0xff]
    %v274 = vld [vmem:[#allocation7 + $0x598] sm:$0xff]
    %v275 = vld [vmem:[#allocation7 + $0x5a0] sm:$0xff]
    %v276 = vld [vmem:[#allocation7 + $0x5a8] sm:$0xff]
    %v277 = vld [vmem:[#allocation7 + $0x5b0] sm:$0xff]
    %v278 = vld [vmem:[#allocation7 + $0x5b8] sm:$0xff]
    %v279 = vld [vmem:[#allocation7 + $0x5c0] sm:$0xff]
    %v280 = vld [vmem:[#allocation7 + $0x5c8] sm:$0xff]
    %v281 = vld [vmem:[#allocation7 + $0x5d0] sm:$0xff]
    %v282 = vld [vmem:[#allocation7 + $0x5d8] sm:$0xff]
    %v283 = vld [vmem:[#allocation7 + $0x5e0] sm:$0xff]
    %v284 = vld [vmem:[#allocation7 + $0x5e8] sm:$0xff]
    %v285 = vld [vmem:[#allocation7 + $0x5f0] sm:$0xff]
    %v286 = vld [vmem:[#allocation7 + $0x5f8] sm:$0xff]
    %v287 = vld [vmem:[#allocation7 + $0x600] sm:$0xff]
    %v288 = vld [vmem:[#allocation7 + $0x608] sm:$0xff]
    %v289 = vld [vmem:[#allocation7 + $0x610] sm:$0xff]
    %v290 = vld [vmem:[#allocation7 + $0x618] sm:$0xff]
    %v291 = vld [vmem:[#allocation7 + $0x620] sm:$0xff]
    %v292 = vld [vmem:[#allocation7 + $0x628] sm:$0xff]
    %v293 = vld [vmem:[#allocation7 + $0x630] sm:$0xff]
    %v294 = vld [vmem:[#allocation7 + $0x638] sm:$0xff]
    %v295 = vld [vmem:[#allocation7 + $0x640] sm:$0xff]
    %v296 = vld [vmem:[#allocation7 + $0x648] sm:$0xff]
    %v297 = vld [vmem:[#allocation7 + $0x650] sm:$0xff]
    %v298 = vld [vmem:[#allocation7 + $0x658] sm:$0xff]
    %v299 = vld [vmem:[#allocation7 + $0x660] sm:$0xff]
    %v300 = vld [vmem:[#allocation7 + $0x668] sm:$0xff]
    %v301 = vld [vmem:[#allocation7 + $0x670] sm:$0xff]
    %v302 = vld [vmem:[#allocation7 + $0x678] sm:$0xff]
    %v303 = vld [vmem:[#allocation7 + $0x680] sm:$0xff]
    %v304 = vld [vmem:[#allocation7 + $0x688] sm:$0xff]
    %v305 = vld [vmem:[#allocation7 + $0x690] sm:$0xff]
    %v306 = vld [vmem:[#allocation7 + $0x698] sm:$0xff]
    %v307 = vld [vmem:[#allocation7 + $0x6a0] sm:$0xff]
    %v308 = vld [vmem:[#allocation7 + $0x6a8] sm:$0xff]
    %v309 = vld [vmem:[#allocation7 + $0x6b0] sm:$0xff]
    %v310 = vld [vmem:[#allocation7 + $0x6b8] sm:$0xff]
    %v311 = vld [vmem:[#allocation7 + $0x6c0] sm:$0xff]
    %v312 = vld [vmem:[#allocation7 + $0x6c8] sm:$0xff]
    %v313 = vld [vmem:[#allocation7 + $0x6d0] sm:$0xff]
    %v314 = vld [vmem:[#allocation7 + $0x6d8] sm:$0xff]
    %v315 = vld [vmem:[#allocation7 + $0x6e0] sm:$0xff]
    %v316 = vld [vmem:[#allocation7 + $0x6e8] sm:$0xff]
    %v317 = vld [vmem:[#allocation7 + $0x6f0] sm:$0xff]
    %v318 = vld [vmem:[#allocation7 + $0x6f8] sm:$0xff]
    %v319 = vld [vmem:[#allocation7 + $0x700] sm:$0xff]
    %v320 = vld [vmem:[#allocation7 + $0x708] sm:$0xff]
    %v321 = vld [vmem:[#allocation7 + $0x710] sm:$0xff]
    %v322 = vld [vmem:[#allocation7 + $0x718] sm:$0xff]
    %v323 = vld [vmem:[#allocation7 + $0x720] sm:$0xff]
    %v324 = vld [vmem:[#allocation7 + $0x728] sm:$0xff]
    %v325 = vld [vmem:[#allocation7 + $0x730] sm:$0xff]
    %v326 = vld [vmem:[#allocation7 + $0x738] sm:$0xff]
    %v327 = vld [vmem:[#allocation7 + $0x740] sm:$0xff]
    %v328 = vld [vmem:[#allocation7 + $0x748] sm:$0xff]
    %v329 = vld [vmem:[#allocation7 + $0x750] sm:$0xff]
    %v330 = vld [vmem:[#allocation7 + $0x758] sm:$0xff]
    %v331 = vld [vmem:[#allocation7 + $0x760] sm:$0xff]
    %v332 = vld [vmem:[#allocation7 + $0x768] sm:$0xff]
    %v333 = vld [vmem:[#allocation7 + $0x770] sm:$0xff]
    %v334 = vld [vmem:[#allocation7 + $0x778] sm:$0xff]
    %v335 = vld [vmem:[#allocation7 + $0x780] sm:$0xff]
    %v336 = vld [vmem:[#allocation7 + $0x788] sm:$0xff]
    %v337 = vld [vmem:[#allocation7 + $0x790] sm:$0xff]
    %v338 = vld [vmem:[#allocation7 + $0x798] sm:$0xff]
    %v339 = vld [vmem:[#allocation7 + $0x7a0] sm:$0xff]
    %v340 = vld [vmem:[#allocation7 + $0x7a8] sm:$0xff]
    %v341 = vld [vmem:[#allocation7 + $0x7b0] sm:$0xff]
    %v342 = vld [vmem:[#allocation7 + $0x7b8] sm:$0xff]
    %v343 = vld [vmem:[#allocation7 + $0x7c0] sm:$0xff]
    %v344 = vld [vmem:[#allocation7 + $0x7c8] sm:$0xff]
    %v345 = vld [vmem:[#allocation7 + $0x7d0] sm:$0xff]
    %v346 = vld [vmem:[#allocation7 + $0x7d8] sm:$0xff]
    %v347 = vld [vmem:[#allocation7 + $0x7e0] sm:$0xff]
    %v348 = vld [vmem:[#allocation7 + $0x7e8] sm:$0xff]
    %v349 = vld [vmem:[#allocation7 + $0x7f0] sm:$0xff]
    %v350 = vld [vmem:[#allocation7 + $0x7f8] sm:$0xff]
    %v351 = vld [vmem:[#allocation7 + $0x800] sm:$0xff]
    %v352 = vld [vmem:[#allocation7 + $0x808] sm:$0xff]
    %v353 = vld [vmem:[#allocation7 + $0x810] sm:$0xff]
    %v354 = vld [vmem:[#allocation7 + $0x818] sm:$0xff]
    %v355 = vld [vmem:[#allocation7 + $0x820] sm:$0xff]
    %v356 = vld [vmem:[#allocation7 + $0x828] sm:$0xff]
    %v357 = vld [vmem:[#allocation7 + $0x830] sm:$0xff]
    %v358 = vld [vmem:[#allocation7 + $0x838] sm:$0xff]
    %v359 = vld [vmem:[#allocation7 + $0x840] sm:$0xff]
    %v360 = vld [vmem:[#allocation7 + $0x848] sm:$0xff]
    %v361 = vld [vmem:[#allocation7 + $0x850] sm:$0xff]
    %v362 = vld [vmem:[#allocation7 + $0x858] sm:$0xff]
    %v363 = vld [vmem:[#allocation7 + $0x860] sm:$0xff]
    %v364 = vld [vmem:[#allocation7 + $0x868] sm:$0xff]
    %v365 = vld [vmem:[#allocation7 + $0x870] sm:$0xff]
    %v366 = vld [vmem:[#allocation7 + $0x878] sm:$0xff]
    %v367 = vld [vmem:[#allocation7 + $0x880] sm:$0xff]
    %v368 = vld [vmem:[#allocation7 + $0x888] sm:$0xff]
    %v369 = vld [vmem:[#allocation7 + $0x890] sm:$0xff]
    %v370 = vld [vmem:[#allocation7 + $0x898] sm:$0xff]
    %v371 = vld [vmem:[#allocation7 + $0x8a0] sm:$0xff]
    %v372 = vld [vmem:[#allocation7 + $0x8a8] sm:$0xff]
    %v373 = vld [vmem:[#allocation7 + $0x8b0] sm:$0xff]
    %v374 = vld [vmem:[#allocation7 + $0x8b8] sm:$0xff]
    %v375 = vld [vmem:[#allocation7 + $0x8c0] sm:$0xff]
    %v376 = vld [vmem:[#allocation7 + $0x8c8] sm:$0xff]
    %v377 = vld [vmem:[#allocation7 + $0x8d0] sm:$0xff]
    %v378 = vld [vmem:[#allocation7 + $0x8d8] sm:$0xff]
    %v379 = vld [vmem:[#allocation7 + $0x8e0] sm:$0xff]
    %v380 = vld [vmem:[#allocation7 + $0x8e8] sm:$0xff]
    %v381 = vld [vmem:[#allocation7 + $0x8f0] sm:$0xff]
    %v382 = vld [vmem:[#allocation7 + $0x8f8] sm:$0xff]
    %v383 = vld [vmem:[#allocation7 + $0x900] sm:$0xff]
    %v384 = vld [vmem:[#allocation7 + $0x908] sm:$0xff]
    %v385 = vld [vmem:[#allocation7 + $0x910] sm:$0xff]
    %v386 = vld [vmem:[#allocation7 + $0x918] sm:$0xff]
    %v387 = vld [vmem:[#allocation7 + $0x920] sm:$0xff]
    %v388 = vld [vmem:[#allocation7 + $0x928] sm:$0xff]
    %v389 = vld [vmem:[#allocation7 + $0x930] sm:$0xff]
    %v390 = vld [vmem:[#allocation7 + $0x938] sm:$0xff]
    %v391 = vld [vmem:[#allocation7 + $0x940] sm:$0xff]
    %v392 = vld [vmem:[#allocation7 + $0x948] sm:$0xff]
    %v393 = vld [vmem:[#allocation7 + $0x950] sm:$0xff]
    %v394 = vld [vmem:[#allocation7 + $0x958] sm:$0xff]
    %v395 = vld [vmem:[#allocation7 + $0x960] sm:$0xff]
    %v396 = vld [vmem:[#allocation7 + $0x968] sm:$0xff]
    %v397 = vld [vmem:[#allocation7 + $0x970] sm:$0xff]
    %v398 = vld [vmem:[#allocation7 + $0x978] sm:$0xff]
    %v399 = vld [vmem:[#allocation7 + $0x980] sm:$0xff]
    %v400 = vld [vmem:[#allocation7 + $0x988] sm:$0xff]
    %v401 = vld [vmem:[#allocation7 + $0x990] sm:$0xff]
    %v402 = vld [vmem:[#allocation7 + $0x998] sm:$0xff]
    %v403 = vld [vmem:[#allocation7 + $0x9a0] sm:$0xff]
    %v404 = vld [vmem:[#allocation7 + $0x9a8] sm:$0xff]
    %v405 = vld [vmem:[#allocation7 + $0x9b0] sm:$0xff]
    %v406 = vld [vmem:[#allocation7 + $0x9b8] sm:$0xff]
    %v407 = vld [vmem:[#allocation7 + $0x9c0] sm:$0xff]
    %v408 = vld [vmem:[#allocation7 + $0x9c8] sm:$0xff]
    %v409 = vld [vmem:[#allocation7 + $0x9d0] sm:$0xff]
    %v410 = vld [vmem:[#allocation7 + $0x9d8] sm:$0xff]
    %v411 = vld [vmem:[#allocation7 + $0x9e0] sm:$0xff]
    %v412 = vld [vmem:[#allocation7 + $0x9e8] sm:$0xff]
    %v413 = vld [vmem:[#allocation7 + $0x9f0] sm:$0xff]
    %v414 = vld [vmem:[#allocation7 + $0x9f8] sm:$0xff]
    %v415 = vld [vmem:[#allocation7 + $0xa00] sm:$0xff]
    %v416 = vld [vmem:[#allocation7 + $0xa08] sm:$0xff]
    %v417 = vld [vmem:[#allocation7 + $0xa10] sm:$0xff]
    %v418 = vld [vmem:[#allocation7 + $0xa18] sm:$0xff]
    %v419 = vld [vmem:[#allocation7 + $0xa20] sm:$0xff]
    %v420 = vld [vmem:[#allocation7 + $0xa28] sm:$0xff]
    %v421 = vld [vmem:[#allocation7 + $0xa30] sm:$0xff]
    %v422 = vld [vmem:[#allocation7 + $0xa38] sm:$0xff]
    %v423 = vld [vmem:[#allocation7 + $0xa40] sm:$0xff]
    %v424 = vld [vmem:[#allocation7 + $0xa48] sm:$0xff]
    %v425 = vld [vmem:[#allocation7 + $0xa50] sm:$0xff]
    %v426 = vld [vmem:[#allocation7 + $0xa58] sm:$0xff]
    %v427 = vld [vmem:[#allocation7 + $0xa60] sm:$0xff]
    %v428 = vld [vmem:[#allocation7 + $0xa68] sm:$0xff]
    %v429 = vld [vmem:[#allocation7 + $0xa70] sm:$0xff]
    %v430 = vld [vmem:[#allocation7 + $0xa78] sm:$0xff]
    %v431 = vld [vmem:[#allocation7 + $0xa80] sm:$0xff]
    %v432 = vld [vmem:[#allocation7 + $0xa88] sm:$0xff]
    %v433 = vld [vmem:[#allocation7 + $0xa90] sm:$0xff]
    %v434 = vld [vmem:[#allocation7 + $0xa98] sm:$0xff]
    %v435 = vld [vmem:[#allocation7 + $0xaa0] sm:$0xff]
    %v436 = vld [vmem:[#allocation7 + $0xaa8] sm:$0xff]
    %v437 = vld [vmem:[#allocation7 + $0xab0] sm:$0xff]
    %v438 = vld [vmem:[#allocation7 + $0xab8] sm:$0xff]
    %v439 = vld [vmem:[#allocation7 + $0xac0] sm:$0xff]
    %v440 = vld [vmem:[#allocation7 + $0xac8] sm:$0xff]
    %v441 = vld [vmem:[#allocation7 + $0xad0] sm:$0xff]
    %v442 = vld [vmem:[#allocation7 + $0xad8] sm:$0xff]
    %v443 = vld [vmem:[#allocation7 + $0xae0] sm:$0xff]
    %v444 = vld [vmem:[#allocation7 + $0xae8] sm:$0xff]
    %v445 = vld [vmem:[#allocation7 + $0xaf0] sm:$0xff]
    %v446 = vld [vmem:[#allocation7 + $0xaf8] sm:$0xff]
    %v447 = vld [vmem:[#allocation7 + $0xb00] sm:$0xff]
    %v448 = vld [vmem:[#allocation7 + $0xb08] sm:$0xff]
    %v449 = vld [vmem:[#allocation7 + $0xb10] sm:$0xff]
    %v450 = vld [vmem:[#allocation7 + $0xb18] sm:$0xff]
    %v451 = vld [vmem:[#allocation7 + $0xb20] sm:$0xff]
    %v452 = vld [vmem:[#allocation7 + $0xb28] sm:$0xff]
    %v453 = vld [vmem:[#allocation7 + $0xb30] sm:$0xff]
    %v454 = vld [vmem:[#allocation7 + $0xb38] sm:$0xff]
    %v455 = vld [vmem:[#allocation7 + $0xb40] sm:$0xff]
    %v456 = vld [vmem:[#allocation7 + $0xb48] sm:$0xff]
    %v457 = vld [vmem:[#allocation7 + $0xb50] sm:$0xff]
    %v458 = vld [vmem:[#allocation7 + $0xb58] sm:$0xff]
    %v459 = vld [vmem:[#allocation7 + $0xb60] sm:$0xff]
    %v460 = vld [vmem:[#allocation7 + $0xb68] sm:$0xff]
    %v461 = vld [vmem:[#allocation7 + $0xb70] sm:$0xff]
    %v462 = vld [vmem:[#allocation7 + $0xb78] sm:$0xff]
    %v463 = vld [vmem:[#allocation7 + $0xb80] sm:$0xff]
    %v464 = vld [vmem:[#allocation7 + $0xb88] sm:$0xff]
    %v465 = vld [vmem:[#allocation7 + $0xb90] sm:$0xff]
    %v466 = vld [vmem:[#allocation7 + $0xb98] sm:$0xff]
    %v467 = vld [vmem:[#allocation7 + $0xba0] sm:$0xff]
    %v468 = vld [vmem:[#allocation7 + $0xba8] sm:$0xff]
    %v469 = vld [vmem:[#allocation7 + $0xbb0] sm:$0xff]
    %v470 = vld [vmem:[#allocation7 + $0xbb8] sm:$0xff]
    %v471 = vld [vmem:[#allocation7 + $0xbc0] sm:$0xff]
    %v472 = vld [vmem:[#allocation7 + $0xbc8] sm:$0xff]
    %v473 = vld [vmem:[#allocation7 + $0xbd0] sm:$0xff]
    %v474 = vld [vmem:[#allocation7 + $0xbd8] sm:$0xff]
    %v475 = vld [vmem:[#allocation7 + $0xbe0] sm:$0xff]
    %v476 = vld [vmem:[#allocation7 + $0xbe8] sm:$0xff]
    %v477 = vld [vmem:[#allocation7 + $0xbf0] sm:$0xff]
    %v478 = vld [vmem:[#allocation7 + $0xbf8] sm:$0xff]
    %v480 = vcombine.high %v94, %v94
    %v482 = vunpack.c.l.s4 1966171168
    %v483 = vunpack.c.0.s8 %v482
    %v484 = vlaneseq
    %v485 = vshrl.u32 %v484, 7
    %v486 = vsub.s32 %v483, %v485
    %v487 = vrot.slane %v94, %v486
    %v489 = vunpack.c.l.s4 1966171168
    %v490 = vunpack.c.0.s8 %v489
    %v491 = vlaneseq
    %v492 = vshrl.u32 %v491, 7
    %v493 = vsub.s32 %v490, %v492
    %v494 = vrot.slane %v480, %v493
    %v495 = vcombine.high %v487, %v487
    %v496 = vcombine.high %v494, %v494
    %v498 = vunpack.c.l.s4 1966171168
    %v499 = vunpack.c.0.s8 %v498
    %v500 = vlaneseq
    %v501 = vshrl.u32 %v500, 7
    %v502 = vsub.s32 %v499, %v501
    %v503 = vrot.slane %v487, %v502
    %v505 = vunpack.c.l.s4 1966171168
    %v506 = vunpack.c.0.s8 %v505
    %v507 = vlaneseq
    %v508 = vshrl.u32 %v507, 7
    %v509 = vsub.s32 %v506, %v508
    %v510 = vrot.slane %v494, %v509
    %v512 = vunpack.c.l.s4 1966171168
    %v513 = vunpack.c.0.s8 %v512
    %v514 = vlaneseq
    %v515 = vshrl.u32 %v514, 7
    %v516 = vsub.s32 %v513, %v515
    %v517 = vrot.slane %v495, %v516
    %v519 = vunpack.c.l.s4 1966171168
    %v520 = vunpack.c.0.s8 %v519
    %v521 = vlaneseq
    %v522 = vshrl.u32 %v521, 7
    %v523 = vsub.s32 %v520, %v522
    %v524 = vrot.slane %v496, %v523
    %v525 = vcombine.high %v503, %v503
    %v526 = vcombine.high %v510, %v510
    %v527 = vcombine.high %v517, %v517
    %v528 = vcombine.high %v524, %v524
    %v921 = vunpack.c.l.b16 %v95
    %v922 = vunpack.c.h.b16 %v95
    %v923 = vunpack.c.l.b16 %v96
    %v924 = vunpack.c.h.b16 %v96
    %v925 = vunpack.c.l.b16 %v97
    %v926 = vunpack.c.h.b16 %v97
    %v927 = vunpack.c.l.b16 %v98
    %v928 = vunpack.c.h.b16 %v98
    %v929 = vunpack.c.l.b16 %v99
    %v930 = vunpack.c.h.b16 %v99
    %v931 = vunpack.c.l.b16 %v100
    %v932 = vunpack.c.h.b16 %v100
    %v933 = vunpack.c.l.b16 %v101
    %v934 = vunpack.c.h.b16 %v101
    %v935 = vunpack.c.l.b16 %v102
    %v936 = vunpack.c.h.b16 %v102
    %v937 = vunpack.c.l.b16 %v103
    %v938 = vunpack.c.h.b16 %v103
    %v939 = vunpack.c.l.b16 %v104
    %v940 = vunpack.c.h.b16 %v104
    %v941 = vunpack.c.l.b16 %v105
    %v942 = vunpack.c.h.b16 %v105
    %v943 = vunpack.c.l.b16 %v106
    %v944 = vunpack.c.h.b16 %v106
    %v945 = vunpack.c.l.b16 %v107
    %v946 = vunpack.c.h.b16 %v107
    %v947 = vunpack.c.l.b16 %v108
    %v948 = vunpack.c.h.b16 %v108
    %v949 = vunpack.c.l.b16 %v109
    %v950 = vunpack.c.h.b16 %v109
    %v951 = vunpack.c.l.b16 %v110
    %v952 = vunpack.c.h.b16 %v110
    %v953 = vunpack.c.l.b16 %v111
    %v954 = vunpack.c.h.b16 %v111
    %v955 = vunpack.c.l.b16 %v112
    %v956 = vunpack.c.h.b16 %v112
    %v957 = vunpack.c.l.b16 %v113
    %v958 = vunpack.c.h.b16 %v113
    %v959 = vunpack.c.l.b16 %v114
    %v960 = vunpack.c.h.b16 %v114
    %v961 = vunpack.c.l.b16 %v115
    %v962 = vunpack.c.h.b16 %v115
    %v963 = vunpack.c.l.b16 %v116
    %v964 = vunpack.c.h.b16 %v116
    %v965 = vunpack.c.l.b16 %v117
    %v966 = vunpack.c.h.b16 %v117
    %v967 = vunpack.c.l.b16 %v118
    %v968 = vunpack.c.h.b16 %v118
    %v969 = vunpack.c.l.b16 %v119
    %v970 = vunpack.c.h.b16 %v119
    %v971 = vunpack.c.l.b16 %v120
    %v972 = vunpack.c.h.b16 %v120
    %v973 = vunpack.c.l.b16 %v121
    %v974 = vunpack.c.h.b16 %v121
    %v975 = vunpack.c.l.b16 %v122
    %v976 = vunpack.c.h.b16 %v122
    %v977 = vunpack.c.l.b16 %v123
    %v978 = vunpack.c.h.b16 %v123
    %v979 = vunpack.c.l.b16 %v124
    %v980 = vunpack.c.h.b16 %v124
    %v981 = vunpack.c.l.b16 %v125
    %v982 = vunpack.c.h.b16 %v125
    %v983 = vunpack.c.l.b16 %v126
    %v984 = vunpack.c.h.b16 %v126
    %v985 = vunpack.c.l.b16 %v127
    %v986 = vunpack.c.h.b16 %v127
    %v987 = vunpack.c.l.b16 %v128
    %v988 = vunpack.c.h.b16 %v128
    %v989 = vunpack.c.l.b16 %v129
    %v990 = vunpack.c.h.b16 %v129
    %v991 = vunpack.c.l.b16 %v130
    %v992 = vunpack.c.h.b16 %v130
    %v993 = vunpack.c.l.b16 %v131
    %v994 = vunpack.c.h.b16 %v131
    %v995 = vunpack.c.l.b16 %v132
    %v996 = vunpack.c.h.b16 %v132
    %v997 = vunpack.c.l.b16 %v133
    %v998 = vunpack.c.h.b16 %v133
    %v999 = vunpack.c.l.b16 %v134
    %v1000 = vunpack.c.h.b16 %v134
    %v1001 = vunpack.c.l.b16 %v135
    %v1002 = vunpack.c.h.b16 %v135
    %v1003 = vunpack.c.l.b16 %v136
    %v1004 = vunpack.c.h.b16 %v136
    %v1005 = vunpack.c.l.b16 %v137
    %v1006 = vunpack.c.h.b16 %v137
    %v1007 = vunpack.c.l.b16 %v138
    %v1008 = vunpack.c.h.b16 %v138
    %v1009 = vunpack.c.l.b16 %v139
    %v1010 = vunpack.c.h.b16 %v139
    %v1011 = vunpack.c.l.b16 %v140
    %v1012 = vunpack.c.h.b16 %v140
    %v1013 = vunpack.c.l.b16 %v141
    %v1014 = vunpack.c.h.b16 %v141
    %v1015 = vunpack.c.l.b16 %v142
    %v1016 = vunpack.c.h.b16 %v142
    %v1017 = vunpack.c.l.b16 %v143
    %v1018 = vunpack.c.h.b16 %v143
    %v1019 = vunpack.c.l.b16 %v144
    %v1020 = vunpack.c.h.b16 %v144
    %v1021 = vunpack.c.l.b16 %v145
    %v1022 = vunpack.c.h.b16 %v145
    %v1023 = vunpack.c.l.b16 %v146
    %v1024 = vunpack.c.h.b16 %v146
    %v1025 = vunpack.c.l.b16 %v147
    %v1026 = vunpack.c.h.b16 %v147
    %v1027 = vunpack.c.l.b16 %v148
    %v1028 = vunpack.c.h.b16 %v148
    %v1029 = vunpack.c.l.b16 %v149
    %v1030 = vunpack.c.h.b16 %v149
    %v1031 = vunpack.c.l.b16 %v150
    %v1032 = vunpack.c.h.b16 %v150
    %v1033 = vunpack.c.l.b16 %v151
    %v1034 = vunpack.c.h.b16 %v151
    %v1035 = vunpack.c.l.b16 %v152
    %v1036 = vunpack.c.h.b16 %v152
    %v1037 = vunpack.c.l.b16 %v153
    %v1038 = vunpack.c.h.b16 %v153
    %v1039 = vunpack.c.l.b16 %v154
    %v1040 = vunpack.c.h.b16 %v154
    %v1041 = vunpack.c.l.b16 %v155
    %v1042 = vunpack.c.h.b16 %v155
    %v1043 = vunpack.c.l.b16 %v156
    %v1044 = vunpack.c.h.b16 %v156
    %v1045 = vunpack.c.l.b16 %v157
    %v1046 = vunpack.c.h.b16 %v157
    %v1047 = vunpack.c.l.b16 %v158
    %v1048 = vunpack.c.h.b16 %v158
    %v1049 = vunpack.c.l.b16 %v159
    %v1050 = vunpack.c.h.b16 %v159
    %v1051 = vunpack.c.l.b16 %v160
    %v1052 = vunpack.c.h.b16 %v160
    %v1053 = vunpack.c.l.b16 %v161
    %v1054 = vunpack.c.h.b16 %v161
    %v1055 = vunpack.c.l.b16 %v162
    %v1056 = vunpack.c.h.b16 %v162
    %v1057 = vunpack.c.l.b16 %v163
    %v1058 = vunpack.c.h.b16 %v163
    %v1059 = vunpack.c.l.b16 %v164
    %v1060 = vunpack.c.h.b16 %v164
    %v1061 = vunpack.c.l.b16 %v165
    %v1062 = vunpack.c.h.b16 %v165
    %v1063 = vunpack.c.l.b16 %v166
    %v1064 = vunpack.c.h.b16 %v166
    %v1065 = vunpack.c.l.b16 %v167
    %v1066 = vunpack.c.h.b16 %v167
    %v1067 = vunpack.c.l.b16 %v168
    %v1068 = vunpack.c.h.b16 %v168
    %v1069 = vunpack.c.l.b16 %v169
    %v1070 = vunpack.c.h.b16 %v169
    %v1071 = vunpack.c.l.b16 %v170
    %v1072 = vunpack.c.h.b16 %v170
    %v1073 = vunpack.c.l.b16 %v171
    %v1074 = vunpack.c.h.b16 %v171
    %v1075 = vunpack.c.l.b16 %v172
    %v1076 = vunpack.c.h.b16 %v172
    %v1077 = vunpack.c.l.b16 %v173
    %v1078 = vunpack.c.h.b16 %v173
    %v1079 = vunpack.c.l.b16 %v174
    %v1080 = vunpack.c.h.b16 %v174
    %v1081 = vunpack.c.l.b16 %v175
    %v1082 = vunpack.c.h.b16 %v175
    %v1083 = vunpack.c.l.b16 %v176
    %v1084 = vunpack.c.h.b16 %v176
    %v1085 = vunpack.c.l.b16 %v177
    %v1086 = vunpack.c.h.b16 %v177
    %v1087 = vunpack.c.l.b16 %v178
    %v1088 = vunpack.c.h.b16 %v178
    %v1089 = vunpack.c.l.b16 %v179
    %v1090 = vunpack.c.h.b16 %v179
    %v1091 = vunpack.c.l.b16 %v180
    %v1092 = vunpack.c.h.b16 %v180
    %v1093 = vunpack.c.l.b16 %v181
    %v1094 = vunpack.c.h.b16 %v181
    %v1095 = vunpack.c.l.b16 %v182
    %v1096 = vunpack.c.h.b16 %v182
    %v1097 = vunpack.c.l.b16 %v183
    %v1098 = vunpack.c.h.b16 %v183
    %v1099 = vunpack.c.l.b16 %v184
    %v1100 = vunpack.c.h.b16 %v184
    %v1101 = vunpack.c.l.b16 %v185
    %v1102 = vunpack.c.h.b16 %v185
    %v1103 = vunpack.c.l.b16 %v186
    %v1104 = vunpack.c.h.b16 %v186
    %v1105 = vunpack.c.l.b16 %v187
    %v1106 = vunpack.c.h.b16 %v187
    %v1107 = vunpack.c.l.b16 %v188
    %v1108 = vunpack.c.h.b16 %v188
    %v1109 = vunpack.c.l.b16 %v189
    %v1110 = vunpack.c.h.b16 %v189
    %v1111 = vunpack.c.l.b16 %v190
    %v1112 = vunpack.c.h.b16 %v190
    %v1113 = vunpack.c.l.b16 %v191
    %v1114 = vunpack.c.h.b16 %v191
    %v1115 = vunpack.c.l.b16 %v192
    %v1116 = vunpack.c.h.b16 %v192
    %v1117 = vunpack.c.l.b16 %v193
    %v1118 = vunpack.c.h.b16 %v193
    %v1119 = vunpack.c.l.b16 %v194
    %v1120 = vunpack.c.h.b16 %v194
    %v1121 = vunpack.c.l.b16 %v195
    %v1122 = vunpack.c.h.b16 %v195
    %v1123 = vunpack.c.l.b16 %v196
    %v1124 = vunpack.c.h.b16 %v196
    %v1125 = vunpack.c.l.b16 %v197
    %v1126 = vunpack.c.h.b16 %v197
    %v1127 = vunpack.c.l.b16 %v198
    %v1128 = vunpack.c.h.b16 %v198
    %v1129 = vunpack.c.l.b16 %v199
    %v1130 = vunpack.c.h.b16 %v199
    %v1131 = vunpack.c.l.b16 %v200
    %v1132 = vunpack.c.h.b16 %v200
    %v1133 = vunpack.c.l.b16 %v201
    %v1134 = vunpack.c.h.b16 %v201
    %v1135 = vunpack.c.l.b16 %v202
    %v1136 = vunpack.c.h.b16 %v202
    %v1137 = vunpack.c.l.b16 %v203
    %v1138 = vunpack.c.h.b16 %v203
    %v1139 = vunpack.c.l.b16 %v204
    %v1140 = vunpack.c.h.b16 %v204
    %v1141 = vunpack.c.l.b16 %v205
    %v1142 = vunpack.c.h.b16 %v205
    %v1143 = vunpack.c.l.b16 %v206
    %v1144 = vunpack.c.h.b16 %v206
    %v1145 = vunpack.c.l.b16 %v207
    %v1146 = vunpack.c.h.b16 %v207
    %v1147 = vunpack.c.l.b16 %v208
    %v1148 = vunpack.c.h.b16 %v208
    %v1149 = vunpack.c.l.b16 %v209
    %v1150 = vunpack.c.h.b16 %v209
    %v1151 = vunpack.c.l.b16 %v210
    %v1152 = vunpack.c.h.b16 %v210
    %v1153 = vunpack.c.l.b16 %v211
    %v1154 = vunpack.c.h.b16 %v211
    %v1155 = vunpack.c.l.b16 %v212
    %v1156 = vunpack.c.h.b16 %v212
    %v1157 = vunpack.c.l.b16 %v213
    %v1158 = vunpack.c.h.b16 %v213
    %v1159 = vunpack.c.l.b16 %v214
    %v1160 = vunpack.c.h.b16 %v214
    %v1161 = vunpack.c.l.b16 %v215
    %v1162 = vunpack.c.h.b16 %v215
    %v1163 = vunpack.c.l.b16 %v216
    %v1164 = vunpack.c.h.b16 %v216
    %v1165 = vunpack.c.l.b16 %v217
    %v1166 = vunpack.c.h.b16 %v217
    %v1167 = vunpack.c.l.b16 %v218
    %v1168 = vunpack.c.h.b16 %v218
    %v1169 = vunpack.c.l.b16 %v219
    %v1170 = vunpack.c.h.b16 %v219
    %v1171 = vunpack.c.l.b16 %v220
    %v1172 = vunpack.c.h.b16 %v220
    %v1173 = vunpack.c.l.b16 %v221
    %v1174 = vunpack.c.h.b16 %v221
    %v1175 = vunpack.c.l.b16 %v222
    %v1176 = vunpack.c.h.b16 %v222
    %v1177 = vunpack.c.l.b16 %v223
    %v1178 = vunpack.c.h.b16 %v223
    %v1179 = vunpack.c.l.b16 %v224
    %v1180 = vunpack.c.h.b16 %v224
    %v1181 = vunpack.c.l.b16 %v225
    %v1182 = vunpack.c.h.b16 %v225
    %v1183 = vunpack.c.l.b16 %v226
    %v1184 = vunpack.c.h.b16 %v226
    %v1185 = vunpack.c.l.b16 %v227
    %v1186 = vunpack.c.h.b16 %v227
    %v1187 = vunpack.c.l.b16 %v228
    %v1188 = vunpack.c.h.b16 %v228
    %v1189 = vunpack.c.l.b16 %v229
    %v1190 = vunpack.c.h.b16 %v229
    %v1191 = vunpack.c.l.b16 %v230
    %v1192 = vunpack.c.h.b16 %v230
    %v1193 = vunpack.c.l.b16 %v231
    %v1194 = vunpack.c.h.b16 %v231
    %v1195 = vunpack.c.l.b16 %v232
    %v1196 = vunpack.c.h.b16 %v232
    %v1197 = vunpack.c.l.b16 %v233
    %v1198 = vunpack.c.h.b16 %v233
    %v1199 = vunpack.c.l.b16 %v234
    %v1200 = vunpack.c.h.b16 %v234
    %v1201 = vunpack.c.l.b16 %v235
    %v1202 = vunpack.c.h.b16 %v235
    %v1203 = vunpack.c.l.b16 %v236
    %v1204 = vunpack.c.h.b16 %v236
    %v1205 = vunpack.c.l.b16 %v237
    %v1206 = vunpack.c.h.b16 %v237
    %v1207 = vunpack.c.l.b16 %v238
    %v1208 = vunpack.c.h.b16 %v238
    %v1209 = vunpack.c.l.b16 %v239
    %v1210 = vunpack.c.h.b16 %v239
    %v1211 = vunpack.c.l.b16 %v240
    %v1212 = vunpack.c.h.b16 %v240
    %v1213 = vunpack.c.l.b16 %v241
    %v1214 = vunpack.c.h.b16 %v241
    %v1215 = vunpack.c.l.b16 %v242
    %v1216 = vunpack.c.h.b16 %v242
    %v1217 = vunpack.c.l.b16 %v243
    %v1218 = vunpack.c.h.b16 %v243
    %v1219 = vunpack.c.l.b16 %v244
    %v1220 = vunpack.c.h.b16 %v244
    %v1221 = vunpack.c.l.b16 %v245
    %v1222 = vunpack.c.h.b16 %v245
    %v1223 = vunpack.c.l.b16 %v246
    %v1224 = vunpack.c.h.b16 %v246
    %v1225 = vunpack.c.l.b16 %v247
    %v1226 = vunpack.c.h.b16 %v247
    %v1227 = vunpack.c.l.b16 %v248
    %v1228 = vunpack.c.h.b16 %v248
    %v1229 = vunpack.c.l.b16 %v249
    %v1230 = vunpack.c.h.b16 %v249
    %v1231 = vunpack.c.l.b16 %v250
    %v1232 = vunpack.c.h.b16 %v250
    %v1233 = vunpack.c.l.b16 %v251
    %v1234 = vunpack.c.h.b16 %v251
    %v1235 = vunpack.c.l.b16 %v252
    %v1236 = vunpack.c.h.b16 %v252
    %v1237 = vunpack.c.l.b16 %v253
    %v1238 = vunpack.c.h.b16 %v253
    %v1239 = vunpack.c.l.b16 %v254
    %v1240 = vunpack.c.h.b16 %v254
    %v1241 = vunpack.c.l.b16 %v255
    %v1242 = vunpack.c.h.b16 %v255
    %v1243 = vunpack.c.l.b16 %v256
    %v1244 = vunpack.c.h.b16 %v256
    %v1245 = vunpack.c.l.b16 %v257
    %v1246 = vunpack.c.h.b16 %v257
    %v1247 = vunpack.c.l.b16 %v258
    %v1248 = vunpack.c.h.b16 %v258
    %v1249 = vunpack.c.l.b16 %v259
    %v1250 = vunpack.c.h.b16 %v259
    %v1251 = vunpack.c.l.b16 %v260
    %v1252 = vunpack.c.h.b16 %v260
    %v1253 = vunpack.c.l.b16 %v261
    %v1254 = vunpack.c.h.b16 %v261
    %v1255 = vunpack.c.l.b16 %v262
    %v1256 = vunpack.c.h.b16 %v262
    %v1257 = vunpack.c.l.b16 %v263
    %v1258 = vunpack.c.h.b16 %v263
    %v1259 = vunpack.c.l.b16 %v264
    %v1260 = vunpack.c.h.b16 %v264
    %v1261 = vunpack.c.l.b16 %v265
    %v1262 = vunpack.c.h.b16 %v265
    %v1263 = vunpack.c.l.b16 %v266
    %v1264 = vunpack.c.h.b16 %v266
    %v1265 = vunpack.c.l.b16 %v267
    %v1266 = vunpack.c.h.b16 %v267
    %v1267 = vunpack.c.l.b16 %v268
    %v1268 = vunpack.c.h.b16 %v268
    %v1269 = vunpack.c.l.b16 %v269
    %v1270 = vunpack.c.h.b16 %v269
    %v1271 = vunpack.c.l.b16 %v270
    %v1272 = vunpack.c.h.b16 %v270
    %v1273 = vunpack.c.l.b16 %v271
    %v1274 = vunpack.c.h.b16 %v271
    %v1275 = vunpack.c.l.b16 %v272
    %v1276 = vunpack.c.h.b16 %v272
    %v1277 = vunpack.c.l.b16 %v273
    %v1278 = vunpack.c.h.b16 %v273
    %v1279 = vunpack.c.l.b16 %v274
    %v1280 = vunpack.c.h.b16 %v274
    %v1281 = vunpack.c.l.b16 %v275
    %v1282 = vunpack.c.h.b16 %v275
    %v1283 = vunpack.c.l.b16 %v276
    %v1284 = vunpack.c.h.b16 %v276
    %v1285 = vunpack.c.l.b16 %v277
    %v1286 = vunpack.c.h.b16 %v277
    %v1287 = vunpack.c.l.b16 %v278
    %v1288 = vunpack.c.h.b16 %v278
    %v1289 = vunpack.c.l.b16 %v279
    %v1290 = vunpack.c.h.b16 %v279
    %v1291 = vunpack.c.l.b16 %v280
    %v1292 = vunpack.c.h.b16 %v280
    %v1293 = vunpack.c.l.b16 %v281
    %v1294 = vunpack.c.h.b16 %v281
    %v1295 = vunpack.c.l.b16 %v282
    %v1296 = vunpack.c.h.b16 %v282
    %v1297 = vunpack.c.l.b16 %v283
    %v1298 = vunpack.c.h.b16 %v283
    %v1299 = vunpack.c.l.b16 %v284
    %v1300 = vunpack.c.h.b16 %v284
    %v1301 = vunpack.c.l.b16 %v285
    %v1302 = vunpack.c.h.b16 %v285
    %v1303 = vunpack.c.l.b16 %v286
    %v1304 = vunpack.c.h.b16 %v286
    %v1305 = vunpack.c.l.b16 %v287
    %v1306 = vunpack.c.h.b16 %v287
    %v1307 = vunpack.c.l.b16 %v288
    %v1308 = vunpack.c.h.b16 %v288
    %v1309 = vunpack.c.l.b16 %v289
    %v1310 = vunpack.c.h.b16 %v289
    %v1311 = vunpack.c.l.b16 %v290
    %v1312 = vunpack.c.h.b16 %v290
    %v1313 = vunpack.c.l.b16 %v291
    %v1314 = vunpack.c.h.b16 %v291
    %v1315 = vunpack.c.l.b16 %v292
    %v1316 = vunpack.c.h.b16 %v292
    %v1317 = vunpack.c.l.b16 %v293
    %v1318 = vunpack.c.h.b16 %v293
    %v1319 = vunpack.c.l.b16 %v294
    %v1320 = vunpack.c.h.b16 %v294
    %v1321 = vunpack.c.l.b16 %v295
    %v1322 = vunpack.c.h.b16 %v295
    %v1323 = vunpack.c.l.b16 %v296
    %v1324 = vunpack.c.h.b16 %v296
    %v1325 = vunpack.c.l.b16 %v297
    %v1326 = vunpack.c.h.b16 %v297
    %v1327 = vunpack.c.l.b16 %v298
    %v1328 = vunpack.c.h.b16 %v298
    %v1329 = vunpack.c.l.b16 %v299
    %v1330 = vunpack.c.h.b16 %v299
    %v1331 = vunpack.c.l.b16 %v300
    %v1332 = vunpack.c.h.b16 %v300
    %v1333 = vunpack.c.l.b16 %v301
    %v1334 = vunpack.c.h.b16 %v301
    %v1335 = vunpack.c.l.b16 %v302
    %v1336 = vunpack.c.h.b16 %v302
    %v1337 = vunpack.c.l.b16 %v303
    %v1338 = vunpack.c.h.b16 %v303
    %v1339 = vunpack.c.l.b16 %v304
    %v1340 = vunpack.c.h.b16 %v304
    %v1341 = vunpack.c.l.b16 %v305
    %v1342 = vunpack.c.h.b16 %v305
    %v1343 = vunpack.c.l.b16 %v306
    %v1344 = vunpack.c.h.b16 %v306
    %v1345 = vunpack.c.l.b16 %v307
    %v1346 = vunpack.c.h.b16 %v307
    %v1347 = vunpack.c.l.b16 %v308
    %v1348 = vunpack.c.h.b16 %v308
    %v1349 = vunpack.c.l.b16 %v309
    %v1350 = vunpack.c.h.b16 %v309
    %v1351 = vunpack.c.l.b16 %v310
    %v1352 = vunpack.c.h.b16 %v310
    %v1353 = vunpack.c.l.b16 %v311
    %v1354 = vunpack.c.h.b16 %v311
    %v1355 = vunpack.c.l.b16 %v312
    %v1356 = vunpack.c.h.b16 %v312
    %v1357 = vunpack.c.l.b16 %v313
    %v1358 = vunpack.c.h.b16 %v313
    %v1359 = vunpack.c.l.b16 %v314
    %v1360 = vunpack.c.h.b16 %v314
    %v1361 = vunpack.c.l.b16 %v315
    %v1362 = vunpack.c.h.b16 %v315
    %v1363 = vunpack.c.l.b16 %v316
    %v1364 = vunpack.c.h.b16 %v316
    %v1365 = vunpack.c.l.b16 %v317
    %v1366 = vunpack.c.h.b16 %v317
    %v1367 = vunpack.c.l.b16 %v318
    %v1368 = vunpack.c.h.b16 %v318
    %v1369 = vunpack.c.l.b16 %v319
    %v1370 = vunpack.c.h.b16 %v319
    %v1371 = vunpack.c.l.b16 %v320
    %v1372 = vunpack.c.h.b16 %v320
    %v1373 = vunpack.c.l.b16 %v321
    %v1374 = vunpack.c.h.b16 %v321
    %v1375 = vunpack.c.l.b16 %v322
    %v1376 = vunpack.c.h.b16 %v322
    %v1377 = vunpack.c.l.b16 %v323
    %v1378 = vunpack.c.h.b16 %v323
    %v1379 = vunpack.c.l.b16 %v324
    %v1380 = vunpack.c.h.b16 %v324
    %v1381 = vunpack.c.l.b16 %v325
    %v1382 = vunpack.c.h.b16 %v325
    %v1383 = vunpack.c.l.b16 %v326
    %v1384 = vunpack.c.h.b16 %v326
    %v1385 = vunpack.c.l.b16 %v327
    %v1386 = vunpack.c.h.b16 %v327
    %v1387 = vunpack.c.l.b16 %v328
    %v1388 = vunpack.c.h.b16 %v328
    %v1389 = vunpack.c.l.b16 %v329
    %v1390 = vunpack.c.h.b16 %v329
    %v1391 = vunpack.c.l.b16 %v330
    %v1392 = vunpack.c.h.b16 %v330
    %v1393 = vunpack.c.l.b16 %v331
    %v1394 = vunpack.c.h.b16 %v331
    %v1395 = vunpack.c.l.b16 %v332
    %v1396 = vunpack.c.h.b16 %v332
    %v1397 = vunpack.c.l.b16 %v333
    %v1398 = vunpack.c.h.b16 %v333
    %v1399 = vunpack.c.l.b16 %v334
    %v1400 = vunpack.c.h.b16 %v334
    %v1401 = vunpack.c.l.b16 %v335
    %v1402 = vunpack.c.h.b16 %v335
    %v1403 = vunpack.c.l.b16 %v336
    %v1404 = vunpack.c.h.b16 %v336
    %v1405 = vunpack.c.l.b16 %v337
    %v1406 = vunpack.c.h.b16 %v337
    %v1407 = vunpack.c.l.b16 %v338
    %v1408 = vunpack.c.h.b16 %v338
    %v1409 = vunpack.c.l.b16 %v339
    %v1410 = vunpack.c.h.b16 %v339
    %v1411 = vunpack.c.l.b16 %v340
    %v1412 = vunpack.c.h.b16 %v340
    %v1413 = vunpack.c.l.b16 %v341
    %v1414 = vunpack.c.h.b16 %v341
    %v1415 = vunpack.c.l.b16 %v342
    %v1416 = vunpack.c.h.b16 %v342
    %v1417 = vunpack.c.l.b16 %v343
    %v1418 = vunpack.c.h.b16 %v343
    %v1419 = vunpack.c.l.b16 %v344
    %v1420 = vunpack.c.h.b16 %v344
    %v1421 = vunpack.c.l.b16 %v345
    %v1422 = vunpack.c.h.b16 %v345
    %v1423 = vunpack.c.l.b16 %v346
    %v1424 = vunpack.c.h.b16 %v346
    %v1425 = vunpack.c.l.b16 %v347
    %v1426 = vunpack.c.h.b16 %v347
    %v1427 = vunpack.c.l.b16 %v348
    %v1428 = vunpack.c.h.b16 %v348
    %v1429 = vunpack.c.l.b16 %v349
    %v1430 = vunpack.c.h.b16 %v349
    %v1431 = vunpack.c.l.b16 %v350
    %v1432 = vunpack.c.h.b16 %v350
    %v1433 = vunpack.c.l.b16 %v351
    %v1434 = vunpack.c.h.b16 %v351
    %v1435 = vunpack.c.l.b16 %v352
    %v1436 = vunpack.c.h.b16 %v352
    %v1437 = vunpack.c.l.b16 %v353
    %v1438 = vunpack.c.h.b16 %v353
    %v1439 = vunpack.c.l.b16 %v354
    %v1440 = vunpack.c.h.b16 %v354
    %v1441 = vunpack.c.l.b16 %v355
    %v1442 = vunpack.c.h.b16 %v355
    %v1443 = vunpack.c.l.b16 %v356
    %v1444 = vunpack.c.h.b16 %v356
    %v1445 = vunpack.c.l.b16 %v357
    %v1446 = vunpack.c.h.b16 %v357
    %v1447 = vunpack.c.l.b16 %v358
    %v1448 = vunpack.c.h.b16 %v358
    %v1449 = vunpack.c.l.b16 %v359
    %v1450 = vunpack.c.h.b16 %v359
    %v1451 = vunpack.c.l.b16 %v360
    %v1452 = vunpack.c.h.b16 %v360
    %v1453 = vunpack.c.l.b16 %v361
    %v1454 = vunpack.c.h.b16 %v361
    %v1455 = vunpack.c.l.b16 %v362
    %v1456 = vunpack.c.h.b16 %v362
    %v1457 = vunpack.c.l.b16 %v363
    %v1458 = vunpack.c.h.b16 %v363
    %v1459 = vunpack.c.l.b16 %v364
    %v1460 = vunpack.c.h.b16 %v364
    %v1461 = vunpack.c.l.b16 %v365
    %v1462 = vunpack.c.h.b16 %v365
    %v1463 = vunpack.c.l.b16 %v366
    %v1464 = vunpack.c.h.b16 %v366
    %v1465 = vunpack.c.l.b16 %v367
    %v1466 = vunpack.c.h.b16 %v367
    %v1467 = vunpack.c.l.b16 %v368
    %v1468 = vunpack.c.h.b16 %v368
    %v1469 = vunpack.c.l.b16 %v369
    %v1470 = vunpack.c.h.b16 %v369
    %v1471 = vunpack.c.l.b16 %v370
    %v1472 = vunpack.c.h.b16 %v370
    %v1473 = vunpack.c.l.b16 %v371
    %v1474 = vunpack.c.h.b16 %v371
    %v1475 = vunpack.c.l.b16 %v372
    %v1476 = vunpack.c.h.b16 %v372
    %v1477 = vunpack.c.l.b16 %v373
    %v1478 = vunpack.c.h.b16 %v373
    %v1479 = vunpack.c.l.b16 %v374
    %v1480 = vunpack.c.h.b16 %v374
    %v1481 = vunpack.c.l.b16 %v375
    %v1482 = vunpack.c.h.b16 %v375
    %v1483 = vunpack.c.l.b16 %v376
    %v1484 = vunpack.c.h.b16 %v376
    %v1485 = vunpack.c.l.b16 %v377
    %v1486 = vunpack.c.h.b16 %v377
    %v1487 = vunpack.c.l.b16 %v378
    %v1488 = vunpack.c.h.b16 %v378
    %v1489 = vunpack.c.l.b16 %v379
    %v1490 = vunpack.c.h.b16 %v379
    %v1491 = vunpack.c.l.b16 %v380
    %v1492 = vunpack.c.h.b16 %v380
    %v1493 = vunpack.c.l.b16 %v381
    %v1494 = vunpack.c.h.b16 %v381
    %v1495 = vunpack.c.l.b16 %v382
    %v1496 = vunpack.c.h.b16 %v382
    %v1497 = vunpack.c.l.b16 %v383
    %v1498 = vunpack.c.h.b16 %v383
    %v1499 = vunpack.c.l.b16 %v384
    %v1500 = vunpack.c.h.b16 %v384
    %v1501 = vunpack.c.l.b16 %v385
    %v1502 = vunpack.c.h.b16 %v385
    %v1503 = vunpack.c.l.b16 %v386
    %v1504 = vunpack.c.h.b16 %v386
    %v1505 = vunpack.c.l.b16 %v387
    %v1506 = vunpack.c.h.b16 %v387
    %v1507 = vunpack.c.l.b16 %v388
    %v1508 = vunpack.c.h.b16 %v388
    %v1509 = vunpack.c.l.b16 %v389
    %v1510 = vunpack.c.h.b16 %v389
    %v1511 = vunpack.c.l.b16 %v390
    %v1512 = vunpack.c.h.b16 %v390
    %v1513 = vunpack.c.l.b16 %v391
    %v1514 = vunpack.c.h.b16 %v391
    %v1515 = vunpack.c.l.b16 %v392
    %v1516 = vunpack.c.h.b16 %v392
    %v1517 = vunpack.c.l.b16 %v393
    %v1518 = vunpack.c.h.b16 %v393
    %v1519 = vunpack.c.l.b16 %v394
    %v1520 = vunpack.c.h.b16 %v394
    %v1521 = vunpack.c.l.b16 %v395
    %v1522 = vunpack.c.h.b16 %v395
    %v1523 = vunpack.c.l.b16 %v396
    %v1524 = vunpack.c.h.b16 %v396
    %v1525 = vunpack.c.l.b16 %v397
    %v1526 = vunpack.c.h.b16 %v397
    %v1527 = vunpack.c.l.b16 %v398
    %v1528 = vunpack.c.h.b16 %v398
    %v1529 = vunpack.c.l.b16 %v399
    %v1530 = vunpack.c.h.b16 %v399
    %v1531 = vunpack.c.l.b16 %v400
    %v1532 = vunpack.c.h.b16 %v400
    %v1533 = vunpack.c.l.b16 %v401
    %v1534 = vunpack.c.h.b16 %v401
    %v1535 = vunpack.c.l.b16 %v402
    %v1536 = vunpack.c.h.b16 %v402
    %v1537 = vunpack.c.l.b16 %v403
    %v1538 = vunpack.c.h.b16 %v403
    %v1539 = vunpack.c.l.b16 %v404
    %v1540 = vunpack.c.h.b16 %v404
    %v1541 = vunpack.c.l.b16 %v405
    %v1542 = vunpack.c.h.b16 %v405
    %v1543 = vunpack.c.l.b16 %v406
    %v1544 = vunpack.c.h.b16 %v406
    %v1545 = vunpack.c.l.b16 %v407
    %v1546 = vunpack.c.h.b16 %v407
    %v1547 = vunpack.c.l.b16 %v408
    %v1548 = vunpack.c.h.b16 %v408
    %v1549 = vunpack.c.l.b16 %v409
    %v1550 = vunpack.c.h.b16 %v409
    %v1551 = vunpack.c.l.b16 %v410
    %v1552 = vunpack.c.h.b16 %v410
    %v1553 = vunpack.c.l.b16 %v411
    %v1554 = vunpack.c.h.b16 %v411
    %v1555 = vunpack.c.l.b16 %v412
    %v1556 = vunpack.c.h.b16 %v412
    %v1557 = vunpack.c.l.b16 %v413
    %v1558 = vunpack.c.h.b16 %v413
    %v1559 = vunpack.c.l.b16 %v414
    %v1560 = vunpack.c.h.b16 %v414
    %v1561 = vunpack.c.l.b16 %v415
    %v1562 = vunpack.c.h.b16 %v415
    %v1563 = vunpack.c.l.b16 %v416
    %v1564 = vunpack.c.h.b16 %v416
    %v1565 = vunpack.c.l.b16 %v417
    %v1566 = vunpack.c.h.b16 %v417
    %v1567 = vunpack.c.l.b16 %v418
    %v1568 = vunpack.c.h.b16 %v418
    %v1569 = vunpack.c.l.b16 %v419
    %v1570 = vunpack.c.h.b16 %v419
    %v1571 = vunpack.c.l.b16 %v420
    %v1572 = vunpack.c.h.b16 %v420
    %v1573 = vunpack.c.l.b16 %v421
    %v1574 = vunpack.c.h.b16 %v421
    %v1575 = vunpack.c.l.b16 %v422
    %v1576 = vunpack.c.h.b16 %v422
    %v1577 = vunpack.c.l.b16 %v423
    %v1578 = vunpack.c.h.b16 %v423
    %v1579 = vunpack.c.l.b16 %v424
    %v1580 = vunpack.c.h.b16 %v424
    %v1581 = vunpack.c.l.b16 %v425
    %v1582 = vunpack.c.h.b16 %v425
    %v1583 = vunpack.c.l.b16 %v426
    %v1584 = vunpack.c.h.b16 %v426
    %v1585 = vunpack.c.l.b16 %v427
    %v1586 = vunpack.c.h.b16 %v427
    %v1587 = vunpack.c.l.b16 %v428
    %v1588 = vunpack.c.h.b16 %v428
    %v1589 = vunpack.c.l.b16 %v429
    %v1590 = vunpack.c.h.b16 %v429
    %v1591 = vunpack.c.l.b16 %v430
    %v1592 = vunpack.c.h.b16 %v430
    %v1593 = vunpack.c.l.b16 %v431
    %v1594 = vunpack.c.h.b16 %v431
    %v1595 = vunpack.c.l.b16 %v432
    %v1596 = vunpack.c.h.b16 %v432
    %v1597 = vunpack.c.l.b16 %v433
    %v1598 = vunpack.c.h.b16 %v433
    %v1599 = vunpack.c.l.b16 %v434
    %v1600 = vunpack.c.h.b16 %v434
    %v1601 = vunpack.c.l.b16 %v435
    %v1602 = vunpack.c.h.b16 %v435
    %v1603 = vunpack.c.l.b16 %v436
    %v1604 = vunpack.c.h.b16 %v436
    %v1605 = vunpack.c.l.b16 %v437
    %v1606 = vunpack.c.h.b16 %v437
    %v1607 = vunpack.c.l.b16 %v438
    %v1608 = vunpack.c.h.b16 %v438
    %v1609 = vunpack.c.l.b16 %v439
    %v1610 = vunpack.c.h.b16 %v439
    %v1611 = vunpack.c.l.b16 %v440
    %v1612 = vunpack.c.h.b16 %v440
    %v1613 = vunpack.c.l.b16 %v441
    %v1614 = vunpack.c.h.b16 %v441
    %v1615 = vunpack.c.l.b16 %v442
    %v1616 = vunpack.c.h.b16 %v442
    %v1617 = vunpack.c.l.b16 %v443
    %v1618 = vunpack.c.h.b16 %v443
    %v1619 = vunpack.c.l.b16 %v444
    %v1620 = vunpack.c.h.b16 %v444
    %v1621 = vunpack.c.l.b16 %v445
    %v1622 = vunpack.c.h.b16 %v445
    %v1623 = vunpack.c.l.b16 %v446
    %v1624 = vunpack.c.h.b16 %v446
    %v1625 = vunpack.c.l.b16 %v447
    %v1626 = vunpack.c.h.b16 %v447
    %v1627 = vunpack.c.l.b16 %v448
    %v1628 = vunpack.c.h.b16 %v448
    %v1629 = vunpack.c.l.b16 %v449
    %v1630 = vunpack.c.h.b16 %v449
    %v1631 = vunpack.c.l.b16 %v450
    %v1632 = vunpack.c.h.b16 %v450
    %v1633 = vunpack.c.l.b16 %v451
    %v1634 = vunpack.c.h.b16 %v451
    %v1635 = vunpack.c.l.b16 %v452
    %v1636 = vunpack.c.h.b16 %v452
    %v1637 = vunpack.c.l.b16 %v453
    %v1638 = vunpack.c.h.b16 %v453
    %v1639 = vunpack.c.l.b16 %v454
    %v1640 = vunpack.c.h.b16 %v454
    %v1641 = vunpack.c.l.b16 %v455
    %v1642 = vunpack.c.h.b16 %v455
    %v1643 = vunpack.c.l.b16 %v456
    %v1644 = vunpack.c.h.b16 %v456
    %v1645 = vunpack.c.l.b16 %v457
    %v1646 = vunpack.c.h.b16 %v457
    %v1647 = vunpack.c.l.b16 %v458
    %v1648 = vunpack.c.h.b16 %v458
    %v1649 = vunpack.c.l.b16 %v459
    %v1650 = vunpack.c.h.b16 %v459
    %v1651 = vunpack.c.l.b16 %v460
    %v1652 = vunpack.c.h.b16 %v460
    %v1653 = vunpack.c.l.b16 %v461
    %v1654 = vunpack.c.h.b16 %v461
    %v1655 = vunpack.c.l.b16 %v462
    %v1656 = vunpack.c.h.b16 %v462
    %v1657 = vunpack.c.l.b16 %v463
    %v1658 = vunpack.c.h.b16 %v463
    %v1659 = vunpack.c.l.b16 %v464
    %v1660 = vunpack.c.h.b16 %v464
    %v1661 = vunpack.c.l.b16 %v465
    %v1662 = vunpack.c.h.b16 %v465
    %v1663 = vunpack.c.l.b16 %v466
    %v1664 = vunpack.c.h.b16 %v466
    %v1665 = vunpack.c.l.b16 %v467
    %v1666 = vunpack.c.h.b16 %v467
    %v1667 = vunpack.c.l.b16 %v468
    %v1668 = vunpack.c.h.b16 %v468
    %v1669 = vunpack.c.l.b16 %v469
    %v1670 = vunpack.c.h.b16 %v469
    %v1671 = vunpack.c.l.b16 %v470
    %v1672 = vunpack.c.h.b16 %v470
    %v1673 = vunpack.c.l.b16 %v471
    %v1674 = vunpack.c.h.b16 %v471
    %v1675 = vunpack.c.l.b16 %v472
    %v1676 = vunpack.c.h.b16 %v472
    %v1677 = vunpack.c.l.b16 %v473
    %v1678 = vunpack.c.h.b16 %v473
    %v1679 = vunpack.c.l.b16 %v474
    %v1680 = vunpack.c.h.b16 %v474
    %v1681 = vunpack.c.l.b16 %v475
    %v1682 = vunpack.c.h.b16 %v475
    %v1683 = vunpack.c.l.b16 %v476
    %v1684 = vunpack.c.h.b16 %v476
    %v1685 = vunpack.c.l.b16 %v477
    %v1686 = vunpack.c.h.b16 %v477
    %v1687 = vunpack.c.l.b16 %v478
    %v1688 = vunpack.c.h.b16 %v478
    %v1689 = vpack.c.b16 %v927, %v921
    %v1690 = vpack.c.b16 %v928, %v922
    %v1691 = vpack.c.b16 %v929, %v923
    %v1692 = vpack.c.b16 %v930, %v924
    %v1693 = vpack.c.b16 %v931, %v925
    %v1694 = vpack.c.b16 %v932, %v926
    %v1695 = vpack.c.b16 %v939, %v933
    %v1696 = vpack.c.b16 %v940, %v934
    %v1697 = vpack.c.b16 %v941, %v935
    %v1698 = vpack.c.b16 %v942, %v936
    %v1699 = vpack.c.b16 %v943, %v937
    %v1700 = vpack.c.b16 %v944, %v938
    %v1701 = vpack.c.b16 %v951, %v945
    %v1702 = vpack.c.b16 %v952, %v946
    %v1703 = vpack.c.b16 %v953, %v947
    %v1704 = vpack.c.b16 %v954, %v948
    %v1705 = vpack.c.b16 %v955, %v949
    %v1706 = vpack.c.b16 %v956, %v950
    %v1707 = vpack.c.b16 %v963, %v957
    %v1708 = vpack.c.b16 %v964, %v958
    %v1709 = vpack.c.b16 %v965, %v959
    %v1710 = vpack.c.b16 %v966, %v960
    %v1711 = vpack.c.b16 %v967, %v961
    %v1712 = vpack.c.b16 %v968, %v962
    %v1713 = vpack.c.b16 %v975, %v969
    %v1714 = vpack.c.b16 %v976, %v970
    %v1715 = vpack.c.b16 %v977, %v971
    %v1716 = vpack.c.b16 %v978, %v972
    %v1717 = vpack.c.b16 %v979, %v973
    %v1718 = vpack.c.b16 %v980, %v974
    %v1719 = vpack.c.b16 %v987, %v981
    %v1720 = vpack.c.b16 %v988, %v982
    %v1721 = vpack.c.b16 %v989, %v983
    %v1722 = vpack.c.b16 %v990, %v984
    %v1723 = vpack.c.b16 %v991, %v985
    %v1724 = vpack.c.b16 %v992, %v986
    %v1725 = vpack.c.b16 %v999, %v993
    %v1726 = vpack.c.b16 %v1000, %v994
    %v1727 = vpack.c.b16 %v1001, %v995
    %v1728 = vpack.c.b16 %v1002, %v996
    %v1729 = vpack.c.b16 %v1003, %v997
    %v1730 = vpack.c.b16 %v1004, %v998
    %v1731 = vpack.c.b16 %v1011, %v1005
    %v1732 = vpack.c.b16 %v1012, %v1006
    %v1733 = vpack.c.b16 %v1013, %v1007
    %v1734 = vpack.c.b16 %v1014, %v1008
    %v1735 = vpack.c.b16 %v1015, %v1009
    %v1736 = vpack.c.b16 %v1016, %v1010
    %v1737 = vpack.c.b16 %v1023, %v1017
    %v1738 = vpack.c.b16 %v1024, %v1018
    %v1739 = vpack.c.b16 %v1025, %v1019
    %v1740 = vpack.c.b16 %v1026, %v1020
    %v1741 = vpack.c.b16 %v1027, %v1021
    %v1742 = vpack.c.b16 %v1028, %v1022
    %v1743 = vpack.c.b16 %v1035, %v1029
    %v1744 = vpack.c.b16 %v1036, %v1030
    %v1745 = vpack.c.b16 %v1037, %v1031
    %v1746 = vpack.c.b16 %v1038, %v1032
    %v1747 = vpack.c.b16 %v1039, %v1033
    %v1748 = vpack.c.b16 %v1040, %v1034
    %v1749 = vpack.c.b16 %v1047, %v1041
    %v1750 = vpack.c.b16 %v1048, %v1042
    %v1751 = vpack.c.b16 %v1049, %v1043
    %v1752 = vpack.c.b16 %v1050, %v1044
    %v1753 = vpack.c.b16 %v1051, %v1045
    %v1754 = vpack.c.b16 %v1052, %v1046
    %v1755 = vpack.c.b16 %v1059, %v1053
    %v1756 = vpack.c.b16 %v1060, %v1054
    %v1757 = vpack.c.b16 %v1061, %v1055
    %v1758 = vpack.c.b16 %v1062, %v1056
    %v1759 = vpack.c.b16 %v1063, %v1057
    %v1760 = vpack.c.b16 %v1064, %v1058
    %v1761 = vpack.c.b16 %v1071, %v1065
    %v1762 = vpack.c.b16 %v1072, %v1066
    %v1763 = vpack.c.b16 %v1073, %v1067
    %v1764 = vpack.c.b16 %v1074, %v1068
    %v1765 = vpack.c.b16 %v1075, %v1069
    %v1766 = vpack.c.b16 %v1076, %v1070
    %v1767 = vpack.c.b16 %v1083, %v1077
    %v1768 = vpack.c.b16 %v1084, %v1078
    %v1769 = vpack.c.b16 %v1085, %v1079
    %v1770 = vpack.c.b16 %v1086, %v1080
    %v1771 = vpack.c.b16 %v1087, %v1081
    %v1772 = vpack.c.b16 %v1088, %v1082
    %v1773 = vpack.c.b16 %v1095, %v1089
    %v1774 = vpack.c.b16 %v1096, %v1090
    %v1775 = vpack.c.b16 %v1097, %v1091
    %v1776 = vpack.c.b16 %v1098, %v1092
    %v1777 = vpack.c.b16 %v1099, %v1093
    %v1778 = vpack.c.b16 %v1100, %v1094
    %v1779 = vpack.c.b16 %v1107, %v1101
    %v1780 = vpack.c.b16 %v1108, %v1102
    %v1781 = vpack.c.b16 %v1109, %v1103
    %v1782 = vpack.c.b16 %v1110, %v1104
    %v1783 = vpack.c.b16 %v1111, %v1105
    %v1784 = vpack.c.b16 %v1112, %v1106
    %v1785 = vpack.c.b16 %v1119, %v1113
    %v1786 = vpack.c.b16 %v1120, %v1114
    %v1787 = vpack.c.b16 %v1121, %v1115
    %v1788 = vpack.c.b16 %v1122, %v1116
    %v1789 = vpack.c.b16 %v1123, %v1117
    %v1790 = vpack.c.b16 %v1124, %v1118
    %v1791 = vpack.c.b16 %v1131, %v1125
    %v1792 = vpack.c.b16 %v1132, %v1126
    %v1793 = vpack.c.b16 %v1133, %v1127
    %v1794 = vpack.c.b16 %v1134, %v1128
    %v1795 = vpack.c.b16 %v1135, %v1129
    %v1796 = vpack.c.b16 %v1136, %v1130
    %v1797 = vpack.c.b16 %v1143, %v1137
    %v1798 = vpack.c.b16 %v1144, %v1138
    %v1799 = vpack.c.b16 %v1145, %v1139
    %v1800 = vpack.c.b16 %v1146, %v1140
    %v1801 = vpack.c.b16 %v1147, %v1141
    %v1802 = vpack.c.b16 %v1148, %v1142
    %v1803 = vpack.c.b16 %v1155, %v1149
    %v1804 = vpack.c.b16 %v1156, %v1150
    %v1805 = vpack.c.b16 %v1157, %v1151
    %v1806 = vpack.c.b16 %v1158, %v1152
    %v1807 = vpack.c.b16 %v1159, %v1153
    %v1808 = vpack.c.b16 %v1160, %v1154
    %v1809 = vpack.c.b16 %v1167, %v1161
    %v1810 = vpack.c.b16 %v1168, %v1162
    %v1811 = vpack.c.b16 %v1169, %v1163
    %v1812 = vpack.c.b16 %v1170, %v1164
    %v1813 = vpack.c.b16 %v1171, %v1165
    %v1814 = vpack.c.b16 %v1172, %v1166
    %v1815 = vpack.c.b16 %v1179, %v1173
    %v1816 = vpack.c.b16 %v1180, %v1174
    %v1817 = vpack.c.b16 %v1181, %v1175
    %v1818 = vpack.c.b16 %v1182, %v1176
    %v1819 = vpack.c.b16 %v1183, %v1177
    %v1820 = vpack.c.b16 %v1184, %v1178
    %v1821 = vpack.c.b16 %v1191, %v1185
    %v1822 = vpack.c.b16 %v1192, %v1186
    %v1823 = vpack.c.b16 %v1193, %v1187
    %v1824 = vpack.c.b16 %v1194, %v1188
    %v1825 = vpack.c.b16 %v1195, %v1189
    %v1826 = vpack.c.b16 %v1196, %v1190
    %v1827 = vpack.c.b16 %v1203, %v1197
    %v1828 = vpack.c.b16 %v1204, %v1198
    %v1829 = vpack.c.b16 %v1205, %v1199
    %v1830 = vpack.c.b16 %v1206, %v1200
    %v1831 = vpack.c.b16 %v1207, %v1201
    %v1832 = vpack.c.b16 %v1208, %v1202
    %v1833 = vpack.c.b16 %v1215, %v1209
    %v1834 = vpack.c.b16 %v1216, %v1210
    %v1835 = vpack.c.b16 %v1217, %v1211
    %v1836 = vpack.c.b16 %v1218, %v1212
    %v1837 = vpack.c.b16 %v1219, %v1213
    %v1838 = vpack.c.b16 %v1220, %v1214
    %v1839 = vpack.c.b16 %v1227, %v1221
    %v1840 = vpack.c.b16 %v1228, %v1222
    %v1841 = vpack.c.b16 %v1229, %v1223
    %v1842 = vpack.c.b16 %v1230, %v1224
    %v1843 = vpack.c.b16 %v1231, %v1225
    %v1844 = vpack.c.b16 %v1232, %v1226
    %v1845 = vpack.c.b16 %v1239, %v1233
    %v1846 = vpack.c.b16 %v1240, %v1234
    %v1847 = vpack.c.b16 %v1241, %v1235
    %v1848 = vpack.c.b16 %v1242, %v1236
    %v1849 = vpack.c.b16 %v1243, %v1237
    %v1850 = vpack.c.b16 %v1244, %v1238
    %v1851 = vpack.c.b16 %v1251, %v1245
    %v1852 = vpack.c.b16 %v1252, %v1246
    %v1853 = vpack.c.b16 %v1253, %v1247
    %v1854 = vpack.c.b16 %v1254, %v1248
    %v1855 = vpack.c.b16 %v1255, %v1249
    %v1856 = vpack.c.b16 %v1256, %v1250
    %v1857 = vpack.c.b16 %v1263, %v1257
    %v1858 = vpack.c.b16 %v1264, %v1258
    %v1859 = vpack.c.b16 %v1265, %v1259
    %v1860 = vpack.c.b16 %v1266, %v1260
    %v1861 = vpack.c.b16 %v1267, %v1261
    %v1862 = vpack.c.b16 %v1268, %v1262
    %v1863 = vpack.c.b16 %v1275, %v1269
    %v1864 = vpack.c.b16 %v1276, %v1270
    %v1865 = vpack.c.b16 %v1277, %v1271
    %v1866 = vpack.c.b16 %v1278, %v1272
    %v1867 = vpack.c.b16 %v1279, %v1273
    %v1868 = vpack.c.b16 %v1280, %v1274
    %v1869 = vpack.c.b16 %v1287, %v1281
    %v1870 = vpack.c.b16 %v1288, %v1282
    %v1871 = vpack.c.b16 %v1289, %v1283
    %v1872 = vpack.c.b16 %v1290, %v1284
    %v1873 = vpack.c.b16 %v1291, %v1285
    %v1874 = vpack.c.b16 %v1292, %v1286
    %v1875 = vpack.c.b16 %v1299, %v1293
    %v1876 = vpack.c.b16 %v1300, %v1294
    %v1877 = vpack.c.b16 %v1301, %v1295
    %v1878 = vpack.c.b16 %v1302, %v1296
    %v1879 = vpack.c.b16 %v1303, %v1297
    %v1880 = vpack.c.b16 %v1304, %v1298
    %v1881 = vpack.c.b16 %v1311, %v1305
    %v1882 = vpack.c.b16 %v1312, %v1306
    %v1883 = vpack.c.b16 %v1313, %v1307
    %v1884 = vpack.c.b16 %v1314, %v1308
    %v1885 = vpack.c.b16 %v1315, %v1309
    %v1886 = vpack.c.b16 %v1316, %v1310
    %v1887 = vpack.c.b16 %v1323, %v1317
    %v1888 = vpack.c.b16 %v1324, %v1318
    %v1889 = vpack.c.b16 %v1325, %v1319
    %v1890 = vpack.c.b16 %v1326, %v1320
    %v1891 = vpack.c.b16 %v1327, %v1321
    %v1892 = vpack.c.b16 %v1328, %v1322
    %v1893 = vpack.c.b16 %v1335, %v1329
    %v1894 = vpack.c.b16 %v1336, %v1330
    %v1895 = vpack.c.b16 %v1337, %v1331
    %v1896 = vpack.c.b16 %v1338, %v1332
    %v1897 = vpack.c.b16 %v1339, %v1333
    %v1898 = vpack.c.b16 %v1340, %v1334
    %v1899 = vpack.c.b16 %v1347, %v1341
    %v1900 = vpack.c.b16 %v1348, %v1342
    %v1901 = vpack.c.b16 %v1349, %v1343
    %v1902 = vpack.c.b16 %v1350, %v1344
    %v1903 = vpack.c.b16 %v1351, %v1345
    %v1904 = vpack.c.b16 %v1352, %v1346
    %v1905 = vpack.c.b16 %v1359, %v1353
    %v1906 = vpack.c.b16 %v1360, %v1354
    %v1907 = vpack.c.b16 %v1361, %v1355
    %v1908 = vpack.c.b16 %v1362, %v1356
    %v1909 = vpack.c.b16 %v1363, %v1357
    %v1910 = vpack.c.b16 %v1364, %v1358
    %v1911 = vpack.c.b16 %v1371, %v1365
    %v1912 = vpack.c.b16 %v1372, %v1366
    %v1913 = vpack.c.b16 %v1373, %v1367
    %v1914 = vpack.c.b16 %v1374, %v1368
    %v1915 = vpack.c.b16 %v1375, %v1369
    %v1916 = vpack.c.b16 %v1376, %v1370
    %v1917 = vpack.c.b16 %v1383, %v1377
    %v1918 = vpack.c.b16 %v1384, %v1378
    %v1919 = vpack.c.b16 %v1385, %v1379
    %v1920 = vpack.c.b16 %v1386, %v1380
    %v1921 = vpack.c.b16 %v1387, %v1381
    %v1922 = vpack.c.b16 %v1388, %v1382
    %v1923 = vpack.c.b16 %v1395, %v1389
    %v1924 = vpack.c.b16 %v1396, %v1390
    %v1925 = vpack.c.b16 %v1397, %v1391
    %v1926 = vpack.c.b16 %v1398, %v1392
    %v1927 = vpack.c.b16 %v1399, %v1393
    %v1928 = vpack.c.b16 %v1400, %v1394
    %v1929 = vpack.c.b16 %v1407, %v1401
    %v1930 = vpack.c.b16 %v1408, %v1402
    %v1931 = vpack.c.b16 %v1409, %v1403
    %v1932 = vpack.c.b16 %v1410, %v1404
    %v1933 = vpack.c.b16 %v1411, %v1405
    %v1934 = vpack.c.b16 %v1412, %v1406
    %v1935 = vpack.c.b16 %v1419, %v1413
    %v1936 = vpack.c.b16 %v1420, %v1414
    %v1937 = vpack.c.b16 %v1421, %v1415
    %v1938 = vpack.c.b16 %v1422, %v1416
    %v1939 = vpack.c.b16 %v1423, %v1417
    %v1940 = vpack.c.b16 %v1424, %v1418
    %v1941 = vpack.c.b16 %v1431, %v1425
    %v1942 = vpack.c.b16 %v1432, %v1426
    %v1943 = vpack.c.b16 %v1433, %v1427
    %v1944 = vpack.c.b16 %v1434, %v1428
    %v1945 = vpack.c.b16 %v1435, %v1429
    %v1946 = vpack.c.b16 %v1436, %v1430
    %v1947 = vpack.c.b16 %v1443, %v1437
    %v1948 = vpack.c.b16 %v1444, %v1438
    %v1949 = vpack.c.b16 %v1445, %v1439
    %v1950 = vpack.c.b16 %v1446, %v1440
    %v1951 = vpack.c.b16 %v1447, %v1441
    %v1952 = vpack.c.b16 %v1448, %v1442
    %v1953 = vpack.c.b16 %v1455, %v1449
    %v1954 = vpack.c.b16 %v1456, %v1450
    %v1955 = vpack.c.b16 %v1457, %v1451
    %v1956 = vpack.c.b16 %v1458, %v1452
    %v1957 = vpack.c.b16 %v1459, %v1453
    %v1958 = vpack.c.b16 %v1460, %v1454
    %v1959 = vpack.c.b16 %v1467, %v1461
    %v1960 = vpack.c.b16 %v1468, %v1462
    %v1961 = vpack.c.b16 %v1469, %v1463
    %v1962 = vpack.c.b16 %v1470, %v1464
    %v1963 = vpack.c.b16 %v1471, %v1465
    %v1964 = vpack.c.b16 %v1472, %v1466
    %v1965 = vpack.c.b16 %v1479, %v1473
    %v1966 = vpack.c.b16 %v1480, %v1474
    %v1967 = vpack.c.b16 %v1481, %v1475
    %v1968 = vpack.c.b16 %v1482, %v1476
    %v1969 = vpack.c.b16 %v1483, %v1477
    %v1970 = vpack.c.b16 %v1484, %v1478
    %v1971 = vpack.c.b16 %v1491, %v1485
    %v1972 = vpack.c.b16 %v1492, %v1486
    %v1973 = vpack.c.b16 %v1493, %v1487
    %v1974 = vpack.c.b16 %v1494, %v1488
    %v1975 = vpack.c.b16 %v1495, %v1489
    %v1976 = vpack.c.b16 %v1496, %v1490
    %v1977 = vpack.c.b16 %v1503, %v1497
    %v1978 = vpack.c.b16 %v1504, %v1498
    %v1979 = vpack.c.b16 %v1505, %v1499
    %v1980 = vpack.c.b16 %v1506, %v1500
    %v1981 = vpack.c.b16 %v1507, %v1501
    %v1982 = vpack.c.b16 %v1508, %v1502
    %v1983 = vpack.c.b16 %v1515, %v1509
    %v1984 = vpack.c.b16 %v1516, %v1510
    %v1985 = vpack.c.b16 %v1517, %v1511
    %v1986 = vpack.c.b16 %v1518, %v1512
    %v1987 = vpack.c.b16 %v1519, %v1513
    %v1988 = vpack.c.b16 %v1520, %v1514
    %v1989 = vpack.c.b16 %v1527, %v1521
    %v1990 = vpack.c.b16 %v1528, %v1522
    %v1991 = vpack.c.b16 %v1529, %v1523
    %v1992 = vpack.c.b16 %v1530, %v1524
    %v1993 = vpack.c.b16 %v1531, %v1525
    %v1994 = vpack.c.b16 %v1532, %v1526
    %v1995 = vpack.c.b16 %v1539, %v1533
    %v1996 = vpack.c.b16 %v1540, %v1534
    %v1997 = vpack.c.b16 %v1541, %v1535
    %v1998 = vpack.c.b16 %v1542, %v1536
    %v1999 = vpack.c.b16 %v1543, %v1537
    %v2000 = vpack.c.b16 %v1544, %v1538
    %v2001 = vpack.c.b16 %v1551, %v1545
    %v2002 = vpack.c.b16 %v1552, %v1546
    %v2003 = vpack.c.b16 %v1553, %v1547
    %v2004 = vpack.c.b16 %v1554, %v1548
    %v2005 = vpack.c.b16 %v1555, %v1549
    %v2006 = vpack.c.b16 %v1556, %v1550
    %v2007 = vpack.c.b16 %v1563, %v1557
    %v2008 = vpack.c.b16 %v1564, %v1558
    %v2009 = vpack.c.b16 %v1565, %v1559
    %v2010 = vpack.c.b16 %v1566, %v1560
    %v2011 = vpack.c.b16 %v1567, %v1561
    %v2012 = vpack.c.b16 %v1568, %v1562
    %v2013 = vpack.c.b16 %v1575, %v1569
    %v2014 = vpack.c.b16 %v1576, %v1570
    %v2015 = vpack.c.b16 %v1577, %v1571
    %v2016 = vpack.c.b16 %v1578, %v1572
    %v2017 = vpack.c.b16 %v1579, %v1573
    %v2018 = vpack.c.b16 %v1580, %v1574
    %v2019 = vpack.c.b16 %v1587, %v1581
    %v2020 = vpack.c.b16 %v1588, %v1582
    %v2021 = vpack.c.b16 %v1589, %v1583
    %v2022 = vpack.c.b16 %v1590, %v1584
    %v2023 = vpack.c.b16 %v1591, %v1585
    %v2024 = vpack.c.b16 %v1592, %v1586
    %v2025 = vpack.c.b16 %v1599, %v1593
    %v2026 = vpack.c.b16 %v1600, %v1594
    %v2027 = vpack.c.b16 %v1601, %v1595
    %v2028 = vpack.c.b16 %v1602, %v1596
    %v2029 = vpack.c.b16 %v1603, %v1597
    %v2030 = vpack.c.b16 %v1604, %v1598
    %v2031 = vpack.c.b16 %v1611, %v1605
    %v2032 = vpack.c.b16 %v1612, %v1606
    %v2033 = vpack.c.b16 %v1613, %v1607
    %v2034 = vpack.c.b16 %v1614, %v1608
    %v2035 = vpack.c.b16 %v1615, %v1609
    %v2036 = vpack.c.b16 %v1616, %v1610
    %v2037 = vpack.c.b16 %v1623, %v1617
    %v2038 = vpack.c.b16 %v1624, %v1618
    %v2039 = vpack.c.b16 %v1625, %v1619
    %v2040 = vpack.c.b16 %v1626, %v1620
    %v2041 = vpack.c.b16 %v1627, %v1621
    %v2042 = vpack.c.b16 %v1628, %v1622
    %v2043 = vpack.c.b16 %v1635, %v1629
    %v2044 = vpack.c.b16 %v1636, %v1630
    %v2045 = vpack.c.b16 %v1637, %v1631
    %v2046 = vpack.c.b16 %v1638, %v1632
    %v2047 = vpack.c.b16 %v1639, %v1633
    %v2048 = vpack.c.b16 %v1640, %v1634
    %v2049 = vpack.c.b16 %v1647, %v1641
    %v2050 = vpack.c.b16 %v1648, %v1642
    %v2051 = vpack.c.b16 %v1649, %v1643
    %v2052 = vpack.c.b16 %v1650, %v1644
    %v2053 = vpack.c.b16 %v1651, %v1645
    %v2054 = vpack.c.b16 %v1652, %v1646
    %v2055 = vpack.c.b16 %v1659, %v1653
    %v2056 = vpack.c.b16 %v1660, %v1654
    %v2057 = vpack.c.b16 %v1661, %v1655
    %v2058 = vpack.c.b16 %v1662, %v1656
    %v2059 = vpack.c.b16 %v1663, %v1657
    %v2060 = vpack.c.b16 %v1664, %v1658
    %v2061 = vpack.c.b16 %v1671, %v1665
    %v2062 = vpack.c.b16 %v1672, %v1666
    %v2063 = vpack.c.b16 %v1673, %v1667
    %v2064 = vpack.c.b16 %v1674, %v1668
    %v2065 = vpack.c.b16 %v1675, %v1669
    %v2066 = vpack.c.b16 %v1676, %v1670
    %v2067 = vpack.c.b16 %v1683, %v1677
    %v2068 = vpack.c.b16 %v1684, %v1678
    %v2069 = vpack.c.b16 %v1685, %v1679
    %v2070 = vpack.c.b16 %v1686, %v1680
    %v2071 = vpack.c.b16 %v1687, %v1681
    %v2072 = vpack.c.b16 %v1688, %v1682
    %2457 = vmatprep.subr.bf16.mxu0 %v1690
    %2458 = vmatpush1.bf16.msra.mxu0 %v1689
    %2459 = vmatprep.subr.bf16.mxu0 %v1696
    %2460 = vmatpush1.bf16.msra.mxu0 %v1695
    %2461 = vmatprep.subr.bf16.mxu0 %v1702
    %2462 = vmatpush1.bf16.msra.mxu0 %v1701
    %2463 = vmatprep.subr.bf16.mxu0 %v1708
    %2464 = vmatpush1.bf16.msra.mxu0 %v1707
    %2465 = vmatprep.subr.bf16.mxu0 %v1714
    %2466 = vmatpush1.bf16.msra.mxu0 %v1713
    %2467 = vmatprep.subr.bf16.mxu0 %v1720
    %2468 = vmatpush1.bf16.msra.mxu0 %v1719
    %2469 = vmatprep.subr.bf16.mxu0 %v1726
    %2470 = vmatpush1.bf16.msra.mxu0 %v1725
    %2471 = vmatprep.subr.bf16.mxu0 %v1732
    %2472 = vmatpush1.bf16.msra.mxu0 %v1731
    %2473 = vmatprep.subr.bf16.mxu0 %v1738
    %2474 = vmatpush1.bf16.msra.mxu0 %v1737
    %2475 = vmatprep.subr.bf16.mxu0 %v1744
    %2476 = vmatpush1.bf16.msra.mxu0 %v1743
    %2477 = vmatprep.subr.bf16.mxu0 %v1750
    %2478 = vmatpush1.bf16.msra.mxu0 %v1749
    %2479 = vmatprep.subr.bf16.mxu0 %v1756
    %2480 = vmatpush1.bf16.msra.mxu0 %v1755
    %2481 = vmatprep.subr.bf16.mxu0 %v1762
    %2482 = vmatpush1.bf16.msra.mxu0 %v1761
    %2483 = vmatprep.subr.bf16.mxu0 %v1768
    %2484 = vmatpush1.bf16.msra.mxu0 %v1767
    %2485 = vmatprep.subr.bf16.mxu0 %v1774
    %2486 = vmatpush1.bf16.msra.mxu0 %v1773
    %2487 = vmatprep.subr.bf16.mxu0 %v1780
    %2488 = vmatpush1.bf16.msra.mxu0 %v1779
    %2489 = vmatprep.mubr.bf16.mxu0 %v517
    %2490 = vmatmul.mubr.bf16.gmra.mrb[0].mxu0 %v503
    %v2491 = vpop.f32.mrb[0].mxu0
    %v2492 = vadd.f32 0.0, %v2491
    %v2493 = vpop.f32.mrb[0].mxu0
    %v2494 = vadd.f32 0.0, %v2493
    %v2495 = vpop.f32.mrb[0].mxu0
    %v2496 = vpop.f32.mrb[0].mxu0
    %2497 = vdwg.mxu0
    %2498 = vmatprep.subr.bf16.mxu0 %v1786
    %2499 = vmatpush1.bf16.msra.mxu0 %v1785
    %2500 = vmatprep.subr.bf16.mxu0 %v1792
    %2501 = vmatpush1.bf16.msra.mxu0 %v1791
    %2502 = vmatprep.subr.bf16.mxu0 %v1798
    %2503 = vmatpush1.bf16.msra.mxu0 %v1797
    %2504 = vmatprep.subr.bf16.mxu0 %v1804
    %2505 = vmatpush1.bf16.msra.mxu0 %v1803
    %2506 = vmatprep.subr.bf16.mxu0 %v1810
    %2507 = vmatpush1.bf16.msra.mxu0 %v1809
    %2508 = vmatprep.subr.bf16.mxu0 %v1816
    %2509 = vmatpush1.bf16.msra.mxu0 %v1815
    %2510 = vmatprep.subr.bf16.mxu0 %v1822
    %2511 = vmatpush1.bf16.msra.mxu0 %v1821
    %2512 = vmatprep.subr.bf16.mxu0 %v1828
    %2513 = vmatpush1.bf16.msra.mxu0 %v1827
    %2514 = vmatprep.subr.bf16.mxu0 %v1834
    %2515 = vmatpush1.bf16.msra.mxu0 %v1833
    %2516 = vmatprep.subr.bf16.mxu0 %v1840
    %2517 = vmatpush1.bf16.msra.mxu0 %v1839
    %2518 = vmatprep.subr.bf16.mxu0 %v1846
    %2519 = vmatpush1.bf16.msra.mxu0 %v1845
    %2520 = vmatprep.subr.bf16.mxu0 %v1852
    %2521 = vmatpush1.bf16.msra.mxu0 %v1851
    %2522 = vmatprep.subr.bf16.mxu0 %v1858
    %2523 = vmatpush1.bf16.msra.mxu0 %v1857
    %2524 = vmatprep.subr.bf16.mxu0 %v1864
    %2525 = vmatpush1.bf16.msra.mxu0 %v1863
    %2526 = vmatprep.subr.bf16.mxu0 %v1870
    %2527 = vmatpush1.bf16.msra.mxu0 %v1869
    %2528 = vmatprep.subr.bf16.mxu0 %v1876
    %2529 = vmatpush1.bf16.msra.mxu0 %v1875
    %2530 = vmatprep.mubr.bf16.mxu0 %v527
    %2531 = vmatmul.mubr.bf16.gmra.mrb[0].mxu0 %v525
    %v2532 = vpop.f32.mrb[0].mxu0
    %v2533 = vadd.f32 %v2492, %v2532
    %v2534 = vpop.f32.mrb[0].mxu0
    %v2535 = vadd.f32 %v2494, %v2534
    %v2536 = vpop.f32.mrb[0].mxu0
    %v2537 = vpop.f32.mrb[0].mxu0
    %2538 = vdwg.mxu0
    %2539 = vmatprep.subr.bf16.mxu0 %v1882
    %2540 = vmatpush1.bf16.msra.mxu0 %v1881
    %2541 = vmatprep.subr.bf16.mxu0 %v1888
    %2542 = vmatpush1.bf16.msra.mxu0 %v1887
    %2543 = vmatprep.subr.bf16.mxu0 %v1894
    %2544 = vmatpush1.bf16.msra.mxu0 %v1893
    %2545 = vmatprep.subr.bf16.mxu0 %v1900
    %2546 = vmatpush1.bf16.msra.mxu0 %v1899
    %2547 = vmatprep.subr.bf16.mxu0 %v1906
    %2548 = vmatpush1.bf16.msra.mxu0 %v1905
    %2549 = vmatprep.subr.bf16.mxu0 %v1912
    %2550 = vmatpush1.bf16.msra.mxu0 %v1911
    %2551 = vmatprep.subr.bf16.mxu0 %v1918
    %2552 = vmatpush1.bf16.msra.mxu0 %v1917
    %2553 = vmatprep.subr.bf16.mxu0 %v1924
    %2554 = vmatpush1.bf16.msra.mxu0 %v1923
    %2555 = vmatprep.subr.bf16.mxu0 %v1930
    %2556 = vmatpush1.bf16.msra.mxu0 %v1929
    %2557 = vmatprep.subr.bf16.mxu0 %v1936
    %2558 = vmatpush1.bf16.msra.mxu0 %v1935
    %2559 = vmatprep.subr.bf16.mxu0 %v1942
    %2560 = vmatpush1.bf16.msra.mxu0 %v1941
    %2561 = vmatprep.subr.bf16.mxu0 %v1948
    %2562 = vmatpush1.bf16.msra.mxu0 %v1947
    %2563 = vmatprep.subr.bf16.mxu0 %v1954
    %2564 = vmatpush1.bf16.msra.mxu0 %v1953
    %2565 = vmatprep.subr.bf16.mxu0 %v1960
    %2566 = vmatpush1.bf16.msra.mxu0 %v1959
    %2567 = vmatprep.subr.bf16.mxu0 %v1966
    %2568 = vmatpush1.bf16.msra.mxu0 %v1965
    %2569 = vmatprep.subr.bf16.mxu0 %v1972
    %2570 = vmatpush1.bf16.msra.mxu0 %v1971
    %2571 = vmatprep.mubr.bf16.mxu0 %v524
    %2572 = vmatmul.mubr.bf16.gmra.mrb[0].mxu0 %v510
    %v2573 = vpop.f32.mrb[0].mxu0
    %v2574 = vadd.f32 %v2533, %v2573
    %v2575 = vpop.f32.mrb[0].mxu0
    %v2576 = vadd.f32 %v2535, %v2575
    %v2577 = vpop.f32.mrb[0].mxu0
    %v2578 = vpop.f32.mrb[0].mxu0
    %2579 = vdwg.mxu0
    %2580 = vmatprep.subr.bf16.mxu0 %v1978
    %2581 = vmatpush1.bf16.msra.mxu0 %v1977
    %2582 = vmatprep.subr.bf16.mxu0 %v1984
    %2583 = vmatpush1.bf16.msra.mxu0 %v1983
    %2584 = vmatprep.subr.bf16.mxu0 %v1990
    %2585 = vmatpush1.bf16.msra.mxu0 %v1989
    %2586 = vmatprep.subr.bf16.mxu0 %v1996
    %2587 = vmatpush1.bf16.msra.mxu0 %v1995
    %2588 = vmatprep.subr.bf16.mxu0 %v2002
    %2589 = vmatpush1.bf16.msra.mxu0 %v2001
    %2590 = vmatprep.subr.bf16.mxu0 %v2008
    %2591 = vmatpush1.bf16.msra.mxu0 %v2007
    %2592 = vmatprep.subr.bf16.mxu0 %v2014
    %2593 = vmatpush1.bf16.msra.mxu0 %v2013
    %2594 = vmatprep.subr.bf16.mxu0 %v2020
    %2595 = vmatpush1.bf16.msra.mxu0 %v2019
    %2596 = vmatprep.subr.bf16.mxu0 %v2026
    %2597 = vmatpush1.bf16.msra.mxu0 %v2025
    %2598 = vmatprep.subr.bf16.mxu0 %v2032
    %2599 = vmatpush1.bf16.msra.mxu0 %v2031
    %2600 = vmatprep.subr.bf16.mxu0 %v2038
    %2601 = vmatpush1.bf16.msra.mxu0 %v2037
    %2602 = vmatprep.subr.bf16.mxu0 %v2044
    %2603 = vmatpush1.bf16.msra.mxu0 %v2043
    %2604 = vmatprep.subr.bf16.mxu0 %v2050
    %2605 = vmatpush1.bf16.msra.mxu0 %v2049
    %2606 = vmatprep.subr.bf16.mxu0 %v2056
    %2607 = vmatpush1.bf16.msra.mxu0 %v2055
    %2608 = vmatprep.subr.bf16.mxu0 %v2062
    %2609 = vmatpush1.bf16.msra.mxu0 %v2061
    %2610 = vmatprep.subr.bf16.mxu0 %v2068
    %2611 = vmatpush1.bf16.msra.mxu0 %v2067
    %2612 = vmatprep.mubr.bf16.mxu0 %v528
    %2613 = vmatmul.mubr.bf16.gmra.mrb[0].mxu0 %v526
    %v2614 = vpop.f32.mrb[0].mxu0
    %v2615 = vadd.f32 %v2574, %v2614
    %v2616 = vpop.f32.mrb[0].mxu0
    %v2617 = vadd.f32 %v2576, %v2616
    %v2618 = vpop.f32.mrb[0].mxu0
    %v2619 = vpop.f32.mrb[0].mxu0
    %2620 = vdwg.mxu0
    %2621 = vmatprep.subr.bf16.mxu0 %v1692
    %2622 = vmatpush1.bf16.msra.mxu0 %v1691
    %2623 = vmatprep.subr.bf16.mxu0 %v1698
    %2624 = vmatpush1.bf16.msra.mxu0 %v1697
    %2625 = vmatprep.subr.bf16.mxu0 %v1704
    %2626 = vmatpush1.bf16.msra.mxu0 %v1703
    %2627 = vmatprep.subr.bf16.mxu0 %v1710
    %2628 = vmatpush1.bf16.msra.mxu0 %v1709
    %2629 = vmatprep.subr.bf16.mxu0 %v1716
    %2630 = vmatpush1.bf16.msra.mxu0 %v1715
    %2631 = vmatprep.subr.bf16.mxu0 %v1722
    %2632 = vmatpush1.bf16.msra.mxu0 %v1721
    %2633 = vmatprep.subr.bf16.mxu0 %v1728
    %2634 = vmatpush1.bf16.msra.mxu0 %v1727
    %2635 = vmatprep.subr.bf16.mxu0 %v1734
    %2636 = vmatpush1.bf16.msra.mxu0 %v1733
    %2637 = vmatprep.subr.bf16.mxu0 %v1740
    %2638 = vmatpush1.bf16.msra.mxu0 %v1739
    %2639 = vmatprep.subr.bf16.mxu0 %v1746
    %2640 = vmatpush1.bf16.msra.mxu0 %v1745
    %2641 = vmatprep.subr.bf16.mxu0 %v1752
    %2642 = vmatpush1.bf16.msra.mxu0 %v1751
    %2643 = vmatprep.subr.bf16.mxu0 %v1758
    %2644 = vmatpush1.bf16.msra.mxu0 %v1757
    %2645 = vmatprep.subr.bf16.mxu0 %v1764
    %2646 = vmatpush1.bf16.msra.mxu0 %v1763
    %2647 = vmatprep.subr.bf16.mxu0 %v1770
    %2648 = vmatpush1.bf16.msra.mxu0 %v1769
    %2649 = vmatprep.subr.bf16.mxu0 %v1776
    %2650 = vmatpush1.bf16.msra.mxu0 %v1775
    %2651 = vmatprep.subr.bf16.mxu0 %v1782
    %2652 = vmatpush1.bf16.msra.mxu0 %v1781
    %2653 = vmatprep.mubr.bf16.mxu0 %v517
    %2654 = vmatmul.mubr.bf16.gmra.mrb[0].mxu0 %v503
    %v2655 = vpop.f32.mrb[0].mxu0
    %v2656 = vadd.f32 0.0, %v2655
    %v2657 = vpop.f32.mrb[0].mxu0
    %v2658 = vadd.f32 0.0, %v2657
    %v2659 = vpop.f32.mrb[0].mxu0
    %v2660 = vpop.f32.mrb[0].mxu0
    %2661 = vdwg.mxu0
    %2662 = vmatprep.subr.bf16.mxu0 %v1788
    %2663 = vmatpush1.bf16.msra.mxu0 %v1787
    %2664 = vmatprep.subr.bf16.mxu0 %v1794
    %2665 = vmatpush1.bf16.msra.mxu0 %v1793
    %2666 = vmatprep.subr.bf16.mxu0 %v1800
    %2667 = vmatpush1.bf16.msra.mxu0 %v1799
    %2668 = vmatprep.subr.bf16.mxu0 %v1806
    %2669 = vmatpush1.bf16.msra.mxu0 %v1805
    %2670 = vmatprep.subr.bf16.mxu0 %v1812
    %2671 = vmatpush1.bf16.msra.mxu0 %v1811
    %2672 = vmatprep.subr.bf16.mxu0 %v1818
    %2673 = vmatpush1.bf16.msra.mxu0 %v1817
    %2674 = vmatprep.subr.bf16.mxu0 %v1824
    %2675 = vmatpush1.bf16.msra.mxu0 %v1823
    %2676 = vmatprep.subr.bf16.mxu0 %v1830
    %2677 = vmatpush1.bf16.msra.mxu0 %v1829
    %2678 = vmatprep.subr.bf16.mxu0 %v1836
    %2679 = vmatpush1.bf16.msra.mxu0 %v1835
    %2680 = vmatprep.subr.bf16.mxu0 %v1842
    %2681 = vmatpush1.bf16.msra.mxu0 %v1841
    %2682 = vmatprep.subr.bf16.mxu0 %v1848
    %2683 = vmatpush1.bf16.msra.mxu0 %v1847
    %2684 = vmatprep.subr.bf16.mxu0 %v1854
    %2685 = vmatpush1.bf16.msra.mxu0 %v1853
    %2686 = vmatprep.subr.bf16.mxu0 %v1860
    %2687 = vmatpush1.bf16.msra.mxu0 %v1859
    %2688 = vmatprep.subr.bf16.mxu0 %v1866
    %2689 = vmatpush1.bf16.msra.mxu0 %v1865
    %2690 = vmatprep.subr.bf16.mxu0 %v1872
    %2691 = vmatpush1.bf16.msra.mxu0 %v1871
    %2692 = vmatprep.subr.bf16.mxu0 %v1878
    %2693 = vmatpush1.bf16.msra.mxu0 %v1877
    %2694 = vmatprep.mubr.bf16.mxu0 %v527
    %2695 = vmatmul.mubr.bf16.gmra.mrb[0].mxu0 %v525
    %v2696 = vpop.f32.mrb[0].mxu0
    %v2697 = vadd.f32 %v2656, %v2696
    %v2698 = vpop.f32.mrb[0].mxu0
    %v2699 = vadd.f32 %v2658, %v2698
    %v2700 = vpop.f32.mrb[0].mxu0
    %v2701 = vpop.f32.mrb[0].mxu0
    %2702 = vdwg.mxu0
    %2703 = vmatprep.subr.bf16.mxu0 %v1884
    %2704 = vmatpush1.bf16.msra.mxu0 %v1883
    %2705 = vmatprep.subr.bf16.mxu0 %v1890
    %2706 = vmatpush1.bf16.msra.mxu0 %v1889
    %2707 = vmatprep.subr.bf16.mxu0 %v1896
    %2708 = vmatpush1.bf16.msra.mxu0 %v1895
    %2709 = vmatprep.subr.bf16.mxu0 %v1902
    %2710 = vmatpush1.bf16.msra.mxu0 %v1901
    %2711 = vmatprep.subr.bf16.mxu0 %v1908
    %2712 = vmatpush1.bf16.msra.mxu0 %v1907
    %2713 = vmatprep.subr.bf16.mxu0 %v1914
    %2714 = vmatpush1.bf16.msra.mxu0 %v1913
    %2715 = vmatprep.subr.bf16.mxu0 %v1920
    %2716 = vmatpush1.bf16.msra.mxu0 %v1919
    %2717 = vmatprep.subr.bf16.mxu0 %v1926
    %2718 = vmatpush1.bf16.msra.mxu0 %v1925
    %2719 = vmatprep.subr.bf16.mxu0 %v1932
    %2720 = vmatpush1.bf16.msra.mxu0 %v1931
    %2721 = vmatprep.subr.bf16.mxu0 %v1938
    %2722 = vmatpush1.bf16.msra.mxu0 %v1937
    %2723 = vmatprep.subr.bf16.mxu0 %v1944
    %2724 = vmatpush1.bf16.msra.mxu0 %v1943
    %2725 = vmatprep.subr.bf16.mxu0 %v1950
    %2726 = vmatpush1.bf16.msra.mxu0 %v1949
    %2727 = vmatprep.subr.bf16.mxu0 %v1956
    %2728 = vmatpush1.bf16.msra.mxu0 %v1955
    %2729 = vmatprep.subr.bf16.mxu0 %v1962
    %2730 = vmatpush1.bf16.msra.mxu0 %v1961
    %2731 = vmatprep.subr.bf16.mxu0 %v1968
    %2732 = vmatpush1.bf16.msra.mxu0 %v1967
    %2733 = vmatprep.subr.bf16.mxu0 %v1974
    %2734 = vmatpush1.bf16.msra.mxu0 %v1973
    %2735 = vmatprep.mubr.bf16.mxu0 %v524
    %2736 = vmatmul.mubr.bf16.gmra.mrb[0].mxu0 %v510
    %v2737 = vpop.f32.mrb[0].mxu0
    %v2738 = vadd.f32 %v2697, %v2737
    %v2739 = vpop.f32.mrb[0].mxu0
    %v2740 = vadd.f32 %v2699, %v2739
    %v2741 = vpop.f32.mrb[0].mxu0
    %v2742 = vpop.f32.mrb[0].mxu0
    %2743 = vdwg.mxu0
    %2744 = vmatprep.subr.bf16.mxu0 %v1980
    %2745 = vmatpush1.bf16.msra.mxu0 %v1979
    %2746 = vmatprep.subr.bf16.mxu0 %v1986
    %2747 = vmatpush1.bf16.msra.mxu0 %v1985
    %2748 = vmatprep.subr.bf16.mxu0 %v1992
    %2749 = vmatpush1.bf16.msra.mxu0 %v1991
    %2750 = vmatprep.subr.bf16.mxu0 %v1998
    %2751 = vmatpush1.bf16.msra.mxu0 %v1997
    %2752 = vmatprep.subr.bf16.mxu0 %v2004
    %2753 = vmatpush1.bf16.msra.mxu0 %v2003
    %2754 = vmatprep.subr.bf16.mxu0 %v2010
    %2755 = vmatpush1.bf16.msra.mxu0 %v2009
    %2756 = vmatprep.subr.bf16.mxu0 %v2016
    %2757 = vmatpush1.bf16.msra.mxu0 %v2015
    %2758 = vmatprep.subr.bf16.mxu0 %v2022
    %2759 = vmatpush1.bf16.msra.mxu0 %v2021
    %2760 = vmatprep.subr.bf16.mxu0 %v2028
    %2761 = vmatpush1.bf16.msra.mxu0 %v2027
    %2762 = vmatprep.subr.bf16.mxu0 %v2034
    %2763 = vmatpush1.bf16.msra.mxu0 %v2033
    %2764 = vmatprep.subr.bf16.mxu0 %v2040
    %2765 = vmatpush1.bf16.msra.mxu0 %v2039
    %2766 = vmatprep.subr.bf16.mxu0 %v2046
    %2767 = vmatpush1.bf16.msra.mxu0 %v2045
    %2768 = vmatprep.subr.bf16.mxu0 %v2052
    %2769 = vmatpush1.bf16.msra.mxu0 %v2051
    %2770 = vmatprep.subr.bf16.mxu0 %v2058
    %2771 = vmatpush1.bf16.msra.mxu0 %v2057
    %2772 = vmatprep.subr.bf16.mxu0 %v2064
    %2773 = vmatpush1.bf16.msra.mxu0 %v2063
    %2774 = vmatprep.subr.bf16.mxu0 %v2070
    %2775 = vmatpush1.bf16.msra.mxu0 %v2069
    %2776 = vmatprep.mubr.bf16.mxu0 %v528
    %2777 = vmatmul.mubr.bf16.gmra.mrb[0].mxu0 %v526
    %v2778 = vpop.f32.mrb[0].mxu0
    %v2779 = vadd.f32 %v2738, %v2778
    %v2780 = vpop.f32.mrb[0].mxu0
    %v2781 = vadd.f32 %v2740, %v2780
    %v2782 = vpop.f32.mrb[0].mxu0
    %v2783 = vpop.f32.mrb[0].mxu0
    %2784 = vdwg.mxu0
    %2785 = vmatprep.subr.bf16.mxu0 %v1694
    %2786 = vmatpush1.bf16.msra.mxu0 %v1693
    %2787 = vmatprep.subr.bf16.mxu0 %v1700
    %2788 = vmatpush1.bf16.msra.mxu0 %v1699
    %2789 = vmatprep.subr.bf16.mxu0 %v1706
    %2790 = vmatpush1.bf16.msra.mxu0 %v1705
    %2791 = vmatprep.subr.bf16.mxu0 %v1712
    %2792 = vmatpush1.bf16.msra.mxu0 %v1711
    %2793 = vmatprep.subr.bf16.mxu0 %v1718
    %2794 = vmatpush1.bf16.msra.mxu0 %v1717
    %2795 = vmatprep.subr.bf16.mxu0 %v1724
    %2796 = vmatpush1.bf16.msra.mxu0 %v1723
    %2797 = vmatprep.subr.bf16.mxu0 %v1730
    %2798 = vmatpush1.bf16.msra.mxu0 %v1729
    %2799 = vmatprep.subr.bf16.mxu0 %v1736
    %2800 = vmatpush1.bf16.msra.mxu0 %v1735
    %2801 = vmatprep.subr.bf16.mxu0 %v1742
    %2802 = vmatpush1.bf16.msra.mxu0 %v1741
    %2803 = vmatprep.subr.bf16.mxu0 %v1748
    %2804 = vmatpush1.bf16.msra.mxu0 %v1747
    %2805 = vmatprep.subr.bf16.mxu0 %v1754
    %2806 = vmatpush1.bf16.msra.mxu0 %v1753
    %2807 = vmatprep.subr.bf16.mxu0 %v1760
    %2808 = vmatpush1.bf16.msra.mxu0 %v1759
    %2809 = vmatprep.subr.bf16.mxu0 %v1766
    %2810 = vmatpush1.bf16.msra.mxu0 %v1765
    %2811 = vmatprep.subr.bf16.mxu0 %v1772
    %2812 = vmatpush1.bf16.msra.mxu0 %v1771
    %2813 = vmatprep.subr.bf16.mxu0 %v1778
    %2814 = vmatpush1.bf16.msra.mxu0 %v1777
    %2815 = vmatprep.subr.bf16.mxu0 %v1784
    %2816 = vmatpush1.bf16.msra.mxu0 %v1783
    %2817 = vmatprep.mubr.bf16.mxu0 %v517
    %2818 = vmatmul.mubr.bf16.gmra.mrb[0].mxu0 %v503
    %v2819 = vpop.f32.mrb[0].mxu0
    %v2820 = vadd.f32 0.0, %v2819
    %v2821 = vpop.f32.mrb[0].mxu0
    %v2822 = vadd.f32 0.0, %v2821
    %v2823 = vpop.f32.mrb[0].mxu0
    %v2824 = vpop.f32.mrb[0].mxu0
    %2825 = vdwg.mxu0
    %2826 = vmatprep.subr.bf16.mxu0 %v1790
    %2827 = vmatpush1.bf16.msra.mxu0 %v1789
    %2828 = vmatprep.subr.bf16.mxu0 %v1796
    %2829 = vmatpush1.bf16.msra.mxu0 %v1795
    %2830 = vmatprep.subr.bf16.mxu0 %v1802
    %2831 = vmatpush1.bf16.msra.mxu0 %v1801
    %2832 = vmatprep.subr.bf16.mxu0 %v1808
    %2833 = vmatpush1.bf16.msra.mxu0 %v1807
    %2834 = vmatprep.subr.bf16.mxu0 %v1814
    %2835 = vmatpush1.bf16.msra.mxu0 %v1813
    %2836 = vmatprep.subr.bf16.mxu0 %v1820
    %2837 = vmatpush1.bf16.msra.mxu0 %v1819
    %2838 = vmatprep.subr.bf16.mxu0 %v1826
    %2839 = vmatpush1.bf16.msra.mxu0 %v1825
    %2840 = vmatprep.subr.bf16.mxu0 %v1832
    %2841 = vmatpush1.bf16.msra.mxu0 %v1831
    %2842 = vmatprep.subr.bf16.mxu0 %v1838
    %2843 = vmatpush1.bf16.msra.mxu0 %v1837
    %2844 = vmatprep.subr.bf16.mxu0 %v1844
    %2845 = vmatpush1.bf16.msra.mxu0 %v1843
    %2846 = vmatprep.subr.bf16.mxu0 %v1850
    %2847 = vmatpush1.bf16.msra.mxu0 %v1849
    %2848 = vmatprep.subr.bf16.mxu0 %v1856
    %2849 = vmatpush1.bf16.msra.mxu0 %v1855
    %2850 = vmatprep.subr.bf16.mxu0 %v1862
    %2851 = vmatpush1.bf16.msra.mxu0 %v1861
    %2852 = vmatprep.subr.bf16.mxu0 %v1868
    %2853 = vmatpush1.bf16.msra.mxu0 %v1867
    %2854 = vmatprep.subr.bf16.mxu0 %v1874
    %2855 = vmatpush1.bf16.msra.mxu0 %v1873
    %2856 = vmatprep.subr.bf16.mxu0 %v1880
    %2857 = vmatpush1.bf16.msra.mxu0 %v1879
    %2858 = vmatprep.mubr.bf16.mxu0 %v527
    %2859 = vmatmul.mubr.bf16.gmra.mrb[0].mxu0 %v525
    %v2860 = vpop.f32.mrb[0].mxu0
    %v2861 = vadd.f32 %v2820, %v2860
    %v2862 = vpop.f32.mrb[0].mxu0
    %v2863 = vadd.f32 %v2822, %v2862
    %v2864 = vpop.f32.mrb[0].mxu0
    %v2865 = vpop.f32.mrb[0].mxu0
    %2866 = vdwg.mxu0
    %2867 = vmatprep.subr.bf16.mxu0 %v1886
    %2868 = vmatpush1.bf16.msra.mxu0 %v1885
    %2869 = vmatprep.subr.bf16.mxu0 %v1892
    %2870 = vmatpush1.bf16.msra.mxu0 %v1891
    %2871 = vmatprep.subr.bf16.mxu0 %v1898
    %2872 = vmatpush1.bf16.msra.mxu0 %v1897
    %2873 = vmatprep.subr.bf16.mxu0 %v1904
    %2874 = vmatpush1.bf16.msra.mxu0 %v1903
    %2875 = vmatprep.subr.bf16.mxu0 %v1910
    %2876 = vmatpush1.bf16.msra.mxu0 %v1909
    %2877 = vmatprep.subr.bf16.mxu0 %v1916
    %2878 = vmatpush1.bf16.msra.mxu0 %v1915
    %2879 = vmatprep.subr.bf16.mxu0 %v1922
    %2880 = vmatpush1.bf16.msra.mxu0 %v1921
    %2881 = vmatprep.subr.bf16.mxu0 %v1928
    %2882 = vmatpush1.bf16.msra.mxu0 %v1927
    %2883 = vmatprep.subr.bf16.mxu0 %v1934
    %2884 = vmatpush1.bf16.msra.mxu0 %v1933
    %2885 = vmatprep.subr.bf16.mxu0 %v1940
    %2886 = vmatpush1.bf16.msra.mxu0 %v1939
    %2887 = vmatprep.subr.bf16.mxu0 %v1946
    %2888 = vmatpush1.bf16.msra.mxu0 %v1945
    %2889 = vmatprep.subr.bf16.mxu0 %v1952
    %2890 = vmatpush1.bf16.msra.mxu0 %v1951
    %2891 = vmatprep.subr.bf16.mxu0 %v1958
    %2892 = vmatpush1.bf16.msra.mxu0 %v1957
    %2893 = vmatprep.subr.bf16.mxu0 %v1964
    %2894 = vmatpush1.bf16.msra.mxu0 %v1963
    %2895 = vmatprep.subr.bf16.mxu0 %v1970
    %2896 = vmatpush1.bf16.msra.mxu0 %v1969
    %2897 = vmatprep.subr.bf16.mxu0 %v1976
    %2898 = vmatpush1.bf16.msra.mxu0 %v1975
    %2899 = vmatprep.mubr.bf16.mxu0 %v524
    %2900 = vmatmul.mubr.bf16.gmra.mrb[0].mxu0 %v510
    %v2901 = vpop.f32.mrb[0].mxu0
    %v2902 = vadd.f32 %v2861, %v2901
    %v2903 = vpop.f32.mrb[0].mxu0
    %v2904 = vadd.f32 %v2863, %v2903
    %v2905 = vpop.f32.mrb[0].mxu0
    %v2906 = vpop.f32.mrb[0].mxu0
    %2907 = vdwg.mxu0
    %2908 = vmatprep.subr.bf16.mxu0 %v1982
    %2909 = vmatpush1.bf16.msra.mxu0 %v1981
    %2910 = vmatprep.subr.bf16.mxu0 %v1988
    %2911 = vmatpush1.bf16.msra.mxu0 %v1987
    %2912 = vmatprep.subr.bf16.mxu0 %v1994
    %2913 = vmatpush1.bf16.msra.mxu0 %v1993
    %2914 = vmatprep.subr.bf16.mxu0 %v2000
    %2915 = vmatpush1.bf16.msra.mxu0 %v1999
    %2916 = vmatprep.subr.bf16.mxu0 %v2006
    %2917 = vmatpush1.bf16.msra.mxu0 %v2005
    %2918 = vmatprep.subr.bf16.mxu0 %v2012
    %2919 = vmatpush1.bf16.msra.mxu0 %v2011
    %2920 = vmatprep.subr.bf16.mxu0 %v2018
    %2921 = vmatpush1.bf16.msra.mxu0 %v2017
    %2922 = vmatprep.subr.bf16.mxu0 %v2024
    %2923 = vmatpush1.bf16.msra.mxu0 %v2023
    %2924 = vmatprep.subr.bf16.mxu0 %v2030
    %2925 = vmatpush1.bf16.msra.mxu0 %v2029
    %2926 = vmatprep.subr.bf16.mxu0 %v2036
    %2927 = vmatpush1.bf16.msra.mxu0 %v2035
    %2928 = vmatprep.subr.bf16.mxu0 %v2042
    %2929 = vmatpush1.bf16.msra.mxu0 %v2041
    %2930 = vmatprep.subr.bf16.mxu0 %v2048
    %2931 = vmatpush1.bf16.msra.mxu0 %v2047
    %2932 = vmatprep.subr.bf16.mxu0 %v2054
    %2933 = vmatpush1.bf16.msra.mxu0 %v2053
    %2934 = vmatprep.subr.bf16.mxu0 %v2060
    %2935 = vmatpush1.bf16.msra.mxu0 %v2059
    %2936 = vmatprep.subr.bf16.mxu0 %v2066
    %2937 = vmatpush1.bf16.msra.mxu0 %v2065
    %2938 = vmatprep.subr.bf16.mxu0 %v2072
    %2939 = vmatpush1.bf16.msra.mxu0 %v2071
    %2940 = vmatprep.mubr.bf16.mxu0 %v528
    %2941 = vmatmul.mubr.bf16.gmra.mrb[0].mxu0 %v526
    %v2942 = vpop.f32.mrb[0].mxu0
    %v2943 = vadd.f32 %v2902, %v2942
    %v2944 = vpop.f32.mrb[0].mxu0
    %v2945 = vadd.f32 %v2904, %v2944
    %v2946 = vpop.f32.mrb[0].mxu0
    %v2947 = vpop.f32.mrb[0].mxu0
    %2948 = vdwg.mxu0
    %v2949 = vld [vmem:[#allocation9] sm:$0xff]
    %v2950 = vld [vmem:[#allocation9 + $0x8] sm:$0xff]
    %v2951 = vld [vmem:[#allocation9 + $0x10] sm:$0xff]
    %v2952 = vld [vmem:[#allocation9 + $0x18] sm:$0xff]
    %v2953 = vld [vmem:[#allocation9 + $0x20] sm:$0xff]
    %v2954 = vld [vmem:[#allocation9 + $0x28] sm:$0xff]
    %v2955 = vld [vmem:[#allocation9 + $0x30] sm:$0xff]
    %v2956 = vld [vmem:[#allocation9 + $0x38] sm:$0xff]
    %v2957 = vlaneseq
    %v2958 = vshrl.u32 %v2957, 7
    %v2959 = vadd.s32 %v2958, 8
    %v2960 = vadd.s32 %v2958, 16
    %v2961 = vadd.s32 %v2958, 24
    %v2962 = vadd.s32 %v2958, 32
    %v2963 = vadd.s32 %v2958, 40
    %v2964 = vadd.s32 %v2958, 48
    %v2965 = vadd.s32 %v2958, 56
    %v2966 = vsub.f32 1.0, %v2615
    %v2967 = vmax.f32 %v2966, 0.0
    %v2968 = vadd.f32 %v2967, 1e-07
    %v2969 = vmax.f32 %v2615, 0.0
    %v2970 = vadd.f32 %v2969, 1e-07
    %v2971 = vshra.s32 %v2958, 5
    %v2972 = vshra.s32 %v2959, 5
    %v2973 = vshra.s32 %v2960, 5
    %v2974 = vshra.s32 %v2961, 5
    %v2975 = vshra.s32 %v2962, 5
    %v2976 = vshra.s32 %v2963, 5
    %v2977 = vshra.s32 %v2964, 5
    %v2978 = vshra.s32 %v2965, 5
    %v2979 = vand.u32 %v2971, 1
    %v2980 = vand.u32 %v2972, 1
    %v2981 = vand.u32 %v2973, 1
    %v2982 = vand.u32 %v2974, 1
    %v2983 = vand.u32 %v2975, 1
    %v2984 = vand.u32 %v2976, 1
    %v2985 = vand.u32 %v2977, 1
    %v2986 = vand.u32 %v2978, 1
    %vm2987 = vcmp.eq.s32.totalorder %v2979, 1
    %vm2988 = vcmp.eq.s32.totalorder %v2980, 1
    %vm2989 = vcmp.eq.s32.totalorder %v2981, 1
    %vm2990 = vcmp.eq.s32.totalorder %v2982, 1
    %vm2991 = vcmp.eq.s32.totalorder %v2983, 1
    %vm2992 = vcmp.eq.s32.totalorder %v2984, 1
    %vm2993 = vcmp.eq.s32.totalorder %v2985, 1
    %vm2994 = vcmp.eq.s32.totalorder %v2986, 1
    %v2995 = vlaneseq
    %v2996 = vshrl.u32 %v2995, 7
    %v2997 = vsub.s32 0, %v2996
    %v2998 = vrot.slane %v2968, %v2997
    %v2999 = vlaneseq
    %v3000 = vshrl.u32 %v2999, 7
    %v3001 = vsub.s32 0, %v3000
    %v3002 = vrot.slane %v2970, %v3001
    %v3003 = vsel %vm2987, %v2998, %v3002
    %v3004 = vsel %vm2988, %v2998, %v3002
    %v3005 = vsel %vm2989, %v2998, %v3002
    %v3006 = vsel %vm2990, %v2998, %v3002
    %v3007 = vsel %vm2991, %v2998, %v3002
    %v3008 = vsel %vm2992, %v2998, %v3002
    %v3009 = vsel %vm2993, %v2998, %v3002
    %v3010 = vsel %vm2994, %v2998, %v3002
    %v3011 = vsub.f32 1.0, %v2617
    %v3012 = vmax.f32 %v3011, 0.0
    %v3013 = vadd.f32 %v3012, 1e-07
    %v3014 = vmax.f32 %v2617, 0.0
    %v3015 = vadd.f32 %v3014, 1e-07
    %v3016 = vshra.s32 %v2958, 4
    %v3017 = vshra.s32 %v2959, 4
    %v3018 = vshra.s32 %v2960, 4
    %v3019 = vshra.s32 %v2961, 4
    %v3020 = vshra.s32 %v2962, 4
    %v3021 = vshra.s32 %v2963, 4
    %v3022 = vshra.s32 %v2964, 4
    %v3023 = vshra.s32 %v2965, 4
    %v3024 = vand.u32 %v3016, 1
    %v3025 = vand.u32 %v3017, 1
    %v3026 = vand.u32 %v3018, 1
    %v3027 = vand.u32 %v3019, 1
    %v3028 = vand.u32 %v3020, 1
    %v3029 = vand.u32 %v3021, 1
    %v3030 = vand.u32 %v3022, 1
    %v3031 = vand.u32 %v3023, 1
    %vm3032 = vcmp.eq.s32.totalorder %v3024, 1
    %vm3033 = vcmp.eq.s32.totalorder %v3025, 1
    %vm3034 = vcmp.eq.s32.totalorder %v3026, 1
    %vm3035 = vcmp.eq.s32.totalorder %v3027, 1
    %vm3036 = vcmp.eq.s32.totalorder %v3028, 1
    %vm3037 = vcmp.eq.s32.totalorder %v3029, 1
    %vm3038 = vcmp.eq.s32.totalorder %v3030, 1
    %vm3039 = vcmp.eq.s32.totalorder %v3031, 1
    %v3040 = vlaneseq
    %v3041 = vshrl.u32 %v3040, 7
    %v3042 = vsub.s32 0, %v3041
    %v3043 = vrot.slane %v3013, %v3042
    %v3044 = vlaneseq
    %v3045 = vshrl.u32 %v3044, 7
    %v3046 = vsub.s32 0, %v3045
    %v3047 = vrot.slane %v3015, %v3046
    %v3048 = vsel %vm3032, %v3043, %v3047
    %v3049 = vsel %vm3033, %v3043, %v3047
    %v3050 = vsel %vm3034, %v3043, %v3047
    %v3051 = vsel %vm3035, %v3043, %v3047
    %v3052 = vsel %vm3036, %v3043, %v3047
    %v3053 = vsel %vm3037, %v3043, %v3047
    %v3054 = vsel %vm3038, %v3043, %v3047
    %v3055 = vsel %vm3039, %v3043, %v3047
    %v3056 = vmul.f32 %v3003, %v3048
    %v3057 = vmul.f32 %v3004, %v3049
    %v3058 = vmul.f32 %v3005, %v3050
    %v3059 = vmul.f32 %v3006, %v3051
    %v3060 = vmul.f32 %v3007, %v3052
    %v3061 = vmul.f32 %v3008, %v3053
    %v3062 = vmul.f32 %v3009, %v3054
    %v3063 = vmul.f32 %v3010, %v3055
    %v3064 = vsub.f32 1.0, %v2779
    %v3065 = vmax.f32 %v3064, 0.0
    %v3066 = vadd.f32 %v3065, 1e-07
    %v3067 = vmax.f32 %v2779, 0.0
    %v3068 = vadd.f32 %v3067, 1e-07
    %v3069 = vshra.s32 %v2958, 3
    %v3070 = vshra.s32 %v2959, 3
    %v3071 = vshra.s32 %v2960, 3
    %v3072 = vshra.s32 %v2961, 3
    %v3073 = vshra.s32 %v2962, 3
    %v3074 = vshra.s32 %v2963, 3
    %v3075 = vshra.s32 %v2964, 3
    %v3076 = vshra.s32 %v2965, 3
    %v3077 = vand.u32 %v3069, 1
    %v3078 = vand.u32 %v3070, 1
    %v3079 = vand.u32 %v3071, 1
    %v3080 = vand.u32 %v3072, 1
    %v3081 = vand.u32 %v3073, 1
    %v3082 = vand.u32 %v3074, 1
    %v3083 = vand.u32 %v3075, 1
    %v3084 = vand.u32 %v3076, 1
    %vm3085 = vcmp.eq.s32.totalorder %v3077, 1
    %vm3086 = vcmp.eq.s32.totalorder %v3078, 1
    %vm3087 = vcmp.eq.s32.totalorder %v3079, 1
    %vm3088 = vcmp.eq.s32.totalorder %v3080, 1
    %vm3089 = vcmp.eq.s32.totalorder %v3081, 1
    %vm3090 = vcmp.eq.s32.totalorder %v3082, 1
    %vm3091 = vcmp.eq.s32.totalorder %v3083, 1
    %vm3092 = vcmp.eq.s32.totalorder %v3084, 1
    %v3093 = vlaneseq
    %v3094 = vshrl.u32 %v3093, 7
    %v3095 = vsub.s32 0, %v3094
    %v3096 = vrot.slane %v3066, %v3095
    %v3097 = vlaneseq
    %v3098 = vshrl.u32 %v3097, 7
    %v3099 = vsub.s32 0, %v3098
    %v3100 = vrot.slane %v3068, %v3099
    %v3101 = vsel %vm3085, %v3096, %v3100
    %v3102 = vsel %vm3086, %v3096, %v3100
    %v3103 = vsel %vm3087, %v3096, %v3100
    %v3104 = vsel %vm3088, %v3096, %v3100
    %v3105 = vsel %vm3089, %v3096, %v3100
    %v3106 = vsel %vm3090, %v3096, %v3100
    %v3107 = vsel %vm3091, %v3096, %v3100
    %v3108 = vsel %vm3092, %v3096, %v3100
    %v3109 = vmul.f32 %v3056, %v3101
    %v3110 = vmul.f32 %v3057, %v3102
    %v3111 = vmul.f32 %v3058, %v3103
    %v3112 = vmul.f32 %v3059, %v3104
    %v3113 = vmul.f32 %v3060, %v3105
    %v3114 = vmul.f32 %v3061, %v3106
    %v3115 = vmul.f32 %v3062, %v3107
    %v3116 = vmul.f32 %v3063, %v3108
    %v3117 = vsub.f32 1.0, %v2781
    %v3118 = vmax.f32 %v3117, 0.0
    %v3119 = vadd.f32 %v3118, 1e-07
    %v3120 = vmax.f32 %v2781, 0.0
    %v3121 = vadd.f32 %v3120, 1e-07
    %v3122 = vshra.s32 %v2958, 2
    %v3123 = vshra.s32 %v2959, 2
    %v3124 = vshra.s32 %v2960, 2
    %v3125 = vshra.s32 %v2961, 2
    %v3126 = vshra.s32 %v2962, 2
    %v3127 = vshra.s32 %v2963, 2
    %v3128 = vshra.s32 %v2964, 2
    %v3129 = vshra.s32 %v2965, 2
    %v3130 = vand.u32 %v3122, 1
    %v3131 = vand.u32 %v3123, 1
    %v3132 = vand.u32 %v3124, 1
    %v3133 = vand.u32 %v3125, 1
    %v3134 = vand.u32 %v3126, 1
    %v3135 = vand.u32 %v3127, 1
    %v3136 = vand.u32 %v3128, 1
    %v3137 = vand.u32 %v3129, 1
    %vm3138 = vcmp.eq.s32.totalorder %v3130, 1
    %vm3139 = vcmp.eq.s32.totalorder %v3131, 1
    %vm3140 = vcmp.eq.s32.totalorder %v3132, 1
    %vm3141 = vcmp.eq.s32.totalorder %v3133, 1
    %vm3142 = vcmp.eq.s32.totalorder %v3134, 1
    %vm3143 = vcmp.eq.s32.totalorder %v3135, 1
    %vm3144 = vcmp.eq.s32.totalorder %v3136, 1
    %vm3145 = vcmp.eq.s32.totalorder %v3137, 1
    %v3146 = vlaneseq
    %v3147 = vshrl.u32 %v3146, 7
    %v3148 = vsub.s32 0, %v3147
    %v3149 = vrot.slane %v3119, %v3148
    %v3150 = vlaneseq
    %v3151 = vshrl.u32 %v3150, 7
    %v3152 = vsub.s32 0, %v3151
    %v3153 = vrot.slane %v3121, %v3152
    %v3154 = vsel %vm3138, %v3149, %v3153
    %v3155 = vsel %vm3139, %v3149, %v3153
    %v3156 = vsel %vm3140, %v3149, %v3153
    %v3157 = vsel %vm3141, %v3149, %v3153
    %v3158 = vsel %vm3142, %v3149, %v3153
    %v3159 = vsel %vm3143, %v3149, %v3153
    %v3160 = vsel %vm3144, %v3149, %v3153
    %v3161 = vsel %vm3145, %v3149, %v3153
    %v3162 = vmul.f32 %v3109, %v3154
    %v3163 = vmul.f32 %v3110, %v3155
    %v3164 = vmul.f32 %v3111, %v3156
    %v3165 = vmul.f32 %v3112, %v3157
    %v3166 = vmul.f32 %v3113, %v3158
    %v3167 = vmul.f32 %v3114, %v3159
    %v3168 = vmul.f32 %v3115, %v3160
    %v3169 = vmul.f32 %v3116, %v3161
    %v3170 = vsub.f32 1.0, %v2943
    %v3171 = vmax.f32 %v3170, 0.0
    %v3172 = vadd.f32 %v3171, 1e-07
    %v3173 = vmax.f32 %v2943, 0.0
    %v3174 = vadd.f32 %v3173, 1e-07
    %v3175 = vshra.s32 %v2958, 1
    %v3176 = vshra.s32 %v2959, 1
    %v3177 = vshra.s32 %v2960, 1
    %v3178 = vshra.s32 %v2961, 1
    %v3179 = vshra.s32 %v2962, 1
    %v3180 = vshra.s32 %v2963, 1
    %v3181 = vshra.s32 %v2964, 1
    %v3182 = vshra.s32 %v2965, 1
    %v3183 = vand.u32 %v3175, 1
    %v3184 = vand.u32 %v3176, 1
    %v3185 = vand.u32 %v3177, 1
    %v3186 = vand.u32 %v3178, 1
    %v3187 = vand.u32 %v3179, 1
    %v3188 = vand.u32 %v3180, 1
    %v3189 = vand.u32 %v3181, 1
    %v3190 = vand.u32 %v3182, 1
    %vm3191 = vcmp.eq.s32.totalorder %v3183, 1
    %vm3192 = vcmp.eq.s32.totalorder %v3184, 1
    %vm3193 = vcmp.eq.s32.totalorder %v3185, 1
    %vm3194 = vcmp.eq.s32.totalorder %v3186, 1
    %vm3195 = vcmp.eq.s32.totalorder %v3187, 1
    %vm3196 = vcmp.eq.s32.totalorder %v3188, 1
    %vm3197 = vcmp.eq.s32.totalorder %v3189, 1
    %vm3198 = vcmp.eq.s32.totalorder %v3190, 1
    %v3199 = vlaneseq
    %v3200 = vshrl.u32 %v3199, 7
    %v3201 = vsub.s32 0, %v3200
    %v3202 = vrot.slane %v3172, %v3201
    %v3203 = vlaneseq
    %v3204 = vshrl.u32 %v3203, 7
    %v3205 = vsub.s32 0, %v3204
    %v3206 = vrot.slane %v3174, %v3205
    %v3207 = vsel %vm3191, %v3202, %v3206
    %v3208 = vsel %vm3192, %v3202, %v3206
    %v3209 = vsel %vm3193, %v3202, %v3206
    %v3210 = vsel %vm3194, %v3202, %v3206
    %v3211 = vsel %vm3195, %v3202, %v3206
    %v3212 = vsel %vm3196, %v3202, %v3206
    %v3213 = vsel %vm3197, %v3202, %v3206
    %v3214 = vsel %vm3198, %v3202, %v3206
    %v3215 = vmul.f32 %v3162, %v3207
    %v3216 = vmul.f32 %v3163, %v3208
    %v3217 = vmul.f32 %v3164, %v3209
    %v3218 = vmul.f32 %v3165, %v3210
    %v3219 = vmul.f32 %v3166, %v3211
    %v3220 = vmul.f32 %v3167, %v3212
    %v3221 = vmul.f32 %v3168, %v3213
    %v3222 = vmul.f32 %v3169, %v3214
    %v3223 = vsub.f32 1.0, %v2945
    %v3224 = vmax.f32 %v3223, 0.0
    %v3225 = vadd.f32 %v3224, 1e-07
    %v3226 = vmax.f32 %v2945, 0.0
    %v3227 = vadd.f32 %v3226, 1e-07
    %v3228 = vand.u32 %v2958, 1
    %v3229 = vand.u32 %v2959, 1
    %v3230 = vand.u32 %v2960, 1
    %v3231 = vand.u32 %v2961, 1
    %v3232 = vand.u32 %v2962, 1
    %v3233 = vand.u32 %v2963, 1
    %v3234 = vand.u32 %v2964, 1
    %v3235 = vand.u32 %v2965, 1
    %vm3236 = vcmp.eq.s32.totalorder %v3228, 1
    %vm3237 = vcmp.eq.s32.totalorder %v3229, 1
    %vm3238 = vcmp.eq.s32.totalorder %v3230, 1
    %vm3239 = vcmp.eq.s32.totalorder %v3231, 1
    %vm3240 = vcmp.eq.s32.totalorder %v3232, 1
    %vm3241 = vcmp.eq.s32.totalorder %v3233, 1
    %vm3242 = vcmp.eq.s32.totalorder %v3234, 1
    %vm3243 = vcmp.eq.s32.totalorder %v3235, 1
    %v3244 = vlaneseq
    %v3245 = vshrl.u32 %v3244, 7
    %v3246 = vsub.s32 0, %v3245
    %v3247 = vrot.slane %v3225, %v3246
    %v3248 = vlaneseq
    %v3249 = vshrl.u32 %v3248, 7
    %v3250 = vsub.s32 0, %v3249
    %v3251 = vrot.slane %v3227, %v3250
    %v3252 = vsel %vm3236, %v3247, %v3251
    %v3253 = vsel %vm3237, %v3247, %v3251
    %v3254 = vsel %vm3238, %v3247, %v3251
    %v3255 = vsel %vm3239, %v3247, %v3251
    %v3256 = vsel %vm3240, %v3247, %v3251
    %v3257 = vsel %vm3241, %v3247, %v3251
    %v3258 = vsel %vm3242, %v3247, %v3251
    %v3259 = vsel %vm3243, %v3247, %v3251
    %v3260 = vmul.f32 %v3215, %v3252
    %v3261 = vmul.f32 %v3216, %v3253
    %v3262 = vmul.f32 %v3217, %v3254
    %v3263 = vmul.f32 %v3218, %v3255
    %v3264 = vmul.f32 %v3219, %v3256
    %v3265 = vmul.f32 %v3220, %v3257
    %v3266 = vmul.f32 %v3221, %v3258
    %v3267 = vmul.f32 %v3222, %v3259
    %v3268 = vmul.f32 %v3260, %v2949
    %v3269 = vmul.f32 %v3261, %v2950
    %v3270 = vmul.f32 %v3262, %v2951
    %v3271 = vmul.f32 %v3263, %v2952
    %v3272 = vmul.f32 %v3264, %v2953
    %v3273 = vmul.f32 %v3265, %v2954
    %v3274 = vmul.f32 %v3266, %v2955
    %v3275 = vmul.f32 %v3267, %v2956
    %v3276 = vadd.f32 %v3268, %v3269
    %v3277 = vadd.f32 %v3276, %v3270
    %v3278 = vadd.f32 %v3277, %v3271
    %v3279 = vadd.f32 %v3278, %v3272
    %v3280 = vadd.f32 %v3279, %v3273
    %v3281 = vadd.f32 %v3280, %v3274
    %v3282 = vadd.f32 %v3281, %v3275
    %v3283 = vrot.slane %v3282, 4
    %v3284 = vadd.f32 %v3282, %v3283
    %v3285 = vrot.slane %v3284, 2
    %v3286 = vadd.f32 %v3284, %v3285
    %v3287 = vrot.slane %v3286, 1
    %v3288 = vadd.f32 %v3286, %v3287
    %3289 = vst [vmem:[#allocation2] sm:$0x1] %v3288
    %v3290 = vlaneseq
    %v3291 = vshrl.u32 %v3290, 7
    %v3292 = vsub.s32 1, %v3291
    %v3293 = vrot.slane %v2968, %v3292
    %v3294 = vlaneseq
    %v3295 = vshrl.u32 %v3294, 7
    %v3296 = vsub.s32 1, %v3295
    %v3297 = vrot.slane %v2970, %v3296
    %v3298 = vsel %vm2987, %v3293, %v3297
    %v3299 = vsel %vm2988, %v3293, %v3297
    %v3300 = vsel %vm2989, %v3293, %v3297
    %v3301 = vsel %vm2990, %v3293, %v3297
    %v3302 = vsel %vm2991, %v3293, %v3297
    %v3303 = vsel %vm2992, %v3293, %v3297
    %v3304 = vsel %vm2993, %v3293, %v3297
    %v3305 = vsel %vm2994, %v3293, %v3297
    %v3306 = vlaneseq
    %v3307 = vshrl.u32 %v3306, 7
    %v3308 = vsub.s32 1, %v3307
    %v3309 = vrot.slane %v3013, %v3308
    %v3310 = vlaneseq
    %v3311 = vshrl.u32 %v3310, 7
    %v3312 = vsub.s32 1, %v3311
    %v3313 = vrot.slane %v3015, %v3312
    %v3314 = vsel %vm3032, %v3309, %v3313
    %v3315 = vsel %vm3033, %v3309, %v3313
    %v3316 = vsel %vm3034, %v3309, %v3313
    %v3317 = vsel %vm3035, %v3309, %v3313
    %v3318 = vsel %vm3036, %v3309, %v3313
    %v3319 = vsel %vm3037, %v3309, %v3313
    %v3320 = vsel %vm3038, %v3309, %v3313
    %v3321 = vsel %vm3039, %v3309, %v3313
    %v3322 = vmul.f32 %v3298, %v3314
    %v3323 = vmul.f32 %v3299, %v3315
    %v3324 = vmul.f32 %v3300, %v3316
    %v3325 = vmul.f32 %v3301, %v3317
    %v3326 = vmul.f32 %v3302, %v3318
    %v3327 = vmul.f32 %v3303, %v3319
    %v3328 = vmul.f32 %v3304, %v3320
    %v3329 = vmul.f32 %v3305, %v3321
    %v3330 = vlaneseq
    %v3331 = vshrl.u32 %v3330, 7
    %v3332 = vsub.s32 1, %v3331
    %v3333 = vrot.slane %v3066, %v3332
    %v3334 = vlaneseq
    %v3335 = vshrl.u32 %v3334, 7
    %v3336 = vsub.s32 1, %v3335
    %v3337 = vrot.slane %v3068, %v3336
    %v3338 = vsel %vm3085, %v3333, %v3337
    %v3339 = vsel %vm3086, %v3333, %v3337
    %v3340 = vsel %vm3087, %v3333, %v3337
    %v3341 = vsel %vm3088, %v3333, %v3337
    %v3342 = vsel %vm3089, %v3333, %v3337
    %v3343 = vsel %vm3090, %v3333, %v3337
    %v3344 = vsel %vm3091, %v3333, %v3337
    %v3345 = vsel %vm3092, %v3333, %v3337
    %v3346 = vmul.f32 %v3322, %v3338
    %v3347 = vmul.f32 %v3323, %v3339
    %v3348 = vmul.f32 %v3324, %v3340
    %v3349 = vmul.f32 %v3325, %v3341
    %v3350 = vmul.f32 %v3326, %v3342
    %v3351 = vmul.f32 %v3327, %v3343
    %v3352 = vmul.f32 %v3328, %v3344
    %v3353 = vmul.f32 %v3329, %v3345
    %v3354 = vlaneseq
    %v3355 = vshrl.u32 %v3354, 7
    %v3356 = vsub.s32 1, %v3355
    %v3357 = vrot.slane %v3119, %v3356
    %v3358 = vlaneseq
    %v3359 = vshrl.u32 %v3358, 7
    %v3360 = vsub.s32 1, %v3359
    %v3361 = vrot.slane %v3121, %v3360
    %v3362 = vsel %vm3138, %v3357, %v3361
    %v3363 = vsel %vm3139, %v3357, %v3361
    %v3364 = vsel %vm3140, %v3357, %v3361
    %v3365 = vsel %vm3141, %v3357, %v3361
    %v3366 = vsel %vm3142, %v3357, %v3361
    %v3367 = vsel %vm3143, %v3357, %v3361
    %v3368 = vsel %vm3144, %v3357, %v3361
    %v3369 = vsel %vm3145, %v3357, %v3361
    %v3370 = vmul.f32 %v3346, %v3362
    %v3371 = vmul.f32 %v3347, %v3363
    %v3372 = vmul.f32 %v3348, %v3364
    %v3373 = vmul.f32 %v3349, %v3365
    %v3374 = vmul.f32 %v3350, %v3366
    %v3375 = vmul.f32 %v3351, %v3367
    %v3376 = vmul.f32 %v3352, %v3368
    %v3377 = vmul.f32 %v3353, %v3369
    %v3378 = vlaneseq
    %v3379 = vshrl.u32 %v3378, 7
    %v3380 = vsub.s32 1, %v3379
    %v3381 = vrot.slane %v3172, %v3380
    %v3382 = vlaneseq
    %v3383 = vshrl.u32 %v3382, 7
    %v3384 = vsub.s32 1, %v3383
    %v3385 = vrot.slane %v3174, %v3384
    %v3386 = vsel %vm3191, %v3381, %v3385
    %v3387 = vsel %vm3192, %v3381, %v3385
    %v3388 = vsel %vm3193, %v3381, %v3385
    %v3389 = vsel %vm3194, %v3381, %v3385
    %v3390 = vsel %vm3195, %v3381, %v3385
    %v3391 = vsel %vm3196, %v3381, %v3385
    %v3392 = vsel %vm3197, %v3381, %v3385
    %v3393 = vsel %vm3198, %v3381, %v3385
    %v3394 = vmul.f32 %v3370, %v3386
    %v3395 = vmul.f32 %v3371, %v3387
    %v3396 = vmul.f32 %v3372, %v3388
    %v3397 = vmul.f32 %v3373, %v3389
    %v3398 = vmul.f32 %v3374, %v3390
    %v3399 = vmul.f32 %v3375, %v3391
    %v3400 = vmul.f32 %v3376, %v3392
    %v3401 = vmul.f32 %v3377, %v3393
    %v3402 = vlaneseq
    %v3403 = vshrl.u32 %v3402, 7
    %v3404 = vsub.s32 1, %v3403
    %v3405 = vrot.slane %v3225, %v3404
    %v3406 = vlaneseq
    %v3407 = vshrl.u32 %v3406, 7
    %v3408 = vsub.s32 1, %v3407
    %v3409 = vrot.slane %v3227, %v3408
    %v3410 = vsel %vm3236, %v3405, %v3409
    %v3411 = vsel %vm3237, %v3405, %v3409
    %v3412 = vsel %vm3238, %v3405, %v3409
    %v3413 = vsel %vm3239, %v3405, %v3409
    %v3414 = vsel %vm3240, %v3405, %v3409
    %v3415 = vsel %vm3241, %v3405, %v3409
    %v3416 = vsel %vm3242, %v3405, %v3409
    %v3417 = vsel %vm3243, %v3405, %v3409
    %v3418 = vmul.f32 %v3394, %v3410
    %v3419 = vmul.f32 %v3395, %v3411
    %v3420 = vmul.f32 %v3396, %v3412
    %v3421 = vmul.f32 %v3397, %v3413
    %v3422 = vmul.f32 %v3398, %v3414
    %v3423 = vmul.f32 %v3399, %v3415
    %v3424 = vmul.f32 %v3400, %v3416
    %v3425 = vmul.f32 %v3401, %v3417
    %v3426 = vmul.f32 %v3418, %v2949
    %v3427 = vmul.f32 %v3419, %v2950
    %v3428 = vmul.f32 %v3420, %v2951
    %v3429 = vmul.f32 %v3421, %v2952
    %v3430 = vmul.f32 %v3422, %v2953
    %v3431 = vmul.f32 %v3423, %v2954
    %v3432 = vmul.f32 %v3424, %v2955
    %v3433 = vmul.f32 %v3425, %v2956
    %v3434 = vadd.f32 %v3426, %v3427
    %v3435 = vadd.f32 %v3434, %v3428
    %v3436 = vadd.f32 %v3435, %v3429
    %v3437 = vadd.f32 %v3436, %v3430
    %v3438 = vadd.f32 %v3437, %v3431
    %v3439 = vadd.f32 %v3438, %v3432
    %v3440 = vadd.f32 %v3439, %v3433
    %v3441 = vrot.slane %v3440, 4
    %v3442 = vadd.f32 %v3440, %v3441
    %v3443 = vrot.slane %v3442, 2
    %v3444 = vadd.f32 %v3442, %v3443
    %v3445 = vrot.slane %v3444, 1
    %v3446 = vadd.f32 %v3444, %v3445
    %3447 = vst [vmem:[#allocation2 + $0x1] sm:$0x1] %v3446
    %v3448 = vld [vmem:[#allocation2] sm:$0x3]
    %v3449 = vpack.c.bf16 %v3448, %v3448
    %v3450 = vld [vmem:[%s2] sm:$0xff]
    %v3451 = vld [vmem:[%s2 + $0x8] sm:$0xff]
    %v3452 = vld [vmem:[%s2 + $0x10] sm:$0xff]
    %v3453 = vld [vmem:[%s2 + $0x18] sm:$0xff]
    %v3454 = vld [vmem:[%s2 + $0x20] sm:$0xff]
    %v3455 = vld [vmem:[%s2 + $0x28] sm:$0xff]
    %v3456 = vld [vmem:[%s2 + $0x30] sm:$0xff]
    %v3457 = vld [vmem:[%s2 + $0x38] sm:$0xff]
    %v3458 = vld [vmem:[%s2 + $0x40] sm:$0xff]
    %v3459 = vld [vmem:[%s2 + $0x48] sm:$0xff]
    %v3460 = vld [vmem:[%s2 + $0x50] sm:$0xff]
    %v3461 = vld [vmem:[%s2 + $0x58] sm:$0xff]
    %v3462 = vld [vmem:[%s2 + $0x60] sm:$0xff]
    %v3463 = vld [vmem:[%s2 + $0x68] sm:$0xff]
    %v3464 = vld [vmem:[%s2 + $0x70] sm:$0xff]
    %v3465 = vld [vmem:[%s2 + $0x78] sm:$0xff]
    %v3482 = vunpack.c.l.b16 %v3450
    %v3483 = vunpack.c.h.b16 %v3450
    %v3484 = vunpack.c.l.b16 %v3451
    %v3485 = vunpack.c.h.b16 %v3451
    %v3486 = vunpack.c.l.b16 %v3452
    %v3487 = vunpack.c.h.b16 %v3452
    %v3488 = vunpack.c.l.b16 %v3453
    %v3489 = vunpack.c.h.b16 %v3453
    %v3490 = vunpack.c.l.b16 %v3454
    %v3491 = vunpack.c.h.b16 %v3454
    %v3492 = vunpack.c.l.b16 %v3455
    %v3493 = vunpack.c.h.b16 %v3455
    %v3494 = vunpack.c.l.b16 %v3456
    %v3495 = vunpack.c.h.b16 %v3456
    %v3496 = vunpack.c.l.b16 %v3457
    %v3497 = vunpack.c.h.b16 %v3457
    %v3498 = vunpack.c.l.b16 %v3458
    %v3499 = vunpack.c.h.b16 %v3458
    %v3500 = vunpack.c.l.b16 %v3459
    %v3501 = vunpack.c.h.b16 %v3459
    %v3502 = vunpack.c.l.b16 %v3460
    %v3503 = vunpack.c.h.b16 %v3460
    %v3504 = vunpack.c.l.b16 %v3461
    %v3505 = vunpack.c.h.b16 %v3461
    %v3506 = vunpack.c.l.b16 %v3462
    %v3507 = vunpack.c.h.b16 %v3462
    %v3508 = vunpack.c.l.b16 %v3463
    %v3509 = vunpack.c.h.b16 %v3463
    %v3510 = vunpack.c.l.b16 %v3464
    %v3511 = vunpack.c.h.b16 %v3464
    %v3512 = vunpack.c.l.b16 %v3465
    %v3513 = vunpack.c.h.b16 %v3465
    %v3514 = vpack.c.b16 %v3484, %v3482
    %v3515 = vpack.c.b16 %v3485, %v3483
    %v3516 = vpack.c.b16 %v3488, %v3486
    %v3517 = vpack.c.b16 %v3489, %v3487
    %v3518 = vpack.c.b16 %v3492, %v3490
    %v3519 = vpack.c.b16 %v3493, %v3491
    %v3520 = vpack.c.b16 %v3496, %v3494
    %v3521 = vpack.c.b16 %v3497, %v3495
    %v3522 = vpack.c.b16 %v3500, %v3498
    %v3523 = vpack.c.b16 %v3501, %v3499
    %v3524 = vpack.c.b16 %v3504, %v3502
    %v3525 = vpack.c.b16 %v3505, %v3503
    %v3526 = vpack.c.b16 %v3508, %v3506
    %v3527 = vpack.c.b16 %v3509, %v3507
    %v3528 = vpack.c.b16 %v3512, %v3510
    %v3529 = vpack.c.b16 %v3513, %v3511
    %3546 = vmatprep.subr.bf16.mxu0 %v3515
    %3547 = vmatpush1.bf16.msra.mxu0 %v3514
    %3548 = vmatprep.subr.bf16.mxu0 %v3517
    %3549 = vmatpush1.bf16.msra.mxu0 %v3516
    %3550 = vmatprep.subr.bf16.mxu0 %v3519
    %3551 = vmatpush1.bf16.msra.mxu0 %v3518
    %3552 = vmatprep.subr.bf16.mxu0 %v3521
    %3553 = vmatpush1.bf16.msra.mxu0 %v3520
    %3554 = vmatprep.subr.bf16.mxu0 %v3523
    %3555 = vmatpush1.bf16.msra.mxu0 %v3522
    %3556 = vmatprep.subr.bf16.mxu0 %v3525
    %3557 = vmatpush1.bf16.msra.mxu0 %v3524
    %3558 = vmatprep.subr.bf16.mxu0 %v3527
    %3559 = vmatpush1.bf16.msra.mxu0 %v3526
    %3560 = vmatprep.subr.bf16.mxu0 %v3529
    %3561 = vmatpush1.bf16.msra.mxu0 %v3528
    %3562 = vmatprep.subr.bf16.mxu0 0
    %3563 = vmatpush1.bf16.msra.mxu0 0
    %3564 = vmatprep.subr.bf16.mxu0 0
    %3565 = vmatpush1.bf16.msra.mxu0 0
    %3566 = vmatprep.subr.bf16.mxu0 0
    %3567 = vmatpush1.bf16.msra.mxu0 0
    %3568 = vmatprep.subr.bf16.mxu0 0
    %3569 = vmatpush1.bf16.msra.mxu0 0
    %3570 = vmatprep.subr.bf16.mxu0 0
    %3571 = vmatpush1.bf16.msra.mxu0 0
    %3572 = vmatprep.subr.bf16.mxu0 0
    %3573 = vmatpush1.bf16.msra.mxu0 0
    %3574 = vmatprep.subr.bf16.mxu0 0
    %3575 = vmatpush1.bf16.msra.mxu0 0
    %3576 = vmatprep.subr.bf16.mxu0 0
    %3577 = vmatpush1.bf16.msra.mxu0 0
    %3578 = vmatprep.mubr.bf16.mxu0 0
    %3579 = vmatmul.mubr.bf16.gmra.mrb[0].mxu0 %v3449
    %v3580 = vpop.f32.mrb[0].mxu0
    %v3581 = vadd.f32 0.0, %v3580
    %v3582 = vpop.f32.mrb[0].mxu0
    %v3583 = vadd.f32 0.0, %v3582
    %v3584 = vpop.f32.mrb[0].mxu0
    %v3585 = vpop.f32.mrb[0].mxu0
    %3586 = vdwg.mxu0
    %v3587 = vld [vmem:[%s4] sm:$0xff]
    %v3588 = vld [vmem:[%s4 + $0x8] sm:$0xff]
    %v3589 = vld [vmem:[%s4 + $0x10] sm:$0xff]
    %v3590 = vld [vmem:[%s4 + $0x18] sm:$0xff]
    %v3591 = vld [vmem:[%s4 + $0x20] sm:$0xff]
    %v3592 = vld [vmem:[%s4 + $0x28] sm:$0xff]
    %v3593 = vld [vmem:[%s4 + $0x30] sm:$0xff]
    %v3594 = vld [vmem:[%s4 + $0x38] sm:$0xff]
    %s3595 = sld [smem:[#allocation3]]
    %v3596 = vsub.f32 1.0, %v3581
    %v3597 = vmax.f32 %v3596, 0.0
    %v3598 = vadd.f32 %v3597, 1e-07
    %v3599 = vmax.f32 %v3581, 0.0
    %v3600 = vadd.f32 %v3599, 1e-07
    %v3601 = vlaneseq
    %v3602 = vshrl.u32 %v3601, 7
    %v3603 = vsub.s32 0, %v3602
    %v3604 = vrot.slane %v3598, %v3603
    %v3605 = vlaneseq
    %v3606 = vshrl.u32 %v3605, 7
    %v3607 = vsub.s32 0, %v3606
    %v3608 = vrot.slane %v3600, %v3607
    %v3609 = vsel %vm2987, %v3604, %v3608
    %v3610 = vsel %vm2988, %v3604, %v3608
    %v3611 = vsel %vm2989, %v3604, %v3608
    %v3612 = vsel %vm2990, %v3604, %v3608
    %v3613 = vsel %vm2991, %v3604, %v3608
    %v3614 = vsel %vm2992, %v3604, %v3608
    %v3615 = vsel %vm2993, %v3604, %v3608
    %v3616 = vsel %vm2994, %v3604, %v3608
    %v3617 = vsel %vm3032, %v3604, %v3608
    %v3618 = vsel %vm3033, %v3604, %v3608
    %v3619 = vsel %vm3034, %v3604, %v3608
    %v3620 = vsel %vm3035, %v3604, %v3608
    %v3621 = vsel %vm3036, %v3604, %v3608
    %v3622 = vsel %vm3037, %v3604, %v3608
    %v3623 = vsel %vm3038, %v3604, %v3608
    %v3624 = vsel %vm3039, %v3604, %v3608
    %3633 = vrot.lane.b32.xlu0 %v3617, 96
    %v3634 = vpop.permute.xlu0 %3633
    %3635 = vrot.lane.b32.xlu0 %v3618, 96
    %v3636 = vpop.permute.xlu0 %3635
    %3637 = vrot.lane.b32.xlu0 %v3619, 96
    %v3638 = vpop.permute.xlu0 %3637
    %3639 = vrot.lane.b32.xlu0 %v3620, 96
    %v3640 = vpop.permute.xlu0 %3639
    %3641 = vrot.lane.b32.xlu0 %v3621, 96
    %v3642 = vpop.permute.xlu0 %3641
    %3643 = vrot.lane.b32.xlu0 %v3622, 96
    %v3644 = vpop.permute.xlu0 %3643
    %3645 = vrot.lane.b32.xlu0 %v3623, 96
    %v3646 = vpop.permute.xlu0 %3645
    %3647 = vrot.lane.b32.xlu0 %v3624, 96
    %v3648 = vpop.permute.xlu0 %3647
    %v3657 = vmul.f32 %v3609, %v3634
    %v3658 = vmul.f32 %v3610, %v3636
    %v3659 = vmul.f32 %v3611, %v3638
    %v3660 = vmul.f32 %v3612, %v3640
    %v3661 = vmul.f32 %v3613, %v3642
    %v3662 = vmul.f32 %v3614, %v3644
    %v3663 = vmul.f32 %v3615, %v3646
    %v3664 = vmul.f32 %v3616, %v3648
    %v3665 = vsel %vm3085, %v3604, %v3608
    %v3666 = vsel %vm3086, %v3604, %v3608
    %v3667 = vsel %vm3087, %v3604, %v3608
    %v3668 = vsel %vm3088, %v3604, %v3608
    %v3669 = vsel %vm3089, %v3604, %v3608
    %v3670 = vsel %vm3090, %v3604, %v3608
    %v3671 = vsel %vm3091, %v3604, %v3608
    %v3672 = vsel %vm3092, %v3604, %v3608
    %3681 = vrot.lane.b32.xlu0 %v3665, 64
    %v3682 = vpop.permute.xlu0 %3681
    %3683 = vrot.lane.b32.xlu0 %v3666, 64
    %v3684 = vpop.permute.xlu0 %3683
    %3685 = vrot.lane.b32.xlu0 %v3667, 64
    %v3686 = vpop.permute.xlu0 %3685
    %3687 = vrot.lane.b32.xlu0 %v3668, 64
    %v3688 = vpop.permute.xlu0 %3687
    %3689 = vrot.lane.b32.xlu0 %v3669, 64
    %v3690 = vpop.permute.xlu0 %3689
    %3691 = vrot.lane.b32.xlu0 %v3670, 64
    %v3692 = vpop.permute.xlu0 %3691
    %3693 = vrot.lane.b32.xlu0 %v3671, 64
    %v3694 = vpop.permute.xlu0 %3693
    %3695 = vrot.lane.b32.xlu0 %v3672, 64
    %v3696 = vpop.permute.xlu0 %3695
    %v3705 = vmul.f32 %v3657, %v3682
    %v3706 = vmul.f32 %v3658, %v3684
    %v3707 = vmul.f32 %v3659, %v3686
    %v3708 = vmul.f32 %v3660, %v3688
    %v3709 = vmul.f32 %v3661, %v3690
    %v3710 = vmul.f32 %v3662, %v3692
    %v3711 = vmul.f32 %v3663, %v3694
    %v3712 = vmul.f32 %v3664, %v3696
    %v3713 = vsel %vm3138, %v3604, %v3608
    %v3714 = vsel %vm3139, %v3604, %v3608
    %v3715 = vsel %vm3140, %v3604, %v3608
    %v3716 = vsel %vm3141, %v3604, %v3608
    %v3717 = vsel %vm3142, %v3604, %v3608
    %v3718 = vsel %vm3143, %v3604, %v3608
    %v3719 = vsel %vm3144, %v3604, %v3608
    %v3720 = vsel %vm3145, %v3604, %v3608
    %3729 = vrot.lane.b32.xlu0 %v3713, 32
    %v3730 = vpop.permute.xlu0 %3729
    %3731 = vrot.lane.b32.xlu0 %v3714, 32
    %v3732 = vpop.permute.xlu0 %3731
    %3733 = vrot.lane.b32.xlu0 %v3715, 32
    %v3734 = vpop.permute.xlu0 %3733
    %3735 = vrot.lane.b32.xlu0 %v3716, 32
    %v3736 = vpop.permute.xlu0 %3735
    %3737 = vrot.lane.b32.xlu0 %v3717, 32
    %v3738 = vpop.permute.xlu0 %3737
    %3739 = vrot.lane.b32.xlu0 %v3718, 32
    %v3740 = vpop.permute.xlu0 %3739
    %3741 = vrot.lane.b32.xlu0 %v3719, 32
    %v3742 = vpop.permute.xlu0 %3741
    %3743 = vrot.lane.b32.xlu0 %v3720, 32
    %v3744 = vpop.permute.xlu0 %3743
    %v3753 = vmul.f32 %v3705, %v3730
    %v3754 = vmul.f32 %v3706, %v3732
    %v3755 = vmul.f32 %v3707, %v3734
    %v3756 = vmul.f32 %v3708, %v3736
    %v3757 = vmul.f32 %v3709, %v3738
    %v3758 = vmul.f32 %v3710, %v3740
    %v3759 = vmul.f32 %v3711, %v3742
    %v3760 = vmul.f32 %v3712, %v3744
    %v3761 = vsub.f32 1.0, %v3583
    %v3762 = vmax.f32 %v3761, 0.0
    %v3763 = vadd.f32 %v3762, 1e-07
    %v3764 = vmax.f32 %v3583, 0.0
    %v3765 = vadd.f32 %v3764, 1e-07
    %v3766 = vlaneseq
    %v3767 = vshrl.u32 %v3766, 7
    %v3768 = vsub.s32 0, %v3767
    %v3769 = vrot.slane %v3763, %v3768
    %v3770 = vlaneseq
    %v3771 = vshrl.u32 %v3770, 7
    %v3772 = vsub.s32 0, %v3771
    %v3773 = vrot.slane %v3765, %v3772
    %v3774 = vsel %vm3191, %v3769, %v3773
    %v3775 = vsel %vm3192, %v3769, %v3773
    %v3776 = vsel %vm3193, %v3769, %v3773
    %v3777 = vsel %vm3194, %v3769, %v3773
    %v3778 = vsel %vm3195, %v3769, %v3773
    %v3779 = vsel %vm3196, %v3769, %v3773
    %v3780 = vsel %vm3197, %v3769, %v3773
    %v3781 = vsel %vm3198, %v3769, %v3773
    %v3782 = vmul.f32 %v3753, %v3774
    %v3783 = vmul.f32 %v3754, %v3775
    %v3784 = vmul.f32 %v3755, %v3776
    %v3785 = vmul.f32 %v3756, %v3777
    %v3786 = vmul.f32 %v3757, %v3778
    %v3787 = vmul.f32 %v3758, %v3779
    %v3788 = vmul.f32 %v3759, %v3780
    %v3789 = vmul.f32 %v3760, %v3781
    %v3790 = vsel %vm3236, %v3769, %v3773
    %v3791 = vsel %vm3237, %v3769, %v3773
    %v3792 = vsel %vm3238, %v3769, %v3773
    %v3793 = vsel %vm3239, %v3769, %v3773
    %v3794 = vsel %vm3240, %v3769, %v3773
    %v3795 = vsel %vm3241, %v3769, %v3773
    %v3796 = vsel %vm3242, %v3769, %v3773
    %v3797 = vsel %vm3243, %v3769, %v3773
    %3806 = vrot.lane.b32.xlu0 %v3790, 96
    %v3807 = vpop.permute.xlu0 %3806
    %3808 = vrot.lane.b32.xlu0 %v3791, 96
    %v3809 = vpop.permute.xlu0 %3808
    %3810 = vrot.lane.b32.xlu0 %v3792, 96
    %v3811 = vpop.permute.xlu0 %3810
    %3812 = vrot.lane.b32.xlu0 %v3793, 96
    %v3813 = vpop.permute.xlu0 %3812
    %3814 = vrot.lane.b32.xlu0 %v3794, 96
    %v3815 = vpop.permute.xlu0 %3814
    %3816 = vrot.lane.b32.xlu0 %v3795, 96
    %v3817 = vpop.permute.xlu0 %3816
    %3818 = vrot.lane.b32.xlu0 %v3796, 96
    %v3819 = vpop.permute.xlu0 %3818
    %3820 = vrot.lane.b32.xlu0 %v3797, 96
    %v3821 = vpop.permute.xlu0 %3820
    %v3830 = vmul.f32 %v3782, %v3807
    %v3831 = vmul.f32 %v3783, %v3809
    %v3832 = vmul.f32 %v3784, %v3811
    %v3833 = vmul.f32 %v3785, %v3813
    %v3834 = vmul.f32 %v3786, %v3815
    %v3835 = vmul.f32 %v3787, %v3817
    %v3836 = vmul.f32 %v3788, %v3819
    %v3837 = vmul.f32 %v3789, %v3821
    %v3838 = vmul.f32 %v3830, %v3587
    %v3839 = vmul.f32 %v3831, %v3588
    %v3840 = vmul.f32 %v3832, %v3589
    %v3841 = vmul.f32 %v3833, %v3590
    %v3842 = vmul.f32 %v3834, %v3591
    %v3843 = vmul.f32 %v3835, %v3592
    %v3844 = vmul.f32 %v3836, %v3593
    %v3845 = vmul.f32 %v3837, %v3594
    %vm3846 = vcmask 261120
    %v3847 = vsel %vm3846, %v3838, 0.0
    %v3848 = vsel %vm3846, %v3839, 0.0
    %v3849 = vadd.f32 %v3847, %v3848
    %v3850 = vsel %vm3846, %v3840, 0.0
    %v3851 = vadd.f32 %v3849, %v3850
    %v3852 = vsel %vm3846, %v3841, 0.0
    %v3853 = vadd.f32 %v3851, %v3852
    %v3854 = vsel %vm3846, %v3842, 0.0
    %v3855 = vadd.f32 %v3853, %v3854
    %v3856 = vsel %vm3846, %v3843, 0.0
    %v3857 = vadd.f32 %v3855, %v3856
    %v3858 = vsel %vm3846, %v3844, 0.0
    %v3859 = vadd.f32 %v3857, %v3858
    %v3860 = vsel %vm3846, %v3845, 0.0
    %v3861 = vadd.f32 %v3859, %v3860
    %v3862 = vrot.slane %v3861, 4
    %v3863 = vadd.f32 %v3861, %v3862
    %v3864 = vrot.slane %v3863, 2
    %v3865 = vadd.f32 %v3863, %v3864
    %v3866 = vrot.slane %v3865, 1
    %v3867 = vadd.f32 %v3865, %v3866
    %v3868 = vsub.f32 %v3867, 0.5
    %v3869 = vstv %s3595
    %v3870 = vmul.f32 %v3868, %v3869
    %vm3871 = vcmask 253952
    %3872 = vst.msk [vmem:[#allocation13] sm:$0x1] %vm3871, %v3870
    %v3873 = vlaneseq
    %v3874 = vshrl.u32 %v3873, 7
    %v3875 = vsub.s32 1, %v3874
    %v3876 = vrot.slane %v3598, %v3875
    %v3877 = vlaneseq
    %v3878 = vshrl.u32 %v3877, 7
    %v3879 = vsub.s32 1, %v3878
    %v3880 = vrot.slane %v3600, %v3879
    %v3881 = vsel %vm2987, %v3876, %v3880
    %v3882 = vsel %vm2988, %v3876, %v3880
    %v3883 = vsel %vm2989, %v3876, %v3880
    %v3884 = vsel %vm2990, %v3876, %v3880
    %v3885 = vsel %vm2991, %v3876, %v3880
    %v3886 = vsel %vm2992, %v3876, %v3880
    %v3887 = vsel %vm2993, %v3876, %v3880
    %v3888 = vsel %vm2994, %v3876, %v3880
    %v3889 = vsel %vm3032, %v3876, %v3880
    %v3890 = vsel %vm3033, %v3876, %v3880
    %v3891 = vsel %vm3034, %v3876, %v3880
    %v3892 = vsel %vm3035, %v3876, %v3880
    %v3893 = vsel %vm3036, %v3876, %v3880
    %v3894 = vsel %vm3037, %v3876, %v3880
    %v3895 = vsel %vm3038, %v3876, %v3880
    %v3896 = vsel %vm3039, %v3876, %v3880
    %3905 = vrot.lane.b32.xlu0 %v3889, 96
    %v3906 = vpop.permute.xlu0 %3905
    %3907 = vrot.lane.b32.xlu0 %v3890, 96
    %v3908 = vpop.permute.xlu0 %3907
    %3909 = vrot.lane.b32.xlu0 %v3891, 96
    %v3910 = vpop.permute.xlu0 %3909
    %3911 = vrot.lane.b32.xlu0 %v3892, 96
    %v3912 = vpop.permute.xlu0 %3911
    %3913 = vrot.lane.b32.xlu0 %v3893, 96
    %v3914 = vpop.permute.xlu0 %3913
    %3915 = vrot.lane.b32.xlu0 %v3894, 96
    %v3916 = vpop.permute.xlu0 %3915
    %3917 = vrot.lane.b32.xlu0 %v3895, 96
    %v3918 = vpop.permute.xlu0 %3917
    %3919 = vrot.lane.b32.xlu0 %v3896, 96
    %v3920 = vpop.permute.xlu0 %3919
    %v3929 = vmul.f32 %v3881, %v3906
    %v3930 = vmul.f32 %v3882, %v3908
    %v3931 = vmul.f32 %v3883, %v3910
    %v3932 = vmul.f32 %v3884, %v3912
    %v3933 = vmul.f32 %v3885, %v3914
    %v3934 = vmul.f32 %v3886, %v3916
    %v3935 = vmul.f32 %v3887, %v3918
    %v3936 = vmul.f32 %v3888, %v3920
    %v3937 = vsel %vm3085, %v3876, %v3880
    %v3938 = vsel %vm3086, %v3876, %v3880
    %v3939 = vsel %vm3087, %v3876, %v3880
    %v3940 = vsel %vm3088, %v3876, %v3880
    %v3941 = vsel %vm3089, %v3876, %v3880
    %v3942 = vsel %vm3090, %v3876, %v3880
    %v3943 = vsel %vm3091, %v3876, %v3880
    %v3944 = vsel %vm3092, %v3876, %v3880
    %3953 = vrot.lane.b32.xlu0 %v3937, 64
    %v3954 = vpop.permute.xlu0 %3953
    %3955 = vrot.lane.b32.xlu0 %v3938, 64
    %v3956 = vpop.permute.xlu0 %3955
    %3957 = vrot.lane.b32.xlu0 %v3939, 64
    %v3958 = vpop.permute.xlu0 %3957
    %3959 = vrot.lane.b32.xlu0 %v3940, 64
    %v3960 = vpop.permute.xlu0 %3959
    %3961 = vrot.lane.b32.xlu0 %v3941, 64
    %v3962 = vpop.permute.xlu0 %3961
    %3963 = vrot.lane.b32.xlu0 %v3942, 64
    %v3964 = vpop.permute.xlu0 %3963
    %3965 = vrot.lane.b32.xlu0 %v3943, 64
    %v3966 = vpop.permute.xlu0 %3965
    %3967 = vrot.lane.b32.xlu0 %v3944, 64
    %v3968 = vpop.permute.xlu0 %3967
    %v3977 = vmul.f32 %v3929, %v3954
    %v3978 = vmul.f32 %v3930, %v3956
    %v3979 = vmul.f32 %v3931, %v3958
    %v3980 = vmul.f32 %v3932, %v3960
    %v3981 = vmul.f32 %v3933, %v3962
    %v3982 = vmul.f32 %v3934, %v3964
    %v3983 = vmul.f32 %v3935, %v3966
    %v3984 = vmul.f32 %v3936, %v3968
    %v3985 = vsel %vm3138, %v3876, %v3880
    %v3986 = vsel %vm3139, %v3876, %v3880
    %v3987 = vsel %vm3140, %v3876, %v3880
    %v3988 = vsel %vm3141, %v3876, %v3880
    %v3989 = vsel %vm3142, %v3876, %v3880
    %v3990 = vsel %vm3143, %v3876, %v3880
    %v3991 = vsel %vm3144, %v3876, %v3880
    %v3992 = vsel %vm3145, %v3876, %v3880
    %4001 = vrot.lane.b32.xlu0 %v3985, 32
    %v4002 = vpop.permute.xlu0 %4001
    %4003 = vrot.lane.b32.xlu0 %v3986, 32
    %v4004 = vpop.permute.xlu0 %4003
    %4005 = vrot.lane.b32.xlu0 %v3987, 32
    %v4006 = vpop.permute.xlu0 %4005
    %4007 = vrot.lane.b32.xlu0 %v3988, 32
    %v4008 = vpop.permute.xlu0 %4007
    %4009 = vrot.lane.b32.xlu0 %v3989, 32
    %v4010 = vpop.permute.xlu0 %4009
    %4011 = vrot.lane.b32.xlu0 %v3990, 32
    %v4012 = vpop.permute.xlu0 %4011
    %4013 = vrot.lane.b32.xlu0 %v3991, 32
    %v4014 = vpop.permute.xlu0 %4013
    %4015 = vrot.lane.b32.xlu0 %v3992, 32
    %v4016 = vpop.permute.xlu0 %4015
    %v4025 = vmul.f32 %v3977, %v4002
    %v4026 = vmul.f32 %v3978, %v4004
    %v4027 = vmul.f32 %v3979, %v4006
    %v4028 = vmul.f32 %v3980, %v4008
    %v4029 = vmul.f32 %v3981, %v4010
    %v4030 = vmul.f32 %v3982, %v4012
    %v4031 = vmul.f32 %v3983, %v4014
    %v4032 = vmul.f32 %v3984, %v4016
    %v4033 = vlaneseq
    %v4034 = vshrl.u32 %v4033, 7
    %v4035 = vsub.s32 1, %v4034
    %v4036 = vrot.slane %v3763, %v4035
    %v4037 = vlaneseq
    %v4038 = vshrl.u32 %v4037, 7
    %v4039 = vsub.s32 1, %v4038
    %v4040 = vrot.slane %v3765, %v4039
    %v4041 = vsel %vm3191, %v4036, %v4040
    %v4042 = vsel %vm3192, %v4036, %v4040
    %v4043 = vsel %vm3193, %v4036, %v4040
    %v4044 = vsel %vm3194, %v4036, %v4040
    %v4045 = vsel %vm3195, %v4036, %v4040
    %v4046 = vsel %vm3196, %v4036, %v4040
    %v4047 = vsel %vm3197, %v4036, %v4040
    %v4048 = vsel %vm3198, %v4036, %v4040
    %v4049 = vmul.f32 %v4025, %v4041
    %v4050 = vmul.f32 %v4026, %v4042
    %v4051 = vmul.f32 %v4027, %v4043
    %v4052 = vmul.f32 %v4028, %v4044
    %v4053 = vmul.f32 %v4029, %v4045
    %v4054 = vmul.f32 %v4030, %v4046
    %v4055 = vmul.f32 %v4031, %v4047
    %v4056 = vmul.f32 %v4032, %v4048
    %v4057 = vsel %vm3236, %v4036, %v4040
    %v4058 = vsel %vm3237, %v4036, %v4040
    %v4059 = vsel %vm3238, %v4036, %v4040
    %v4060 = vsel %vm3239, %v4036, %v4040
    %v4061 = vsel %vm3240, %v4036, %v4040
    %v4062 = vsel %vm3241, %v4036, %v4040
    %v4063 = vsel %vm3242, %v4036, %v4040
    %v4064 = vsel %vm3243, %v4036, %v4040
    %4073 = vrot.lane.b32.xlu0 %v4057, 96
    %v4074 = vpop.permute.xlu0 %4073
    %4075 = vrot.lane.b32.xlu0 %v4058, 96
    %v4076 = vpop.permute.xlu0 %4075
    %4077 = vrot.lane.b32.xlu0 %v4059, 96
    %v4078 = vpop.permute.xlu0 %4077
    %4079 = vrot.lane.b32.xlu0 %v4060, 96
    %v4080 = vpop.permute.xlu0 %4079
    %4081 = vrot.lane.b32.xlu0 %v4061, 96
    %v4082 = vpop.permute.xlu0 %4081
    %4083 = vrot.lane.b32.xlu0 %v4062, 96
    %v4084 = vpop.permute.xlu0 %4083
    %4085 = vrot.lane.b32.xlu0 %v4063, 96
    %v4086 = vpop.permute.xlu0 %4085
    %4087 = vrot.lane.b32.xlu0 %v4064, 96
    %v4088 = vpop.permute.xlu0 %4087
    %v4097 = vmul.f32 %v4049, %v4074
    %v4098 = vmul.f32 %v4050, %v4076
    %v4099 = vmul.f32 %v4051, %v4078
    %v4100 = vmul.f32 %v4052, %v4080
    %v4101 = vmul.f32 %v4053, %v4082
    %v4102 = vmul.f32 %v4054, %v4084
    %v4103 = vmul.f32 %v4055, %v4086
    %v4104 = vmul.f32 %v4056, %v4088
    %v4105 = vmul.f32 %v4097, %v3587
    %v4106 = vmul.f32 %v4098, %v3588
    %v4107 = vmul.f32 %v4099, %v3589
    %v4108 = vmul.f32 %v4100, %v3590
    %v4109 = vmul.f32 %v4101, %v3591
    %v4110 = vmul.f32 %v4102, %v3592
    %v4111 = vmul.f32 %v4103, %v3593
    %v4112 = vmul.f32 %v4104, %v3594
    %v4113 = vsel %vm3846, %v4105, 0.0
    %v4114 = vsel %vm3846, %v4106, 0.0
    %v4115 = vadd.f32 %v4113, %v4114
    %v4116 = vsel %vm3846, %v4107, 0.0
    %v4117 = vadd.f32 %v4115, %v4116
    %v4118 = vsel %vm3846, %v4108, 0.0
    %v4119 = vadd.f32 %v4117, %v4118
    %v4120 = vsel %vm3846, %v4109, 0.0
    %v4121 = vadd.f32 %v4119, %v4120
    %v4122 = vsel %vm3846, %v4110, 0.0
    %v4123 = vadd.f32 %v4121, %v4122
    %v4124 = vsel %vm3846, %v4111, 0.0
    %v4125 = vadd.f32 %v4123, %v4124
    %v4126 = vsel %vm3846, %v4112, 0.0
    %v4127 = vadd.f32 %v4125, %v4126
    %v4128 = vrot.slane %v4127, 4
    %v4129 = vadd.f32 %v4127, %v4128
    %v4130 = vrot.slane %v4129, 2
    %v4131 = vadd.f32 %v4129, %v4130
    %v4132 = vrot.slane %v4131, 1
    %v4133 = vadd.f32 %v4131, %v4132
    %v4134 = vsub.f32 %v4133, 0.5
    %v4135 = vmul.f32 %v4134, %v3869
    %4136 = vst.msk [vmem:[#allocation13 + $0x1] sm:$0x1] %vm3871, %v4135
    // Predicated region
    $region54: #{tpu_custom_call.1} parent=1 // pred_check
      _
    $region55: #{tpu_custom_call.1} parent=1 // pred_check_branch
      %4138 = sbr.rel (0) target = $region57
    $region56: #{tpu_custom_call.1} parent=1 // pred_region
      %s4140 = ssub.s32 32, 32
      %4141 = vsyncadd [#allocation6], %s4140
      %s4143 = sshll.u32 [#allocation13], 4
      %s4144 = int_to_ptr.vmem [resolvable:$true] %s4143
      %4146 = dma.vmem_to_hbm [thread:$0]  %s4144, 32, %s8, [#allocation6]
    $region57: #{tpu_custom_call.1} parent=1 // pred_fallthru
      _
    // Predicated region
    $region58: #{tpu_custom_call.1} parent=1 // pred_check
      _
    $region59: #{tpu_custom_call.1} parent=1 // pred_check_branch
      %4148 = sbr.rel (0) target = $region61
    $region60: #{tpu_custom_call.1} parent=1 // pred_region
      %4149 = dma.done [#allocation6], 32
    $region61: #{tpu_custom_call.1} parent=1 // pred_fallthru
      _
    %4150 = vsyncpa [#allocation5], 1
    %4151 = vsyncpa [#allocation8], 1
    %4152 = vsyncpa [#allocation11], 1
    %4153 = vsyncpa [#allocation6], 1

</llo_original>
